<compile_context>
chip_gen: v7x
topology: tpu7x:2x2x1
jax: 0.10.0
libtpu: 0.0.40
codegen_flags: <defaults>
</compile_context>

<pallas_src>
import jax
import jax.numpy as jnp
from jax.experimental import pallas as pl
from jax.experimental.pallas import tpu as pltpu

# Small shapes consistent with the module's forward
B, S, H = 2, 8, 32          # batch, sequence, hidden
NH, HD = 4, 8               # attention heads, head dim (NH * HD == H)
FF = 4 * H                  # FFN inner dim (128)
VOCAB = 100
NUM_LABELS = 4              # task 0 head
EPS = 1e-5
LANES = 128

# ---- packed-slab row layout (all static) -----------------------------------
# activation slab (ACT_ROWS, 128)
ROW_MASK0 = B * S                       # rows 0..B*S-1: x2d ; rows B*S..B*S+B-1: mask
ACT_ROWS = 24
# weight slab (W_ROWS, 128)
R_WQKV = 0                              # (H, 3H)
R_WO = H                                # (H, H)
R_W1 = 2 * H                            # (H, FF)
R_W2 = 3 * H                            # (FF, H)
R_WHEAD = 3 * H + FF                    # (H, NUM_LABELS)
W_ROWS = R_WHEAD + H                    # 256
# vector slab (V_ROWS, 128): one row per bias / LN vector
RV_BQKV, RV_BO, RV_LN1G, RV_LN1B, RV_B1, RV_B2, RV_LN2G, RV_LN2B, RV_BHEAD = range(9)
V_ROWS = 16
# output slab (OUT_ROWS, 128)
OUT_LOG0 = B * S                        # rows 0..B*S-1: hidden ; then B rows logits ; 1 row loss
OUT_LOSS = B * S + B
OUT_ROWS = 24


# ----------------------------------------------------------------------------
# Single fused kernel: encoder layer -> hidden_states, CLS head -> logits, CE -> loss
# ----------------------------------------------------------------------------
def fused_forward_kernel(labels_ref, act_ref, w_ref, v_ref, out_ref):
    scale = 1.0 / (HD ** 0.5)

    x = act_ref[0:B * S, 0:H]                                   # (B*S, H)

    # static views into the packed weight / vector slabs (free)
    wqkv = w_ref[R_WQKV:R_WQKV + H, 0:3 * H]                    # (H, 3H)
    wo = w_ref[R_WO:R_WO + H, 0:H]                              # (H, H)
    w1 = w_ref[R_W1:R_W1 + H, 0:FF]                             # (H, FF)
    w2 = w_ref[R_W2:R_W2 + FF, 0:H]                             # (FF, H)
    whd = w_ref[R_WHEAD:R_WHEAD + H, 0:NUM_LABELS]              # (H, L)

    bqkv = v_ref[RV_BQKV:RV_BQKV + 1, 0:3 * H]
    bo = v_ref[RV_BO:RV_BO + 1, 0:H]
    ln1g = v_ref[RV_LN1G:RV_LN1G + 1, 0:H]
    ln1b = v_ref[RV_LN1B:RV_LN1B + 1, 0:H]
    b1 = v_ref[RV_B1:RV_B1 + 1, 0:FF]
    b2 = v_ref[RV_B2:RV_B2 + 1, 0:H]
    ln2g = v_ref[RV_LN2G:RV_LN2G + 1, 0:H]
    ln2b = v_ref[RV_LN2B:RV_LN2B + 1, 0:H]
    bhd = v_ref[RV_BHEAD:RV_BHEAD + 1, 0:NUM_LABELS]

    # --- QKV projection: ONE full-slab matmul -------------------------------
    qkv = jnp.dot(x, wqkv, preferred_element_type=jnp.float32) + bqkv   # (B*S, 3H)
    q2d = qkv[:, 0:H]
    k2d = qkv[:, H:2 * H]
    v2d = qkv[:, 2 * H:3 * H]

    def split_heads(t2):                     # (S, H) -> (NH, S, HD), head n = lanes n*HD..
        t3 = t2.reshape(S, NH, HD)
        return jnp.concatenate(
            [t3[:, n, :].reshape(1, S, HD) for n in range(NH)], axis=0)

    # --- attention scores / softmax / context (mask differs per example) ----
    # Static B=2 unroll; everything inside is head-batched (single-batch-dim einsums).
    ctx_rows = []
    for b in range(B):
        rows = slice(b * S, (b + 1) * S)
        qh = split_heads(q2d[rows, :])                           # (NH, S, HD)
        kh = split_heads(k2d[rows, :])
        vh = split_heads(v2d[rows, :])
        s = jnp.einsum('nsd,ntd->nst', qh, kh,
                       preferred_element_type=jnp.float32) * scale       # (NH, S, S)
        mask_b = act_ref[ROW_MASK0 + b:ROW_MASK0 + b + 1, 0:S].reshape(1, 1, S)
        s = s + mask_b                                           # additive key mask
        s = s - jnp.max(s, axis=-1, keepdims=True)
        e = jnp.exp(s)
        p = e * pl.reciprocal(jnp.sum(e, axis=-1, keepdims=True), approx=True)
        ctx = jnp.einsum('nst,ntd->nsd', p, vh,
                         preferred_element_type=jnp.float32)              # (NH, S, HD)
        # merge heads back into lanes: (S, H) with head n at lanes n*HD..
        ctx_rows.append(jnp.concatenate([ctx[n] for n in range(NH)], axis=-1))
    ctx2d = jnp.concatenate(ctx_rows, axis=0)                    # (B*S, H)

    # --- output projection: ONE matmul over the whole slab -------------------
    attn = jnp.dot(ctx2d, wo, preferred_element_type=jnp.float32) + bo

    def layer_norm(y, g, bb):
        mu = jnp.mean(y, axis=-1, keepdims=True)
        var = jnp.mean((y - mu) ** 2, axis=-1, keepdims=True)
        return (y - mu) * jax.lax.rsqrt(var + EPS) * g + bb

    x1 = layer_norm(x + attn, ln1g, ln1b)

    # --- FFN on the whole (B*S, H) slab (MXU + EUP) --------------------------
    # NOTE: tanh-approx GELU (PyTorch nn.GELU() default is exact erf; ~1e-3 logit diff).
    hmid = jax.nn.gelu(
        jnp.dot(x1, w1, preferred_element_type=jnp.float32) + b1, approximate=True)
    ffn = jnp.dot(hmid, w2, preferred_element_type=jnp.float32) + b2
    hidden = layer_norm(x1 + ffn, ln2g, ln2b)                    # (B*S, H)

    # --- CLS pooling + task head (hidden never leaves VMEM) ------------------
    cls = jnp.concatenate([hidden[b * S:b * S + 1, :] for b in range(B)], axis=0)  # (B, H)
    logits = jnp.dot(cls, whd, preferred_element_type=jnp.float32) + bhd            # (B, L)

    # --- cross entropy (mean reduction); labels read as SMEM scalars ---------
    zmax = jnp.max(logits, axis=-1, keepdims=True)
    ez = jnp.exp(logits - zmax)
    lse = jnp.log(jnp.sum(ez, axis=-1, keepdims=True)) + zmax                       # (B, 1)
    col = jax.lax.broadcasted_iota(jnp.int32, (B, NUM_LABELS), 1)
    row = jax.lax.broadcasted_iota(jnp.int32, (B, NUM_LABELS), 0)
    onehot = jnp.zeros((B, NUM_LABELS), jnp.float32)
    for b in range(B):
        onehot = onehot + jnp.where(
            jnp.logical_and(row == b, col == labels_ref[b]), 1.0, 0.0)
    tgt = jnp.sum(onehot * logits, axis=-1, keepdims=True)                          # (B, 1)
    loss = jnp.sum(lse - tgt, axis=0, keepdims=True) * (1.0 / B)                    # (1, 1)

    # --- single lane-dense output slab (one output DMA) ----------------------
    out_ref[...] = jnp.zeros((OUT_ROWS, LANES), jnp.float32)
    out_ref[0:B * S, 0:H] = hidden
    out_ref[OUT_LOG0:OUT_LOG0 + B, 0:NUM_LABELS] = logits
    out_ref[OUT_LOSS:OUT_LOSS + 1, 0:1] = loss


def fused_forward(labels_i32, act_slab, w_slab, v_slab):
    grid_spec = pltpu.PrefetchScalarGridSpec(
        num_scalar_prefetch=1,
        grid=(1,),
        in_specs=[
            pl.BlockSpec((ACT_ROWS, LANES), lambda i, lbl: (0, 0)),
            pl.BlockSpec((W_ROWS, LANES), lambda i, lbl: (0, 0)),
            pl.BlockSpec((V_ROWS, LANES), lambda i, lbl: (0, 0)),
        ],
        out_specs=pl.BlockSpec((OUT_ROWS, LANES), lambda i, lbl: (0, 0)),
    )
    return pl.pallas_call(
        fused_forward_kernel,
        out_shape=jax.ShapeDtypeStruct((OUT_ROWS, LANES), jnp.float32),
        grid_spec=grid_spec,
        compiler_params=pltpu.CompilerParams(dimension_semantics=("arbitrary",)),
    )(labels_i32, act_slab, w_slab, v_slab)


# ----------------------------------------------------------------------------
# Trace-time slab packing (zero-cost views inside the kernel)
# ----------------------------------------------------------------------------
def _pad_lanes(a, lanes=LANES):
    return jnp.pad(a, ((0, 0), (0, lanes - a.shape[1])))


def _pad_rows(a, rows):
    return jnp.pad(a, ((0, rows - a.shape[0]), (0, 0)))


def pack_weight_slab(p, w_head):
    blocks = [p["wqkv"], p["wo"], p["w1"], p["w2"], w_head]
    return jnp.concatenate([_pad_lanes(b) for b in blocks], axis=0)        # (256, 128)


def pack_vector_slab(p, b_head):
    rows = [p["bqkv"], p["bo"], p["ln1_g"], p["ln1_b"],
            p["b1"], p["b2"], p["ln2_g"], p["ln2_b"], b_head]
    slab = jnp.concatenate([_pad_lanes(r) for r in rows], axis=0)          # (9, 128)
    return _pad_rows(slab, V_ROWS)                                         # (16, 128)


def pack_act_slab(x2d, add_mask):
    slab = jnp.concatenate([_pad_lanes(x2d), _pad_lanes(add_mask)], axis=0)
    return _pad_rows(slab, ACT_ROWS)                                       # (24, 128)


# ----------------------------------------------------------------------------
# Deterministic parameter init (shapes implied by the module's __init__)
# ----------------------------------------------------------------------------
def init_params(key):
    ks = jax.random.split(key, 8)
    scale = 0.02
    p = {
        "word_emb": scale * jax.random.normal(ks[0], (VOCAB, H), jnp.float32),
        "pos_emb": scale * jax.random.normal(ks[1], (S, H), jnp.float32),
        "wqkv": scale * jax.random.normal(ks[2], (H, 3 * H), jnp.float32),
        "bqkv": jnp.zeros((1, 3 * H), jnp.float32),
        "wo": scale * jax.random.normal(ks[3], (H, H), jnp.float32),
        "bo": jnp.zeros((1, H), jnp.float32),
        "ln1_g": jnp.ones((1, H), jnp.float32),
        "ln1_b": jnp.zeros((1, H), jnp.float32),
        "w1": scale * jax.random.normal(ks[4], (H, FF), jnp.float32),
        "b1": jnp.zeros((1, FF), jnp.float32),
        "w2": scale * jax.random.normal(ks[5], (FF, H), jnp.float32),
        "b2": jnp.zeros((1, H), jnp.float32),
        "ln2_g": jnp.ones((1, H), jnp.float32),
        "ln2_b": jnp.zeros((1, H), jnp.float32),
        # TaskSpecificHeads: one linear head per task (task 0 here)
        "head_w": {0: scale * jax.random.normal(ks[6], (H, NUM_LABELS), jnp.float32)},
        "head_b": {0: jnp.zeros((1, NUM_LABELS), jnp.float32)},
    }
    return p


# ----------------------------------------------------------------------------
# LifelongModel.forward equivalent
# ----------------------------------------------------------------------------
def lifelong_forward(params, input_ids, attention_mask, task_id, labels=None):
    if task_id is None:
        raise ValueError("Task ID must be specified or set as current task")

    # Embedding (glue) + flatten to (B*S, H) -- trace-time, zero runtime cost
    x = params["word_emb"][input_ids] + params["pos_emb"][None, :, :]          # (B, S, H)
    x2d = x.reshape(B * S, H).astype(jnp.float32)

    # Additive key mask (B, S)
    add_mask = (1.0 - attention_mask.astype(jnp.float32)) * -1e9

    w_head = params["head_w"][task_id]
    b_head = params["head_b"][task_id]

    act_slab = pack_act_slab(x2d, add_mask)
    w_slab = pack_weight_slab(params, w_head)
    v_slab = pack_vector_slab(params, b_head)

    if labels is not None:
        labels_i32 = labels.astype(jnp.int32)
    else:
        # Loss path is computed against label 0 and discarded (cheap; one kernel variant).
        labels_i32 = jnp.zeros((B,), jnp.int32)

    out_slab = fused_forward(labels_i32, act_slab, w_slab, v_slab)

    hidden_states = out_slab[0:B * S, 0:H].reshape(B, S, H)
    logits = out_slab[OUT_LOG0:OUT_LOG0 + B, 0:NUM_LABELS]
    task_loss = out_slab[OUT_LOSS, 0]

    outputs = {"hidden_states": hidden_states, "logits": logits}
    if labels is not None:
        # TODO(synk): EWC / L2 / SI penalty terms require previously-consolidated state.
        outputs["loss"] = task_loss
        outputs["loss_components"] = {"task_loss": task_loss}
    return outputs


if __name__ == "__main__":
    key = jax.random.PRNGKey(0)
    k_param, k_ids, k_lbl = jax.random.split(key, 3)

    params = init_params(k_param)
    input_ids = jax.random.randint(k_ids, (B, S), 0, VOCAB, dtype=jnp.int32)
    attention_mask = jnp.ones((B, S), dtype=jnp.int32)
    labels = jax.random.randint(k_lbl, (B,), 0, NUM_LABELS, dtype=jnp.int32)

    outputs = lifelong_forward(params, input_ids, attention_mask, task_id=0, labels=labels)
    jax.block_until_ready(outputs["logits"])
    jax.block_until_ready(outputs["hidden_states"])
    jax.block_until_ready(outputs["loss"])

    assert outputs["logits"].shape == (B, NUM_LABELS)
    assert outputs["hidden_states"].shape == (B, S, H)
    assert outputs["loss"].shape == ()
    print("KERNEL_OK")
</pallas_src>

<mosaic_0001>
module attributes {stable_mosaic.version = 11 : i64} {
  func.func @fused_forward_kernel(%arg0: i32, %arg1: memref<2xi32, #tpu.memory_space<smem>>, %arg2: memref<24x128xf32, #tpu.memory_space<vmem>>, %arg3: memref<256x128xf32, #tpu.memory_space<vmem>>, %arg4: memref<16x128xf32, #tpu.memory_space<vmem>>, %arg5: memref<24x128xf32, #tpu.memory_space<vmem>>) attributes {dimension_semantics = [#tpu.dimension_semantics<arbitrary>], iteration_bounds = array<i64: 1>, scalar_prefetch = 1 : i64, scratch_operands = 0 : i64, tpu.core_type = #tpu.core_type<tc>, window_params = [{pipeline_mode = #tpu.pipeline_mode<synchronous>, transform_indices = @transform_0, window_bounds = array<i64: 24, 128>}, {pipeline_mode = #tpu.pipeline_mode<synchronous>, transform_indices = @transform_1, window_bounds = array<i64: 256, 128>}, {pipeline_mode = #tpu.pipeline_mode<synchronous>, transform_indices = @transform_2, window_bounds = array<i64: 16, 128>}, {pipeline_mode = #tpu.pipeline_mode<synchronous>, transform_indices = @transform_3, window_bounds = array<i64: 24, 128>}]} {
    %c0 = arith.constant 0 : index
    %c0_0 = arith.constant 0 : index
    %0 = vector.load %arg2[%c0, %c0_0] : memref<24x128xf32, #tpu.memory_space<vmem>>, vector<16x32xf32>
    %c0_1 = arith.constant 0 : index
    %c0_2 = arith.constant 0 : index
    %1 = vector.load %arg3[%c0_1, %c0_2] : memref<256x128xf32, #tpu.memory_space<vmem>>, vector<32x96xf32>
    %c32 = arith.constant 32 : index
    %c0_3 = arith.constant 0 : index
    %2 = vector.load %arg3[%c32, %c0_3] : memref<256x128xf32, #tpu.memory_space<vmem>>, vector<32x32xf32>
    %c64 = arith.constant 64 : index
    %c0_4 = arith.constant 0 : index
    %3 = vector.load %arg3[%c64, %c0_4] : memref<256x128xf32, #tpu.memory_space<vmem>>, vector<32x128xf32>
    %c96 = arith.constant 96 : index
    %c0_5 = arith.constant 0 : index
    %4 = vector.load %arg3[%c96, %c0_5] : memref<256x128xf32, #tpu.memory_space<vmem>>, vector<128x32xf32>
    %c224 = arith.constant 224 : index
    %c0_6 = arith.constant 0 : index
    %5 = vector.load %arg3[%c224, %c0_6] : memref<256x128xf32, #tpu.memory_space<vmem>>, vector<32x4xf32>
    %c0_7 = arith.constant 0 : index
    %c0_8 = arith.constant 0 : index
    %6 = vector.load %arg4[%c0_7, %c0_8] : memref<16x128xf32, #tpu.memory_space<vmem>>, vector<1x96xf32>
    %c1 = arith.constant 1 : index
    %c0_9 = arith.constant 0 : index
    %7 = vector.load %arg4[%c1, %c0_9] : memref<16x128xf32, #tpu.memory_space<vmem>>, vector<1x32xf32>
    %c2 = arith.constant 2 : index
    %c0_10 = arith.constant 0 : index
    %8 = vector.load %arg4[%c2, %c0_10] : memref<16x128xf32, #tpu.memory_space<vmem>>, vector<1x32xf32>
    %c3 = arith.constant 3 : index
    %c0_11 = arith.constant 0 : index
    %9 = vector.load %arg4[%c3, %c0_11] : memref<16x128xf32, #tpu.memory_space<vmem>>, vector<1x32xf32>
    %c4 = arith.constant 4 : index
    %c0_12 = arith.constant 0 : index
    %10 = vector.load %arg4[%c4, %c0_12] : memref<16x128xf32, #tpu.memory_space<vmem>>, vector<1x128xf32>
    %c5 = arith.constant 5 : index
    %c0_13 = arith.constant 0 : index
    %11 = vector.load %arg4[%c5, %c0_13] : memref<16x128xf32, #tpu.memory_space<vmem>>, vector<1x32xf32>
    %c6 = arith.constant 6 : index
    %c0_14 = arith.constant 0 : index
    %12 = vector.load %arg4[%c6, %c0_14] : memref<16x128xf32, #tpu.memory_space<vmem>>, vector<1x32xf32>
    %c7 = arith.constant 7 : index
    %c0_15 = arith.constant 0 : index
    %13 = vector.load %arg4[%c7, %c0_15] : memref<16x128xf32, #tpu.memory_space<vmem>>, vector<1x32xf32>
    %c8 = arith.constant 8 : index
    %c0_16 = arith.constant 0 : index
    %14 = vector.load %arg4[%c8, %c0_16] : memref<16x128xf32, #tpu.memory_space<vmem>>, vector<1x4xf32>
    %cst = arith.constant dense<0.000000e+00> : vector<16x96xf32>
    %15 = tpu.matmul %0, %1, %cst {dimension_numbers = #tpu.dot_dimension_numbers<[1], [0], [0], [1], [0, 0, 1, 1], [], []>} : vector<16x32xf32>, vector<32x96xf32>, vector<16x96xf32> -> vector<16x96xf32>
    %16 = vector.broadcast %6 : vector<1x96xf32> to vector<16x96xf32>
    %17 = arith.addf %15, %16 : vector<16x96xf32>
    %18 = vector.extract_strided_slice %17 {offsets = [0, 0], sizes = [16, 32], strides = [1, 1]} : vector<16x96xf32> to vector<16x32xf32>
    %19 = vector.extract_strided_slice %17 {offsets = [0, 32], sizes = [16, 32], strides = [1, 1]} : vector<16x96xf32> to vector<16x32xf32>
    %20 = vector.extract_strided_slice %17 {offsets = [0, 64], sizes = [16, 32], strides = [1, 1]} : vector<16x96xf32> to vector<16x32xf32>
    %21 = vector.extract_strided_slice %18 {offsets = [0, 0], sizes = [8, 32], strides = [1, 1]} : vector<16x32xf32> to vector<8x32xf32>
    %22 = vector.shape_cast %21 : vector<8x32xf32> to vector<8x4x8xf32>
    %23 = vector.extract_strided_slice %22 {offsets = [0, 0, 0], sizes = [8, 1, 8], strides = [1, 1, 1]} : vector<8x4x8xf32> to vector<8x1x8xf32>
    %24 = vector.shape_cast %23 : vector<8x1x8xf32> to vector<8x8xf32>
    %25 = vector.shape_cast %24 : vector<8x8xf32> to vector<1x8x8xf32>
    %26 = vector.extract_strided_slice %22 {offsets = [0, 1, 0], sizes = [8, 1, 8], strides = [1, 1, 1]} : vector<8x4x8xf32> to vector<8x1x8xf32>
    %27 = vector.shape_cast %26 : vector<8x1x8xf32> to vector<8x8xf32>
    %28 = vector.shape_cast %27 : vector<8x8xf32> to vector<1x8x8xf32>
    %29 = vector.extract_strided_slice %22 {offsets = [0, 2, 0], sizes = [8, 1, 8], strides = [1, 1, 1]} : vector<8x4x8xf32> to vector<8x1x8xf32>
    %30 = vector.shape_cast %29 : vector<8x1x8xf32> to vector<8x8xf32>
    %31 = vector.shape_cast %30 : vector<8x8xf32> to vector<1x8x8xf32>
    %32 = vector.extract_strided_slice %22 {offsets = [0, 3, 0], sizes = [8, 1, 8], strides = [1, 1, 1]} : vector<8x4x8xf32> to vector<8x1x8xf32>
    %33 = vector.shape_cast %32 : vector<8x1x8xf32> to vector<8x8xf32>
    %34 = vector.shape_cast %33 : vector<8x8xf32> to vector<1x8x8xf32>
    %35 = tpu.concatenate %25, %28, %31, %34 in 0 : vector<1x8x8xf32>, vector<1x8x8xf32>, vector<1x8x8xf32>, vector<1x8x8xf32> -> vector<4x8x8xf32>
    %36 = vector.extract_strided_slice %19 {offsets = [0, 0], sizes = [8, 32], strides = [1, 1]} : vector<16x32xf32> to vector<8x32xf32>
    %37 = vector.shape_cast %36 : vector<8x32xf32> to vector<8x4x8xf32>
    %38 = vector.extract_strided_slice %37 {offsets = [0, 0, 0], sizes = [8, 1, 8], strides = [1, 1, 1]} : vector<8x4x8xf32> to vector<8x1x8xf32>
    %39 = vector.shape_cast %38 : vector<8x1x8xf32> to vector<8x8xf32>
    %40 = vector.shape_cast %39 : vector<8x8xf32> to vector<1x8x8xf32>
    %41 = vector.extract_strided_slice %37 {offsets = [0, 1, 0], sizes = [8, 1, 8], strides = [1, 1, 1]} : vector<8x4x8xf32> to vector<8x1x8xf32>
    %42 = vector.shape_cast %41 : vector<8x1x8xf32> to vector<8x8xf32>
    %43 = vector.shape_cast %42 : vector<8x8xf32> to vector<1x8x8xf32>
    %44 = vector.extract_strided_slice %37 {offsets = [0, 2, 0], sizes = [8, 1, 8], strides = [1, 1, 1]} : vector<8x4x8xf32> to vector<8x1x8xf32>
    %45 = vector.shape_cast %44 : vector<8x1x8xf32> to vector<8x8xf32>
    %46 = vector.shape_cast %45 : vector<8x8xf32> to vector<1x8x8xf32>
    %47 = vector.extract_strided_slice %37 {offsets = [0, 3, 0], sizes = [8, 1, 8], strides = [1, 1, 1]} : vector<8x4x8xf32> to vector<8x1x8xf32>
    %48 = vector.shape_cast %47 : vector<8x1x8xf32> to vector<8x8xf32>
    %49 = vector.shape_cast %48 : vector<8x8xf32> to vector<1x8x8xf32>
    %50 = tpu.concatenate %40, %43, %46, %49 in 0 : vector<1x8x8xf32>, vector<1x8x8xf32>, vector<1x8x8xf32>, vector<1x8x8xf32> -> vector<4x8x8xf32>
    %51 = vector.extract_strided_slice %20 {offsets = [0, 0], sizes = [8, 32], strides = [1, 1]} : vector<16x32xf32> to vector<8x32xf32>
    %52 = vector.shape_cast %51 : vector<8x32xf32> to vector<8x4x8xf32>
    %53 = vector.extract_strided_slice %52 {offsets = [0, 0, 0], sizes = [8, 1, 8], strides = [1, 1, 1]} : vector<8x4x8xf32> to vector<8x1x8xf32>
    %54 = vector.shape_cast %53 : vector<8x1x8xf32> to vector<8x8xf32>
    %55 = vector.shape_cast %54 : vector<8x8xf32> to vector<1x8x8xf32>
    %56 = vector.extract_strided_slice %52 {offsets = [0, 1, 0], sizes = [8, 1, 8], strides = [1, 1, 1]} : vector<8x4x8xf32> to vector<8x1x8xf32>
    %57 = vector.shape_cast %56 : vector<8x1x8xf32> to vector<8x8xf32>
    %58 = vector.shape_cast %57 : vector<8x8xf32> to vector<1x8x8xf32>
    %59 = vector.extract_strided_slice %52 {offsets = [0, 2, 0], sizes = [8, 1, 8], strides = [1, 1, 1]} : vector<8x4x8xf32> to vector<8x1x8xf32>
    %60 = vector.shape_cast %59 : vector<8x1x8xf32> to vector<8x8xf32>
    %61 = vector.shape_cast %60 : vector<8x8xf32> to vector<1x8x8xf32>
    %62 = vector.extract_strided_slice %52 {offsets = [0, 3, 0], sizes = [8, 1, 8], strides = [1, 1, 1]} : vector<8x4x8xf32> to vector<8x1x8xf32>
    %63 = vector.shape_cast %62 : vector<8x1x8xf32> to vector<8x8xf32>
    %64 = vector.shape_cast %63 : vector<8x8xf32> to vector<1x8x8xf32>
    %65 = tpu.concatenate %55, %58, %61, %64 in 0 : vector<1x8x8xf32>, vector<1x8x8xf32>, vector<1x8x8xf32>, vector<1x8x8xf32> -> vector<4x8x8xf32>
    "tpu.trace_start"() <{level = 10 : i32, message = "nsd,ntd->nst"}> : () -> ()
    %cst_17 = arith.constant dense<0.000000e+00> : vector<4x8x8xf32>
    %66 = tpu.matmul %35, %50, %cst_17 {dimension_numbers = #tpu.dot_dimension_numbers<[2], [2], [1], [1], [0, 0, 0, 1, 1, 1], [0], [0]>} : vector<4x8x8xf32>, vector<4x8x8xf32>, vector<4x8x8xf32> -> vector<4x8x8xf32>
    "tpu.trace_stop"() : () -> ()
    %cst_18 = arith.constant 0.353553385 : f32
    %67 = vector.broadcast %cst_18 : f32 to vector<4x8x8xf32>
    %68 = arith.mulf %66, %67 : vector<4x8x8xf32>
    %c16 = arith.constant 16 : index
    %c0_19 = arith.constant 0 : index
    %69 = vector.load %arg2[%c16, %c0_19] : memref<24x128xf32, #tpu.memory_space<vmem>>, vector<1x8xf32>
    %70 = vector.shape_cast %69 : vector<1x8xf32> to vector<1x1x8xf32>
    %71 = vector.broadcast %70 : vector<1x1x8xf32> to vector<4x8x8xf32>
    %72 = arith.addf %68, %71 : vector<4x8x8xf32>
    %cst_20 = arith.constant dense<0xFF800000> : vector<4x8xf32>
    %73 = vector.multi_reduction <maximumf>, %72, %cst_20 [2] : vector<4x8x8xf32> to vector<4x8xf32>
    %74 = vector.shape_cast %73 : vector<4x8xf32> to vector<4x8x1xf32>
    %75 = vector.broadcast %74 : vector<4x8x1xf32> to vector<4x8x8xf32>
    %76 = arith.subf %72, %75 : vector<4x8x8xf32>
    %77 = math.exp %76 : vector<4x8x8xf32>
    %cst_21 = arith.constant dense<0.000000e+00> : vector<4x8xf32>
    %78 = vector.multi_reduction <add>, %77, %cst_21 [2] : vector<4x8x8xf32> to vector<4x8xf32>
    %79 = vector.shape_cast %78 : vector<4x8xf32> to vector<4x8x1xf32>
    %80 = tpu.reciprocal %79 {approx = true} : vector<4x8x1xf32> -> vector<4x8x1xf32>
    %81 = vector.broadcast %80 : vector<4x8x1xf32> to vector<4x8x8xf32>
    %82 = arith.mulf %77, %81 : vector<4x8x8xf32>
    "tpu.trace_start"() <{level = 10 : i32, message = "nst,ntd->nsd"}> : () -> ()
    %cst_22 = arith.constant dense<0.000000e+00> : vector<4x8x8xf32>
    %83 = tpu.matmul %82, %65, %cst_22 {dimension_numbers = #tpu.dot_dimension_numbers<[2], [1], [1], [2], [0, 0, 0, 1, 1, 2], [0], [0]>} : vector<4x8x8xf32>, vector<4x8x8xf32>, vector<4x8x8xf32> -> vector<4x8x8xf32>
    "tpu.trace_stop"() : () -> ()
    %84 = vector.extract_strided_slice %83 {offsets = [0, 0, 0], sizes = [1, 8, 8], strides = [1, 1, 1]} : vector<4x8x8xf32> to vector<1x8x8xf32>
    %85 = vector.shape_cast %84 : vector<1x8x8xf32> to vector<8x8xf32>
    %86 = vector.extract_strided_slice %83 {offsets = [1, 0, 0], sizes = [1, 8, 8], strides = [1, 1, 1]} : vector<4x8x8xf32> to vector<1x8x8xf32>
    %87 = vector.shape_cast %86 : vector<1x8x8xf32> to vector<8x8xf32>
    %88 = vector.extract_strided_slice %83 {offsets = [2, 0, 0], sizes = [1, 8, 8], strides = [1, 1, 1]} : vector<4x8x8xf32> to vector<1x8x8xf32>
    %89 = vector.shape_cast %88 : vector<1x8x8xf32> to vector<8x8xf32>
    %90 = vector.extract_strided_slice %83 {offsets = [3, 0, 0], sizes = [1, 8, 8], strides = [1, 1, 1]} : vector<4x8x8xf32> to vector<1x8x8xf32>
    %91 = vector.shape_cast %90 : vector<1x8x8xf32> to vector<8x8xf32>
    %92 = tpu.concatenate %85, %87, %89, %91 in 1 : vector<8x8xf32>, vector<8x8xf32>, vector<8x8xf32>, vector<8x8xf32> -> vector<8x32xf32>
    %93 = vector.extract_strided_slice %18 {offsets = [8, 0], sizes = [8, 32], strides = [1, 1]} : vector<16x32xf32> to vector<8x32xf32>
    %94 = vector.shape_cast %93 : vector<8x32xf32> to vector<8x4x8xf32>
    %95 = vector.extract_strided_slice %94 {offsets = [0, 0, 0], sizes = [8, 1, 8], strides = [1, 1, 1]} : vector<8x4x8xf32> to vector<8x1x8xf32>
    %96 = vector.shape_cast %95 : vector<8x1x8xf32> to vector<8x8xf32>
    %97 = vector.shape_cast %96 : vector<8x8xf32> to vector<1x8x8xf32>
    %98 = vector.extract_strided_slice %94 {offsets = [0, 1, 0], sizes = [8, 1, 8], strides = [1, 1, 1]} : vector<8x4x8xf32> to vector<8x1x8xf32>
    %99 = vector.shape_cast %98 : vector<8x1x8xf32> to vector<8x8xf32>
    %100 = vector.shape_cast %99 : vector<8x8xf32> to vector<1x8x8xf32>
    %101 = vector.extract_strided_slice %94 {offsets = [0, 2, 0], sizes = [8, 1, 8], strides = [1, 1, 1]} : vector<8x4x8xf32> to vector<8x1x8xf32>
    %102 = vector.shape_cast %101 : vector<8x1x8xf32> to vector<8x8xf32>
    %103 = vector.shape_cast %102 : vector<8x8xf32> to vector<1x8x8xf32>
    %104 = vector.extract_strided_slice %94 {offsets = [0, 3, 0], sizes = [8, 1, 8], strides = [1, 1, 1]} : vector<8x4x8xf32> to vector<8x1x8xf32>
    %105 = vector.shape_cast %104 : vector<8x1x8xf32> to vector<8x8xf32>
    %106 = vector.shape_cast %105 : vector<8x8xf32> to vector<1x8x8xf32>
    %107 = tpu.concatenate %97, %100, %103, %106 in 0 : vector<1x8x8xf32>, vector<1x8x8xf32>, vector<1x8x8xf32>, vector<1x8x8xf32> -> vector<4x8x8xf32>
    %108 = vector.extract_strided_slice %19 {offsets = [8, 0], sizes = [8, 32], strides = [1, 1]} : vector<16x32xf32> to vector<8x32xf32>
    %109 = vector.shape_cast %108 : vector<8x32xf32> to vector<8x4x8xf32>
    %110 = vector.extract_strided_slice %109 {offsets = [0, 0, 0], sizes = [8, 1, 8], strides = [1, 1, 1]} : vector<8x4x8xf32> to vector<8x1x8xf32>
    %111 = vector.shape_cast %110 : vector<8x1x8xf32> to vector<8x8xf32>
    %112 = vector.shape_cast %111 : vector<8x8xf32> to vector<1x8x8xf32>
    %113 = vector.extract_strided_slice %109 {offsets = [0, 1, 0], sizes = [8, 1, 8], strides = [1, 1, 1]} : vector<8x4x8xf32> to vector<8x1x8xf32>
    %114 = vector.shape_cast %113 : vector<8x1x8xf32> to vector<8x8xf32>
    %115 = vector.shape_cast %114 : vector<8x8xf32> to vector<1x8x8xf32>
    %116 = vector.extract_strided_slice %109 {offsets = [0, 2, 0], sizes = [8, 1, 8], strides = [1, 1, 1]} : vector<8x4x8xf32> to vector<8x1x8xf32>
    %117 = vector.shape_cast %116 : vector<8x1x8xf32> to vector<8x8xf32>
    %118 = vector.shape_cast %117 : vector<8x8xf32> to vector<1x8x8xf32>
    %119 = vector.extract_strided_slice %109 {offsets = [0, 3, 0], sizes = [8, 1, 8], strides = [1, 1, 1]} : vector<8x4x8xf32> to vector<8x1x8xf32>
    %120 = vector.shape_cast %119 : vector<8x1x8xf32> to vector<8x8xf32>
    %121 = vector.shape_cast %120 : vector<8x8xf32> to vector<1x8x8xf32>
    %122 = tpu.concatenate %112, %115, %118, %121 in 0 : vector<1x8x8xf32>, vector<1x8x8xf32>, vector<1x8x8xf32>, vector<1x8x8xf32> -> vector<4x8x8xf32>
    %123 = vector.extract_strided_slice %20 {offsets = [8, 0], sizes = [8, 32], strides = [1, 1]} : vector<16x32xf32> to vector<8x32xf32>
    %124 = vector.shape_cast %123 : vector<8x32xf32> to vector<8x4x8xf32>
    %125 = vector.extract_strided_slice %124 {offsets = [0, 0, 0], sizes = [8, 1, 8], strides = [1, 1, 1]} : vector<8x4x8xf32> to vector<8x1x8xf32>
    %126 = vector.shape_cast %125 : vector<8x1x8xf32> to vector<8x8xf32>
    %127 = vector.shape_cast %126 : vector<8x8xf32> to vector<1x8x8xf32>
    %128 = vector.extract_strided_slice %124 {offsets = [0, 1, 0], sizes = [8, 1, 8], strides = [1, 1, 1]} : vector<8x4x8xf32> to vector<8x1x8xf32>
    %129 = vector.shape_cast %128 : vector<8x1x8xf32> to vector<8x8xf32>
    %130 = vector.shape_cast %129 : vector<8x8xf32> to vector<1x8x8xf32>
    %131 = vector.extract_strided_slice %124 {offsets = [0, 2, 0], sizes = [8, 1, 8], strides = [1, 1, 1]} : vector<8x4x8xf32> to vector<8x1x8xf32>
    %132 = vector.shape_cast %131 : vector<8x1x8xf32> to vector<8x8xf32>
    %133 = vector.shape_cast %132 : vector<8x8xf32> to vector<1x8x8xf32>
    %134 = vector.extract_strided_slice %124 {offsets = [0, 3, 0], sizes = [8, 1, 8], strides = [1, 1, 1]} : vector<8x4x8xf32> to vector<8x1x8xf32>
    %135 = vector.shape_cast %134 : vector<8x1x8xf32> to vector<8x8xf32>
    %136 = vector.shape_cast %135 : vector<8x8xf32> to vector<1x8x8xf32>
    %137 = tpu.concatenate %127, %130, %133, %136 in 0 : vector<1x8x8xf32>, vector<1x8x8xf32>, vector<1x8x8xf32>, vector<1x8x8xf32> -> vector<4x8x8xf32>
    "tpu.trace_start"() <{level = 10 : i32, message = "nsd,ntd->nst"}> : () -> ()
    %cst_23 = arith.constant dense<0.000000e+00> : vector<4x8x8xf32>
    %138 = tpu.matmul %107, %122, %cst_23 {dimension_numbers = #tpu.dot_dimension_numbers<[2], [2], [1], [1], [0, 0, 0, 1, 1, 1], [0], [0]>} : vector<4x8x8xf32>, vector<4x8x8xf32>, vector<4x8x8xf32> -> vector<4x8x8xf32>
    "tpu.trace_stop"() : () -> ()
    %cst_24 = arith.constant 0.353553385 : f32
    %139 = vector.broadcast %cst_24 : f32 to vector<4x8x8xf32>
    %140 = arith.mulf %138, %139 : vector<4x8x8xf32>
    %c17 = arith.constant 17 : index
    %c0_25 = arith.constant 0 : index
    %141 = vector.load %arg2[%c17, %c0_25] : memref<24x128xf32, #tpu.memory_space<vmem>>, vector<1x8xf32>
    %142 = vector.shape_cast %141 : vector<1x8xf32> to vector<1x1x8xf32>
    %143 = vector.broadcast %142 : vector<1x1x8xf32> to vector<4x8x8xf32>
    %144 = arith.addf %140, %143 : vector<4x8x8xf32>
    %cst_26 = arith.constant dense<0xFF800000> : vector<4x8xf32>
    %145 = vector.multi_reduction <maximumf>, %144, %cst_26 [2] : vector<4x8x8xf32> to vector<4x8xf32>
    %146 = vector.shape_cast %145 : vector<4x8xf32> to vector<4x8x1xf32>
    %147 = vector.broadcast %146 : vector<4x8x1xf32> to vector<4x8x8xf32>
    %148 = arith.subf %144, %147 : vector<4x8x8xf32>
    %149 = math.exp %148 : vector<4x8x8xf32>
    %cst_27 = arith.constant dense<0.000000e+00> : vector<4x8xf32>
    %150 = vector.multi_reduction <add>, %149, %cst_27 [2] : vector<4x8x8xf32> to vector<4x8xf32>
    %151 = vector.shape_cast %150 : vector<4x8xf32> to vector<4x8x1xf32>
    %152 = tpu.reciprocal %151 {approx = true} : vector<4x8x1xf32> -> vector<4x8x1xf32>
    %153 = vector.broadcast %152 : vector<4x8x1xf32> to vector<4x8x8xf32>
    %154 = arith.mulf %149, %153 : vector<4x8x8xf32>
    "tpu.trace_start"() <{level = 10 : i32, message = "nst,ntd->nsd"}> : () -> ()
    %cst_28 = arith.constant dense<0.000000e+00> : vector<4x8x8xf32>
    %155 = tpu.matmul %154, %137, %cst_28 {dimension_numbers = #tpu.dot_dimension_numbers<[2], [1], [1], [2], [0, 0, 0, 1, 1, 2], [0], [0]>} : vector<4x8x8xf32>, vector<4x8x8xf32>, vector<4x8x8xf32> -> vector<4x8x8xf32>
    "tpu.trace_stop"() : () -> ()
    %156 = vector.extract_strided_slice %155 {offsets = [0, 0, 0], sizes = [1, 8, 8], strides = [1, 1, 1]} : vector<4x8x8xf32> to vector<1x8x8xf32>
    %157 = vector.shape_cast %156 : vector<1x8x8xf32> to vector<8x8xf32>
    %158 = vector.extract_strided_slice %155 {offsets = [1, 0, 0], sizes = [1, 8, 8], strides = [1, 1, 1]} : vector<4x8x8xf32> to vector<1x8x8xf32>
    %159 = vector.shape_cast %158 : vector<1x8x8xf32> to vector<8x8xf32>
    %160 = vector.extract_strided_slice %155 {offsets = [2, 0, 0], sizes = [1, 8, 8], strides = [1, 1, 1]} : vector<4x8x8xf32> to vector<1x8x8xf32>
    %161 = vector.shape_cast %160 : vector<1x8x8xf32> to vector<8x8xf32>
    %162 = vector.extract_strided_slice %155 {offsets = [3, 0, 0], sizes = [1, 8, 8], strides = [1, 1, 1]} : vector<4x8x8xf32> to vector<1x8x8xf32>
    %163 = vector.shape_cast %162 : vector<1x8x8xf32> to vector<8x8xf32>
    %164 = tpu.concatenate %157, %159, %161, %163 in 1 : vector<8x8xf32>, vector<8x8xf32>, vector<8x8xf32>, vector<8x8xf32> -> vector<8x32xf32>
    %165 = tpu.concatenate %92, %164 in 0 : vector<8x32xf32>, vector<8x32xf32> -> vector<16x32xf32>
    %cst_29 = arith.constant dense<0.000000e+00> : vector<16x32xf32>
    %166 = tpu.matmul %165, %2, %cst_29 {dimension_numbers = #tpu.dot_dimension_numbers<[1], [0], [0], [1], [0, 0, 1, 1], [], []>} : vector<16x32xf32>, vector<32x32xf32>, vector<16x32xf32> -> vector<16x32xf32>
    %167 = vector.broadcast %7 : vector<1x32xf32> to vector<16x32xf32>
    %168 = arith.addf %166, %167 : vector<16x32xf32>
    %169 = arith.addf %0, %168 : vector<16x32xf32>
    %cst_30 = arith.constant dense<0.000000e+00> : vector<16xf32>
    %170 = vector.multi_reduction <add>, %169, %cst_30 [1] : vector<16x32xf32> to vector<16xf32>
    %171 = vector.shape_cast %170 : vector<16xf32> to vector<16x1xf32>
    %cst_31 = arith.constant 3.200000e+01 : f32
    %172 = vector.broadcast %cst_31 : f32 to vector<16x1xf32>
    %173 = arith.divf %171, %172 : vector<16x1xf32>
    %174 = vector.broadcast %173 : vector<16x1xf32> to vector<16x32xf32>
    %175 = arith.subf %169, %174 : vector<16x32xf32>
    %176 = arith.mulf %175, %175 : vector<16x32xf32>
    %cst_32 = arith.constant dense<0.000000e+00> : vector<16xf32>
    %177 = vector.multi_reduction <add>, %176, %cst_32 [1] : vector<16x32xf32> to vector<16xf32>
    %178 = vector.shape_cast %177 : vector<16xf32> to vector<16x1xf32>
    %cst_33 = arith.constant 3.200000e+01 : f32
    %179 = vector.broadcast %cst_33 : f32 to vector<16x1xf32>
    %180 = arith.divf %178, %179 : vector<16x1xf32>
    %181 = vector.broadcast %173 : vector<16x1xf32> to vector<16x32xf32>
    %182 = arith.subf %169, %181 : vector<16x32xf32>
    %cst_34 = arith.constant 9.99999974E-6 : f32
    %183 = vector.broadcast %cst_34 : f32 to vector<16x1xf32>
    %184 = arith.addf %180, %183 : vector<16x1xf32>
    %185 = math.rsqrt %184 : vector<16x1xf32>
    %186 = vector.broadcast %185 : vector<16x1xf32> to vector<16x32xf32>
    %187 = arith.mulf %182, %186 : vector<16x32xf32>
    %188 = vector.broadcast %8 : vector<1x32xf32> to vector<16x32xf32>
    %189 = arith.mulf %187, %188 : vector<16x32xf32>
    %190 = vector.broadcast %9 : vector<1x32xf32> to vector<16x32xf32>
    %191 = arith.addf %189, %190 : vector<16x32xf32>
    %cst_35 = arith.constant dense<0.000000e+00> : vector<16x128xf32>
    %192 = tpu.matmul %191, %3, %cst_35 {dimension_numbers = #tpu.dot_dimension_numbers<[1], [0], [0], [1], [0, 0, 1, 1], [], []>} : vector<16x32xf32>, vector<32x128xf32>, vector<16x128xf32> -> vector<16x128xf32>
    %193 = vector.broadcast %10 : vector<1x128xf32> to vector<16x128xf32>
    %194 = arith.addf %192, %193 : vector<16x128xf32>
    %195 = arith.mulf %194, %194 : vector<16x128xf32>
    %196 = arith.mulf %194, %195 : vector<16x128xf32>
    %cst_36 = arith.constant 4.471500e-02 : f32
    %197 = vector.broadcast %cst_36 : f32 to vector<16x128xf32>
    %198 = arith.mulf %197, %196 : vector<16x128xf32>
    %199 = arith.addf %194, %198 : vector<16x128xf32>
    %cst_37 = arith.constant 0.797884583 : f32
    %200 = vector.broadcast %cst_37 : f32 to vector<16x128xf32>
    %201 = arith.mulf %200, %199 : vector<16x128xf32>
    %202 = math.tanh %201 : vector<16x128xf32>
    %cst_38 = arith.constant 1.000000e+00 : f32
    %203 = vector.broadcast %cst_38 : f32 to vector<16x128xf32>
    %204 = arith.addf %203, %202 : vector<16x128xf32>
    %cst_39 = arith.constant 5.000000e-01 : f32
    %205 = vector.broadcast %cst_39 : f32 to vector<16x128xf32>
    %206 = arith.mulf %205, %204 : vector<16x128xf32>
    %207 = arith.mulf %194, %206 : vector<16x128xf32>
    %cst_40 = arith.constant dense<0.000000e+00> : vector<16x32xf32>
    %208 = tpu.matmul %207, %4, %cst_40 {dimension_numbers = #tpu.dot_dimension_numbers<[1], [0], [0], [1], [0, 0, 1, 1], [], []>} : vector<16x128xf32>, vector<128x32xf32>, vector<16x32xf32> -> vector<16x32xf32>
    %209 = vector.broadcast %11 : vector<1x32xf32> to vector<16x32xf32>
    %210 = arith.addf %208, %209 : vector<16x32xf32>
    %211 = arith.addf %191, %210 : vector<16x32xf32>
    %cst_41 = arith.constant dense<0.000000e+00> : vector<16xf32>
    %212 = vector.multi_reduction <add>, %211, %cst_41 [1] : vector<16x32xf32> to vector<16xf32>
    %213 = vector.shape_cast %212 : vector<16xf32> to vector<16x1xf32>
    %cst_42 = arith.constant 3.200000e+01 : f32
    %214 = vector.broadcast %cst_42 : f32 to vector<16x1xf32>
    %215 = arith.divf %213, %214 : vector<16x1xf32>
    %216 = vector.broadcast %215 : vector<16x1xf32> to vector<16x32xf32>
    %217 = arith.subf %211, %216 : vector<16x32xf32>
    %218 = arith.mulf %217, %217 : vector<16x32xf32>
    %cst_43 = arith.constant dense<0.000000e+00> : vector<16xf32>
    %219 = vector.multi_reduction <add>, %218, %cst_43 [1] : vector<16x32xf32> to vector<16xf32>
    %220 = vector.shape_cast %219 : vector<16xf32> to vector<16x1xf32>
    %cst_44 = arith.constant 3.200000e+01 : f32
    %221 = vector.broadcast %cst_44 : f32 to vector<16x1xf32>
    %222 = arith.divf %220, %221 : vector<16x1xf32>
    %223 = vector.broadcast %215 : vector<16x1xf32> to vector<16x32xf32>
    %224 = arith.subf %211, %223 : vector<16x32xf32>
    %cst_45 = arith.constant 9.99999974E-6 : f32
    %225 = vector.broadcast %cst_45 : f32 to vector<16x1xf32>
    %226 = arith.addf %222, %225 : vector<16x1xf32>
    %227 = math.rsqrt %226 : vector<16x1xf32>
    %228 = vector.broadcast %227 : vector<16x1xf32> to vector<16x32xf32>
    %229 = arith.mulf %224, %228 : vector<16x32xf32>
    %230 = vector.broadcast %12 : vector<1x32xf32> to vector<16x32xf32>
    %231 = arith.mulf %229, %230 : vector<16x32xf32>
    %232 = vector.broadcast %13 : vector<1x32xf32> to vector<16x32xf32>
    %233 = arith.addf %231, %232 : vector<16x32xf32>
    %234 = vector.extract_strided_slice %233 {offsets = [0, 0], sizes = [1, 32], strides = [1, 1]} : vector<16x32xf32> to vector<1x32xf32>
    %235 = vector.extract_strided_slice %233 {offsets = [8, 0], sizes = [1, 32], strides = [1, 1]} : vector<16x32xf32> to vector<1x32xf32>
    %236 = tpu.concatenate %234, %235 in 0 : vector<1x32xf32>, vector<1x32xf32> -> vector<2x32xf32>
    %cst_46 = arith.constant dense<0.000000e+00> : vector<2x4xf32>
    %237 = tpu.matmul %236, %5, %cst_46 {dimension_numbers = #tpu.dot_dimension_numbers<[1], [0], [0], [1], [0, 0, 1, 1], [], []>} : vector<2x32xf32>, vector<32x4xf32>, vector<2x4xf32> -> vector<2x4xf32>
    %238 = vector.broadcast %14 : vector<1x4xf32> to vector<2x4xf32>
    %239 = arith.addf %237, %238 : vector<2x4xf32>
    %cst_47 = arith.constant dense<0xFF800000> : vector<2xf32>
    %240 = vector.multi_reduction <maximumf>, %239, %cst_47 [1] : vector<2x4xf32> to vector<2xf32>
    %241 = vector.shape_cast %240 : vector<2xf32> to vector<2x1xf32>
    %242 = vector.broadcast %241 : vector<2x1xf32> to vector<2x4xf32>
    %243 = arith.subf %239, %242 : vector<2x4xf32>
    %244 = math.exp %243 : vector<2x4xf32>
    %cst_48 = arith.constant dense<0.000000e+00> : vector<2xf32>
    %245 = vector.multi_reduction <add>, %244, %cst_48 [1] : vector<2x4xf32> to vector<2xf32>
    %246 = vector.shape_cast %245 : vector<2xf32> to vector<2x1xf32>
    %247 = math.log %246 : vector<2x1xf32>
    %248 = arith.addf %247, %241 : vector<2x1xf32>
    %249 = tpu.iota {dimensions = array<i32: 1>} : vector<2x4xi32>
    %250 = tpu.iota {dimensions = array<i32: 0>} : vector<2x4xi32>
    %cst_49 = arith.constant 0.000000e+00 : f32
    %251 = vector.broadcast %cst_49 : f32 to vector<2x4xf32>
    %c0_i32 = arith.constant 0 : i32
    %252 = vector.broadcast %c0_i32 : i32 to vector<2x4xi32>
    %253 = arith.cmpi eq, %250, %252 : vector<2x4xi32>
    %c0_50 = arith.constant 0 : index
    %254 = memref.load %arg1[%c0_50] : memref<2xi32, #tpu.memory_space<smem>>
    %255 = vector.broadcast %254 : i32 to vector<2x4xi32>
    %256 = arith.cmpi eq, %249, %255 : vector<2x4xi32>
    %257 = arith.andi %253, %256 : vector<2x4xi1>
    %cst_51 = arith.constant 1.000000e+00 : f32
    %cst_52 = arith.constant 0.000000e+00 : f32
    %258 = vector.broadcast %cst_51 : f32 to vector<2x4xf32>
    %259 = vector.broadcast %cst_52 : f32 to vector<2x4xf32>
    %260 = arith.select %257, %258, %259 : vector<2x4xi1>, vector<2x4xf32>
    %261 = arith.addf %251, %260 : vector<2x4xf32>
    %c1_i32 = arith.constant 1 : i32
    %262 = vector.broadcast %c1_i32 : i32 to vector<2x4xi32>
    %263 = arith.cmpi eq, %250, %262 : vector<2x4xi32>
    %c1_53 = arith.constant 1 : index
    %264 = memref.load %arg1[%c1_53] : memref<2xi32, #tpu.memory_space<smem>>
    %265 = vector.broadcast %264 : i32 to vector<2x4xi32>
    %266 = arith.cmpi eq, %249, %265 : vector<2x4xi32>
    %267 = arith.andi %263, %266 : vector<2x4xi1>
    %cst_54 = arith.constant 1.000000e+00 : f32
    %cst_55 = arith.constant 0.000000e+00 : f32
    %268 = vector.broadcast %cst_54 : f32 to vector<2x4xf32>
    %269 = vector.broadcast %cst_55 : f32 to vector<2x4xf32>
    %270 = arith.select %267, %268, %269 : vector<2x4xi1>, vector<2x4xf32>
    %271 = arith.addf %261, %270 : vector<2x4xf32>
    %272 = arith.mulf %271, %239 : vector<2x4xf32>
    %cst_56 = arith.constant dense<0.000000e+00> : vector<2xf32>
    %273 = vector.multi_reduction <add>, %272, %cst_56 [1] : vector<2x4xf32> to vector<2xf32>
    %274 = vector.shape_cast %273 : vector<2xf32> to vector<2x1xf32>
    %275 = arith.subf %248, %274 : vector<2x1xf32>
    %cst_57 = arith.constant dense<0.000000e+00> : vector<1xf32>
    %276 = vector.multi_reduction <add>, %275, %cst_57 [0] : vector<2x1xf32> to vector<1xf32>
    %277 = vector.shape_cast %276 : vector<1xf32> to vector<1x1xf32>
    %cst_58 = arith.constant 5.000000e-01 : f32
    %278 = vector.broadcast %cst_58 : f32 to vector<1x1xf32>
    %279 = arith.mulf %277, %278 : vector<1x1xf32>
    %cst_59 = arith.constant 0.000000e+00 : f32
    %280 = vector.broadcast %cst_59 : f32 to vector<24x128xf32>
    %c0_60 = arith.constant 0 : index
    %c0_61 = arith.constant 0 : index
    %281 = vector.load %arg5[%c0_60, %c0_61] : memref<24x128xf32, #tpu.memory_space<vmem>>, vector<24x128xf32>
    tpu.vector_store %arg5[%c0_60, %c0_61], %280 {strides = array<i32>} : memref<24x128xf32, #tpu.memory_space<vmem>>, vector<24x128xf32>,
    %c0_62 = arith.constant 0 : index
    %c0_63 = arith.constant 0 : index
    %282 = vector.load %arg5[%c0_62, %c0_63] : memref<24x128xf32, #tpu.memory_space<vmem>>, vector<16x32xf32>
    tpu.vector_store %arg5[%c0_62, %c0_63], %233 {strides = array<i32>} : memref<24x128xf32, #tpu.memory_space<vmem>>, vector<16x32xf32>,
    %c16_64 = arith.constant 16 : index
    %c0_65 = arith.constant 0 : index
    %283 = vector.load %arg5[%c16_64, %c0_65] : memref<24x128xf32, #tpu.memory_space<vmem>>, vector<2x4xf32>
    tpu.vector_store %arg5[%c16_64, %c0_65], %239 {strides = array<i32>} : memref<24x128xf32, #tpu.memory_space<vmem>>, vector<2x4xf32>,
    %c18 = arith.constant 18 : index
    %c0_66 = arith.constant 0 : index
    %284 = vector.load %arg5[%c18, %c0_66] : memref<24x128xf32, #tpu.memory_space<vmem>>, vector<1x1xf32>
    tpu.vector_store %arg5[%c18, %c0_66], %279 {strides = array<i32>} : memref<24x128xf32, #tpu.memory_space<vmem>>, vector<1x1xf32>,
    return
  }
  func.func @transform_0(%arg0: i32, %arg1: memref<2xi32, #tpu.memory_space<smem>>) -> (i32, i32) {
    %c0_i32 = arith.constant 0 : i32
    %c0_i32_0 = arith.constant 0 : i32
    %c0_i32_1 = arith.constant 0 : i32
    return %c0_i32, %c0_i32_0 : i32, i32
  }
  func.func @transform_1(%arg0: i32, %arg1: memref<2xi32, #tpu.memory_space<smem>>) -> (i32, i32) {
    %c0_i32 = arith.constant 0 : i32
    %c0_i32_0 = arith.constant 0 : i32
    %c0_i32_1 = arith.constant 0 : i32
    return %c0_i32, %c0_i32_0 : i32, i32
  }
  func.func @transform_2(%arg0: i32, %arg1: memref<2xi32, #tpu.memory_space<smem>>) -> (i32, i32) {
    %c0_i32 = arith.constant 0 : i32
    %c0_i32_0 = arith.constant 0 : i32
    %c0_i32_1 = arith.constant 0 : i32
    return %c0_i32, %c0_i32_0 : i32, i32
  }
  func.func @transform_3(%arg0: i32, %arg1: memref<2xi32, #tpu.memory_space<smem>>) -> (i32, i32) {
    %c0_i32 = arith.constant 0 : i32
    %c0_i32_0 = arith.constant 0 : i32
    %c0_i32_1 = arith.constant 0 : i32
    return %c0_i32, %c0_i32_0 : i32, i32
  }
}

</mosaic_0001>

<llo_original>
// kernel: tpu_custom_call.1
$region0: #{tpu_custom_call.1}
  #allocation0 [shape = 'u32[]', space=smem, size = 0x4, offset = 0x4, fixed_abs, tag = 'smem constant byte address 0x4 - core index']
  #allocation1 [shape = 'u32[144,128]{1,0:T(1,128)}', space=vmem, size = 0x12000, scoped, tag = 'internal scratch']
  #allocation2 [shape = 's32[1]{0}', space=sflag, size = 0x4, scoped, tag = 'scoped memory for tpu_custom_call.1']
  #allocation3 [shape = 'u8[512]{0}', space=smem, size = 0x200, scoped, tag = 'prefetched SMEM operand 0']
  %s0 = inlined_call_operand.hbm [shape: s32[2], index: 0, kind: input, shape index: {}]
  %s1 = inlined_call_operand.hbm [shape: f32[24,128], index: 1, kind: input, shape index: {}]
  %s2 = inlined_call_operand.hbm [shape: f32[256,128], index: 2, kind: input, shape index: {}]
  %s3 = inlined_call_operand.hbm [shape: f32[16,128], index: 3, kind: input, shape index: {}]
  %s4 = inlined_call_operand.hbm [shape: f32[24,128], index: 4, kind: output, shape index: {}]
  %s5 = sld [smem:[#allocation0]]
  $region34: #{tpu_custom_call.1} parent=0
    _
  %s7 = ssub.s32 1, %s5
  %s8 = scalar_select 0, %s7, %s5
  %10 = dma.hbm_to_smem %s0, 16, [#allocation3], [#allocation2]
  %11 = dma.done [#allocation2], 16
  %12 = sfence
  $region1: #{tpu_custom_call.1} parent=0
    #allocation4 [shape = 'u8[12288]{0}', space=vmem, size = 0x3000, scoped, tag = 'input window, operand 1, single buffered']
    #allocation5 [shape = 's32[1]{0}', space=sflag, size = 0x4, scoped, tag = 'scoped memory for tpu_custom_call.1']
    #allocation6 [shape = 's32[1]{0}', space=sflag, size = 0x4, scoped, tag = 'scoped memory for tpu_custom_call.1']
    #allocation7 [shape = 'u8[131072]{0}', space=vmem, size = 0x20000, scoped, tag = 'input window, operand 2, single buffered']
    #allocation8 [shape = 's32[1]{0}', space=sflag, size = 0x4, scoped, tag = 'scoped memory for tpu_custom_call.1']
    #allocation9 [shape = 'u8[8192]{0}', space=vmem, size = 0x2000, scoped, tag = 'input window, operand 3, single buffered']
    #allocation10 [shape = 'u8[12288]{0}', space=vmem, size = 0x3000, scoped, tag = 'output window, operand 0, single buffered']
    %13 = vsyncpa [#allocation5], 0
    %14 = vsyncpa [#allocation8], 0
    %15 = vsyncpa [#allocation6], 0
    // Predicated region
    $region2: #{tpu_custom_call.1} parent=1 // pred_check
      _
    $region3: #{tpu_custom_call.1} parent=1 // pred_check_branch
      %17 = sbr.rel (0) target = $region5
    $region4: #{tpu_custom_call.1} parent=1 // pred_region
      %s19 = ssub.s32 384, 384
      %20 = vsyncadd [#allocation5], %s19
      %s21 = sshll.u32 [#allocation4], 4
      %s22 = int_to_ptr.vmem [resolvable:$true] %s21
      %27 = dma.hbm_to_vmem [thread:$0]  %s1, 384, %s22, [#allocation5], 128, 128, 8
    $region5: #{tpu_custom_call.1} parent=1 // pred_fallthru
      _
    // Predicated region
    $region6: #{tpu_custom_call.1} parent=1 // pred_check
      _
    $region7: #{tpu_custom_call.1} parent=1 // pred_check_branch
      %29 = sbr.rel (0) target = $region9
    $region8: #{tpu_custom_call.1} parent=1 // pred_region
      %s31 = ssub.s32 4096, 4096
      %32 = vsyncadd [#allocation8], %s31
      %s33 = sshll.u32 [#allocation7], 4
      %s34 = int_to_ptr.vmem [resolvable:$true] %s33
      %39 = dma.hbm_to_vmem [thread:$0]  %s2, 4096, %s34, [#allocation8], 128, 128, 8
    $region9: #{tpu_custom_call.1} parent=1 // pred_fallthru
      _
    // Predicated region
    $region10: #{tpu_custom_call.1} parent=1 // pred_check
      _
    $region11: #{tpu_custom_call.1} parent=1 // pred_check_branch
      %41 = sbr.rel (0) target = $region13
    $region12: #{tpu_custom_call.1} parent=1 // pred_region
      %s43 = ssub.s32 256, 256
      %44 = vsyncadd [#allocation8], %s43
      %s45 = sshll.u32 [#allocation9], 4
      %s46 = int_to_ptr.vmem [resolvable:$true] %s45
      %51 = dma.hbm_to_vmem [thread:$0]  %s3, 256, %s46, [#allocation8], 128, 128, 8
    $region13: #{tpu_custom_call.1} parent=1 // pred_fallthru
      _
    // Predicated region
    $region14: #{tpu_custom_call.1} parent=1 // pred_check
      _
    $region15: #{tpu_custom_call.1} parent=1 // pred_check_branch
      %53 = sbr.rel (0) target = $region17
    $region16: #{tpu_custom_call.1} parent=1 // pred_region
      %54 = dma.done [#allocation5], 384
    $region17: #{tpu_custom_call.1} parent=1 // pred_fallthru
      _
    // Predicated region
    $region18: #{tpu_custom_call.1} parent=1 // pred_check
      _
    $region19: #{tpu_custom_call.1} parent=1 // pred_check_branch
      %56 = sbr.rel (0) target = $region21
    $region20: #{tpu_custom_call.1} parent=1 // pred_region
      %57 = dma.done [#allocation8], 4096
    $region21: #{tpu_custom_call.1} parent=1 // pred_fallthru
      _
    // Predicated region
    $region22: #{tpu_custom_call.1} parent=1 // pred_check
      _
    $region23: #{tpu_custom_call.1} parent=1 // pred_check_branch
      %59 = sbr.rel (0) target = $region25
    $region24: #{tpu_custom_call.1} parent=1 // pred_region
      %60 = dma.done [#allocation8], 256
    $region25: #{tpu_custom_call.1} parent=1 // pred_fallthru
      _
    %v61 = vld [vmem:[#allocation4] sm:$0xff]
    %v62 = vld [vmem:[#allocation4 + $0x8] sm:$0xff]
    %v63 = vld [vmem:[#allocation7] sm:$0xff]
    %v64 = vld [vmem:[#allocation7 + $0x8] sm:$0xff]
    %v65 = vld [vmem:[#allocation7 + $0x10] sm:$0xff]
    %v66 = vld [vmem:[#allocation7 + $0x18] sm:$0xff]
    %v67 = vld [vmem:[#allocation7 + $0x20] sm:$0xff]
    %v68 = vld [vmem:[#allocation7 + $0x28] sm:$0xff]
    %v69 = vld [vmem:[#allocation7 + $0x30] sm:$0xff]
    %v70 = vld [vmem:[#allocation7 + $0x38] sm:$0xff]
    %v71 = vld [vmem:[#allocation7 + $0x40] sm:$0xff]
    %v72 = vld [vmem:[#allocation7 + $0x48] sm:$0xff]
    %v73 = vld [vmem:[#allocation7 + $0x50] sm:$0xff]
    %v74 = vld [vmem:[#allocation7 + $0x58] sm:$0xff]
    %v75 = vld [vmem:[#allocation7 + $0x60] sm:$0xff]
    %v76 = vld [vmem:[#allocation7 + $0x68] sm:$0xff]
    %v77 = vld [vmem:[#allocation7 + $0x70] sm:$0xff]
    %v78 = vld [vmem:[#allocation7 + $0x78] sm:$0xff]
    %v79 = vld [vmem:[#allocation7 + $0x80] sm:$0xff]
    %v80 = vld [vmem:[#allocation7 + $0x88] sm:$0xff]
    %v81 = vld [vmem:[#allocation7 + $0x90] sm:$0xff]
    %v82 = vld [vmem:[#allocation7 + $0x98] sm:$0xff]
    %v83 = vld [vmem:[#allocation7 + $0xa0] sm:$0xff]
    %v84 = vld [vmem:[#allocation7 + $0xa8] sm:$0xff]
    %v85 = vld [vmem:[#allocation7 + $0xb0] sm:$0xff]
    %v86 = vld [vmem:[#allocation7 + $0xb8] sm:$0xff]
    %v87 = vld [vmem:[#allocation7 + $0xc0] sm:$0xff]
    %v88 = vld [vmem:[#allocation7 + $0xc8] sm:$0xff]
    %v89 = vld [vmem:[#allocation7 + $0xd0] sm:$0xff]
    %v90 = vld [vmem:[#allocation7 + $0xd8] sm:$0xff]
    %v91 = vld [vmem:[#allocation7 + $0xe0] sm:$0xff]
    %v92 = vld [vmem:[#allocation7 + $0xe8] sm:$0xff]
    %v93 = vld [vmem:[#allocation7 + $0xf0] sm:$0xff]
    %v94 = vld [vmem:[#allocation7 + $0xf8] sm:$0xff]
    %v95 = vld [vmem:[#allocation9] sm:$0x1]
    %v96 = vld [vmem:[#allocation9 + $0x1] sm:$0x1]
    %v97 = vld [vmem:[#allocation9 + $0x2] sm:$0x1]
    %v98 = vld [vmem:[#allocation9 + $0x3] sm:$0x1]
    %v99 = vld [vmem:[#allocation9 + $0x4] sm:$0x1]
    %v100 = vld [vmem:[#allocation9 + $0x5] sm:$0x1]
    %v101 = vld [vmem:[#allocation9 + $0x6] sm:$0x1]
    %v102 = vld [vmem:[#allocation9 + $0x7] sm:$0x1]
    %v103 = vld [vmem:[#allocation9 + $0x8] sm:$0x1]
    %v104 = vlaneseq
    %v105 = vshrl.u32 %v104, 7
    %v106 = vsub.s32 0, %v105
    %v107 = vrot.slane %v95, %v106
    %vm108 = vcmask 261120
    %v110 = vsel %vm108, %v61, 0
    %v113 = vsel %vm108, %v62, 0
    %115 = vmatprep.subr.mxu0 0.0
    %116 = vmatpush1.msra.mxu0 %v63
    %117 = vmatprep.subr.mxu0 0.0
    %118 = vmatpush1.msra.mxu0 %v64
    %119 = vmatprep.subr.mxu0 0.0
    %120 = vmatpush1.msra.mxu0 %v65
    %121 = vmatprep.subr.mxu0 0.0
    %122 = vmatpush1.msra.mxu0 %v66
    %123 = vmatprep.subr.mxu0 0.0
    %124 = vmatpush1.msra.mxu0 0.0
    %125 = vmatprep.subr.mxu0 0.0
    %126 = vmatpush1.msra.mxu0 0.0
    %127 = vmatprep.subr.mxu0 0.0
    %128 = vmatpush1.msra.mxu0 0.0
    %129 = vmatprep.subr.mxu0 0.0
    %130 = vmatpush1.msra.mxu0 0.0
    %131 = vmatprep.subr.mxu0 0.0
    %132 = vmatpush1.msra.mxu0 0.0
    %133 = vmatprep.subr.mxu0 0.0
    %134 = vmatpush1.msra.mxu0 0.0
    %135 = vmatprep.subr.mxu0 0.0
    %136 = vmatpush1.msra.mxu0 0.0
    %137 = vmatprep.subr.mxu0 0.0
    %138 = vmatpush1.msra.mxu0 0.0
    %139 = vmatprep.subr.mxu0 0.0
    %140 = vmatpush1.msra.mxu0 0.0
    %141 = vmatprep.subr.mxu0 0.0
    %142 = vmatpush1.msra.mxu0 0.0
    %143 = vmatprep.subr.mxu0 0.0
    %144 = vmatpush1.msra.mxu0 0.0
    %145 = vmatprep.subr.mxu0 0.0
    %146 = vmatpush1.msra.mxu0 0.0
    %147 = vmatprep.subr.mxu0 0.0
    %148 = vmatpush1.msra.mxu0 0.0
    %149 = vmatprep.subr.mxu0 0.0
    %150 = vmatpush1.msra.mxu0 0.0
    %151 = vmatprep.subr.mxu0 0.0
    %152 = vmatpush1.msra.mxu0 0.0
    %153 = vmatprep.subr.mxu0 0.0
    %154 = vmatpush1.msra.mxu0 0.0
    %155 = vmatprep.subr.mxu0 0.0
    %156 = vmatpush1.msra.mxu0 0.0
    %157 = vmatprep.subr.mxu0 0.0
    %158 = vmatpush1.msra.mxu0 0.0
    %159 = vmatprep.subr.mxu0 0.0
    %160 = vmatpush1.msra.mxu0 0.0
    %161 = vmatprep.subr.mxu0 0.0
    %162 = vmatpush1.msra.mxu0 0.0
    %163 = vmatprep.subr.mxu0 0.0
    %164 = vmatpush1.msra.mxu0 0.0
    %165 = vmatprep.subr.mxu0 0.0
    %166 = vmatpush1.msra.mxu0 0.0
    %167 = vmatprep.subr.mxu0 0.0
    %168 = vmatpush1.msra.mxu0 0.0
    %169 = vmatprep.subr.mxu0 0.0
    %170 = vmatpush1.msra.mxu0 0.0
    %171 = vmatprep.subr.mxu0 0.0
    %172 = vmatpush1.msra.mxu0 0.0
    %173 = vmatprep.subr.mxu0 0.0
    %174 = vmatpush1.msra.mxu0 0.0
    %175 = vmatprep.subr.mxu0 0.0
    %176 = vmatpush1.msra.mxu0 0.0
    %177 = vmatprep.subr.mxu0 0.0
    %178 = vmatpush1.msra.mxu0 0.0
    %179 = vmatprep.mubr.f32.mxu0 0.0
    %180 = vmatmul.mubr.f32.gmra.mrb[0].mxu0 %v110
    %v181 = vpop.f32.mrb[0].mxu0
    %v182 = vadd.f32 %v107, %v181
    %v183 = vpop.f32.mrb[0].mxu0
    %184 = vmatprep.mubr.f32.mxu0 0.0
    %185 = vmatmul.mubr.f32.gmra.mrb[0].mxu0 %v113
    %v186 = vpop.f32.mrb[0].mxu0
    %v187 = vadd.f32 %v107, %v186
    %v188 = vpop.f32.mrb[0].mxu0
    %189 = vdwg.mxu0
    %191 = vrot.lane.b32.xlu0 %v182, 120
    %v192 = vpop.permute.xlu0 %191
    %194 = vrot.lane.b32.xlu0 %v182, 112
    %v195 = vpop.permute.xlu0 %194
    %197 = vrot.lane.b32.xlu0 %v182, 104
    %v198 = vpop.permute.xlu0 %197
    %v200 = vcombine.low %v182, %v195
    %v201 = vcombine.high %v182, %v195
    %v203 = vunpack.c.l.s4 1983009808
    %v204 = vunpack.c.0.s8 %v203
    %v205 = vlaneseq
    %v206 = vshrl.u32 %v205, 7
    %v207 = vsub.s32 %v204, %v206
    %v208 = vrot.slane %v200, %v207
    %v210 = vunpack.c.l.s4 1983009808
    %v211 = vunpack.c.0.s8 %v210
    %v212 = vlaneseq
    %v213 = vshrl.u32 %v212, 7
    %v214 = vsub.s32 %v211, %v213
    %v215 = vrot.slane %v201, %v214
    %v216 = vcombine.low %v192, %v198
    %v217 = vcombine.high %v192, %v198
    %v219 = vunpack.c.l.s4 1983009808
    %v220 = vunpack.c.0.s8 %v219
    %v221 = vlaneseq
    %v222 = vshrl.u32 %v221, 7
    %v223 = vsub.s32 %v220, %v222
    %v224 = vrot.slane %v216, %v223
    %v226 = vunpack.c.l.s4 1983009808
    %v227 = vunpack.c.0.s8 %v226
    %v228 = vlaneseq
    %v229 = vshrl.u32 %v228, 7
    %v230 = vsub.s32 %v227, %v229
    %v231 = vrot.slane %v217, %v230
    %v232 = vcombine.low %v208, %v224
    %v233 = vcombine.high %v208, %v224
    %v235 = vunpack.c.l.s4 1934713408
    %v236 = vunpack.c.0.s8 %v235
    %v237 = vlaneseq
    %v238 = vshrl.u32 %v237, 7
    %v239 = vsub.s32 %v236, %v238
    %v240 = vrot.slane %v232, %v239
    %v242 = vunpack.c.l.s4 1934713408
    %v243 = vunpack.c.0.s8 %v242
    %v244 = vlaneseq
    %v245 = vshrl.u32 %v244, 7
    %v246 = vsub.s32 %v243, %v245
    %v247 = vrot.slane %v233, %v246
    %v248 = vcombine.low %v215, %v231
    %v249 = vcombine.high %v215, %v231
    %v251 = vunpack.c.l.s4 1934713408
    %v252 = vunpack.c.0.s8 %v251
    %v253 = vlaneseq
    %v254 = vshrl.u32 %v253, 7
    %v255 = vsub.s32 %v252, %v254
    %v256 = vrot.slane %v248, %v255
    %v258 = vunpack.c.l.s4 1934713408
    %v259 = vunpack.c.0.s8 %v258
    %v260 = vlaneseq
    %v261 = vshrl.u32 %v260, 7
    %v262 = vsub.s32 %v259, %v261
    %v263 = vrot.slane %v249, %v262
    %v264 = vcombine.high %v240, 0.0
    %v265 = vcombine.high %v247, 0.0
    %v266 = vcombine.high %v256, 0.0
    %v267 = vcombine.high %v263, 0.0
    %v276 = vrot.slane %v240, 1
    %v277 = vrot.slane %v264, 1
    %v278 = vrot.slane %v247, 1
    %v279 = vrot.slane %v265, 1
    %v280 = vrot.slane %v256, 1
    %v281 = vrot.slane %v266, 1
    %v282 = vrot.slane %v263, 1
    %v283 = vrot.slane %v267, 1
    %v284 = vrot.slane %v240, 2
    %v285 = vrot.slane %v264, 2
    %v286 = vrot.slane %v247, 2
    %v287 = vrot.slane %v265, 2
    %v288 = vrot.slane %v256, 2
    %v289 = vrot.slane %v266, 2
    %v290 = vrot.slane %v263, 2
    %v291 = vrot.slane %v267, 2
    %v292 = vrot.slane %v240, 3
    %v293 = vrot.slane %v264, 3
    %v294 = vrot.slane %v247, 3
    %v295 = vrot.slane %v265, 3
    %v296 = vrot.slane %v256, 3
    %v297 = vrot.slane %v266, 3
    %v298 = vrot.slane %v263, 3
    %v299 = vrot.slane %v267, 3
    %300 = vrot.lane.b32.xlu0 %v182, 96
    %v301 = vpop.permute.xlu0 %300
    %302 = vrot.lane.b32.xlu0 %v192, 96
    %v303 = vpop.permute.xlu0 %302
    %304 = vrot.lane.b32.xlu0 %v195, 96
    %v305 = vpop.permute.xlu0 %304
    %306 = vrot.lane.b32.xlu0 %v198, 96
    %v307 = vpop.permute.xlu0 %306
    %v312 = vcombine.low %v301, %v305
    %v313 = vcombine.high %v301, %v305
    %v315 = vunpack.c.l.s4 1983009808
    %v316 = vunpack.c.0.s8 %v315
    %v317 = vlaneseq
    %v318 = vshrl.u32 %v317, 7
    %v319 = vsub.s32 %v316, %v318
    %v320 = vrot.slane %v312, %v319
    %v322 = vunpack.c.l.s4 1983009808
    %v323 = vunpack.c.0.s8 %v322
    %v324 = vlaneseq
    %v325 = vshrl.u32 %v324, 7
    %v326 = vsub.s32 %v323, %v325
    %v327 = vrot.slane %v313, %v326
    %v328 = vcombine.low %v303, %v307
    %v329 = vcombine.high %v303, %v307
    %v331 = vunpack.c.l.s4 1983009808
    %v332 = vunpack.c.0.s8 %v331
    %v333 = vlaneseq
    %v334 = vshrl.u32 %v333, 7
    %v335 = vsub.s32 %v332, %v334
    %v336 = vrot.slane %v328, %v335
    %v338 = vunpack.c.l.s4 1983009808
    %v339 = vunpack.c.0.s8 %v338
    %v340 = vlaneseq
    %v341 = vshrl.u32 %v340, 7
    %v342 = vsub.s32 %v339, %v341
    %v343 = vrot.slane %v329, %v342
    %v344 = vcombine.low %v320, %v336
    %v345 = vcombine.high %v320, %v336
    %v347 = vunpack.c.l.s4 1934713408
    %v348 = vunpack.c.0.s8 %v347
    %v349 = vlaneseq
    %v350 = vshrl.u32 %v349, 7
    %v351 = vsub.s32 %v348, %v350
    %v352 = vrot.slane %v344, %v351
    %v354 = vunpack.c.l.s4 1934713408
    %v355 = vunpack.c.0.s8 %v354
    %v356 = vlaneseq
    %v357 = vshrl.u32 %v356, 7
    %v358 = vsub.s32 %v355, %v357
    %v359 = vrot.slane %v345, %v358
    %v360 = vcombine.low %v327, %v343
    %v361 = vcombine.high %v327, %v343
    %v363 = vunpack.c.l.s4 1934713408
    %v364 = vunpack.c.0.s8 %v363
    %v365 = vlaneseq
    %v366 = vshrl.u32 %v365, 7
    %v367 = vsub.s32 %v364, %v366
    %v368 = vrot.slane %v360, %v367
    %v370 = vunpack.c.l.s4 1934713408
    %v371 = vunpack.c.0.s8 %v370
    %v372 = vlaneseq
    %v373 = vshrl.u32 %v372, 7
    %v374 = vsub.s32 %v371, %v373
    %v375 = vrot.slane %v361, %v374
    %v376 = vcombine.high %v352, 0.0
    %v377 = vcombine.high %v359, 0.0
    %v378 = vcombine.high %v368, 0.0
    %v379 = vcombine.high %v375, 0.0
    %v388 = vrot.slane %v352, 1
    %v389 = vrot.slane %v376, 1
    %v390 = vrot.slane %v359, 1
    %v391 = vrot.slane %v377, 1
    %v392 = vrot.slane %v368, 1
    %v393 = vrot.slane %v378, 1
    %v394 = vrot.slane %v375, 1
    %v395 = vrot.slane %v379, 1
    %v396 = vrot.slane %v352, 2
    %v397 = vrot.slane %v376, 2
    %v398 = vrot.slane %v359, 2
    %v399 = vrot.slane %v377, 2
    %v400 = vrot.slane %v368, 2
    %v401 = vrot.slane %v378, 2
    %v402 = vrot.slane %v375, 2
    %v403 = vrot.slane %v379, 2
    %v404 = vrot.slane %v352, 3
    %v405 = vrot.slane %v376, 3
    %v406 = vrot.slane %v359, 3
    %v407 = vrot.slane %v377, 3
    %v408 = vrot.slane %v368, 3
    %v409 = vrot.slane %v378, 3
    %v410 = vrot.slane %v375, 3
    %v411 = vrot.slane %v379, 3
    %412 = vrot.lane.b32.xlu0 %v182, 64
    %v413 = vpop.permute.xlu0 %412
    %414 = vrot.lane.b32.xlu0 %v192, 64
    %v415 = vpop.permute.xlu0 %414
    %416 = vrot.lane.b32.xlu0 %v195, 64
    %v417 = vpop.permute.xlu0 %416
    %418 = vrot.lane.b32.xlu0 %v198, 64
    %v419 = vpop.permute.xlu0 %418
    %v424 = vcombine.low %v413, %v417
    %v425 = vcombine.high %v413, %v417
    %v427 = vunpack.c.l.s4 1983009808
    %v428 = vunpack.c.0.s8 %v427
    %v429 = vlaneseq
    %v430 = vshrl.u32 %v429, 7
    %v431 = vsub.s32 %v428, %v430
    %v432 = vrot.slane %v424, %v431
    %v434 = vunpack.c.l.s4 1983009808
    %v435 = vunpack.c.0.s8 %v434
    %v436 = vlaneseq
    %v437 = vshrl.u32 %v436, 7
    %v438 = vsub.s32 %v435, %v437
    %v439 = vrot.slane %v425, %v438
    %v440 = vcombine.low %v415, %v419
    %v441 = vcombine.high %v415, %v419
    %v443 = vunpack.c.l.s4 1983009808
    %v444 = vunpack.c.0.s8 %v443
    %v445 = vlaneseq
    %v446 = vshrl.u32 %v445, 7
    %v447 = vsub.s32 %v444, %v446
    %v448 = vrot.slane %v440, %v447
    %v450 = vunpack.c.l.s4 1983009808
    %v451 = vunpack.c.0.s8 %v450
    %v452 = vlaneseq
    %v453 = vshrl.u32 %v452, 7
    %v454 = vsub.s32 %v451, %v453
    %v455 = vrot.slane %v441, %v454
    %v456 = vcombine.low %v432, %v448
    %v457 = vcombine.high %v432, %v448
    %v459 = vunpack.c.l.s4 1934713408
    %v460 = vunpack.c.0.s8 %v459
    %v461 = vlaneseq
    %v462 = vshrl.u32 %v461, 7
    %v463 = vsub.s32 %v460, %v462
    %v464 = vrot.slane %v456, %v463
    %v466 = vunpack.c.l.s4 1934713408
    %v467 = vunpack.c.0.s8 %v466
    %v468 = vlaneseq
    %v469 = vshrl.u32 %v468, 7
    %v470 = vsub.s32 %v467, %v469
    %v471 = vrot.slane %v457, %v470
    %v472 = vcombine.low %v439, %v455
    %v473 = vcombine.high %v439, %v455
    %v475 = vunpack.c.l.s4 1934713408
    %v476 = vunpack.c.0.s8 %v475
    %v477 = vlaneseq
    %v478 = vshrl.u32 %v477, 7
    %v479 = vsub.s32 %v476, %v478
    %v480 = vrot.slane %v472, %v479
    %v482 = vunpack.c.l.s4 1934713408
    %v483 = vunpack.c.0.s8 %v482
    %v484 = vlaneseq
    %v485 = vshrl.u32 %v484, 7
    %v486 = vsub.s32 %v483, %v485
    %v487 = vrot.slane %v473, %v486
    %v488 = vcombine.high %v464, 0.0
    %v489 = vcombine.high %v471, 0.0
    %v490 = vcombine.high %v480, 0.0
    %v491 = vcombine.high %v487, 0.0
    %v500 = vrot.slane %v464, 1
    %v501 = vrot.slane %v488, 1
    %v502 = vrot.slane %v471, 1
    %v503 = vrot.slane %v489, 1
    %v504 = vrot.slane %v480, 1
    %v505 = vrot.slane %v490, 1
    %v506 = vrot.slane %v487, 1
    %v507 = vrot.slane %v491, 1
    %v508 = vrot.slane %v464, 2
    %v509 = vrot.slane %v488, 2
    %v510 = vrot.slane %v471, 2
    %v511 = vrot.slane %v489, 2
    %v512 = vrot.slane %v480, 2
    %v513 = vrot.slane %v490, 2
    %v514 = vrot.slane %v487, 2
    %v515 = vrot.slane %v491, 2
    %v516 = vrot.slane %v464, 3
    %v517 = vrot.slane %v488, 3
    %v518 = vrot.slane %v471, 3
    %v519 = vrot.slane %v489, 3
    %v520 = vrot.slane %v480, 3
    %v521 = vrot.slane %v490, 3
    %v522 = vrot.slane %v487, 3
    %v523 = vrot.slane %v491, 3
    %v524 = vrot.slane %v264, 7
    %vm525 = vcmask 1041409
    %v526 = vsel %vm525, %v524, %v240
    %v527 = vrot.slane %v247, 6
    %vm528 = vcmask 1042434
    %v529 = vsel %vm528, %v527, %v526
    %v530 = vrot.slane %v265, 5
    %vm531 = vcmask 1043459
    %v532 = vsel %vm531, %v530, %v529
    %v533 = vrot.slane %v256, 4
    %vm534 = vcmask 1044484
    %v535 = vsel %vm534, %v533, %v532
    %vm536 = vcmask 1045509
    %v537 = vsel %vm536, %v297, %v535
    %vm538 = vcmask 1046534
    %v539 = vsel %vm538, %v290, %v537
    %vm540 = vcmask 1047559
    %v541 = vsel %vm540, %v283, %v539
    %v542 = vrot.slane %v376, 7
    %v543 = vsel %vm525, %v542, %v352
    %v544 = vrot.slane %v359, 6
    %v545 = vsel %vm528, %v544, %v543
    %v546 = vrot.slane %v377, 5
    %v547 = vsel %vm531, %v546, %v545
    %v548 = vrot.slane %v368, 4
    %v549 = vsel %vm534, %v548, %v547
    %v550 = vsel %vm536, %v409, %v549
    %v551 = vsel %vm538, %v402, %v550
    %v552 = vsel %vm540, %v395, %v551
    %vm553 = vcmask 64512
    %v554 = vsel %vm553, %v541, 0
    %v556 = vsel %vm553, %v552, 0
    %558 = vmatprep.subr.mxu0 0.0
    %559 = vmatpush1.xpose.msra.mxu0 %v556
    %560 = vmatprep.subr.mxu0 0.0
    %561 = vmatpush1.xpose.msra.mxu0 0.0
    %562 = vmatprep.subr.mxu0 0.0
    %563 = vmatpush1.xpose.msra.mxu0 0.0
    %564 = vmatprep.subr.mxu0 0.0
    %565 = vmatpush1.xpose.msra.mxu0 0.0
    %566 = vmatprep.subr.mxu0 0.0
    %567 = vmatpush1.xpose.msra.mxu0 0.0
    %568 = vmatprep.subr.mxu0 0.0
    %569 = vmatpush1.xpose.msra.mxu0 0.0
    %570 = vmatprep.subr.mxu0 0.0
    %571 = vmatpush1.xpose.msra.mxu0 0.0
    %572 = vmatprep.subr.mxu0 0.0
    %573 = vmatpush1.xpose.msra.mxu0 0.0
    %574 = vmatprep.subr.mxu0 0.0
    %575 = vmatpush1.xpose.msra.mxu0 0.0
    %576 = vmatprep.subr.mxu0 0.0
    %577 = vmatpush1.xpose.msra.mxu0 0.0
    %578 = vmatprep.subr.mxu0 0.0
    %579 = vmatpush1.xpose.msra.mxu0 0.0
    %580 = vmatprep.subr.mxu0 0.0
    %581 = vmatpush1.xpose.msra.mxu0 0.0
    %582 = vmatprep.subr.mxu0 0.0
    %583 = vmatpush1.xpose.msra.mxu0 0.0
    %584 = vmatprep.subr.mxu0 0.0
    %585 = vmatpush1.xpose.msra.mxu0 0.0
    %586 = vmatprep.subr.mxu0 0.0
    %587 = vmatpush1.xpose.msra.mxu0 0.0
    %588 = vmatprep.subr.mxu0 0.0
    %589 = vmatpush1.xpose.msra.mxu0 0.0
    %590 = vmatprep.subr.mxu0 0.0
    %591 = vmatpush1.xpose.msra.mxu0 0.0
    %592 = vmatprep.subr.mxu0 0.0
    %593 = vmatpush1.xpose.msra.mxu0 0.0
    %594 = vmatprep.subr.mxu0 0.0
    %595 = vmatpush1.xpose.msra.mxu0 0.0
    %596 = vmatprep.subr.mxu0 0.0
    %597 = vmatpush1.xpose.msra.mxu0 0.0
    %598 = vmatprep.subr.mxu0 0.0
    %599 = vmatpush1.xpose.msra.mxu0 0.0
    %600 = vmatprep.subr.mxu0 0.0
    %601 = vmatpush1.xpose.msra.mxu0 0.0
    %602 = vmatprep.subr.mxu0 0.0
    %603 = vmatpush1.xpose.msra.mxu0 0.0
    %604 = vmatprep.subr.mxu0 0.0
    %605 = vmatpush1.xpose.msra.mxu0 0.0
    %606 = vmatprep.subr.mxu0 0.0
    %607 = vmatpush1.xpose.msra.mxu0 0.0
    %608 = vmatprep.subr.mxu0 0.0
    %609 = vmatpush1.xpose.msra.mxu0 0.0
    %610 = vmatprep.subr.mxu0 0.0
    %611 = vmatpush1.xpose.msra.mxu0 0.0
    %612 = vmatprep.subr.mxu0 0.0
    %613 = vmatpush1.xpose.msra.mxu0 0.0
    %614 = vmatprep.subr.mxu0 0.0
    %615 = vmatpush1.xpose.msra.mxu0 0.0
    %616 = vmatprep.subr.mxu0 0.0
    %617 = vmatpush1.xpose.msra.mxu0 0.0
    %618 = vmatprep.subr.mxu0 0.0
    %619 = vmatpush1.xpose.msra.mxu0 0.0
    %620 = vmatprep.subr.mxu0 0.0
    %621 = vmatpush1.xpose.msra.mxu0 0.0
    %622 = vmatprep.mubr.f32.mxu0 0.0
    %623 = vmatmul.mubr.f32.gmra.mrb[0].mxu0 %v554
    %v624 = vpop.f32.mrb[0].mxu0
    %v625 = vadd.f32 0.0, %v624
    %v626 = vpop.f32.mrb[0].mxu0
    %627 = vdwg.mxu0
    %v628 = vrot.slane %v277, 7
    %v629 = vsel %vm525, %v628, %v276
    %v630 = vrot.slane %v278, 6
    %v631 = vsel %vm528, %v630, %v629
    %v632 = vrot.slane %v279, 5
    %v633 = vsel %vm531, %v632, %v631
    %v634 = vrot.slane %v280, 4
    %v635 = vsel %vm534, %v634, %v633
    %v636 = vrot.slane %v281, 3
    %v637 = vsel %vm536, %v636, %v635
    %v638 = vrot.slane %v282, 2
    %v639 = vsel %vm538, %v638, %v637
    %v640 = vrot.slane %v283, 1
    %v641 = vsel %vm540, %v640, %v639
    %v642 = vrot.slane %v389, 7
    %v643 = vsel %vm525, %v642, %v388
    %v644 = vrot.slane %v390, 6
    %v645 = vsel %vm528, %v644, %v643
    %v646 = vrot.slane %v391, 5
    %v647 = vsel %vm531, %v646, %v645
    %v648 = vrot.slane %v392, 4
    %v649 = vsel %vm534, %v648, %v647
    %v650 = vrot.slane %v393, 3
    %v651 = vsel %vm536, %v650, %v649
    %v652 = vrot.slane %v394, 2
    %v653 = vsel %vm538, %v652, %v651
    %v654 = vrot.slane %v395, 1
    %v655 = vsel %vm540, %v654, %v653
    %v656 = vsel %vm553, %v641, 0
    %v658 = vsel %vm553, %v655, 0
    %660 = vmatprep.subr.mxu0 0.0
    %661 = vmatpush1.xpose.msra.mxu0 %v658
    %662 = vmatprep.subr.mxu0 0.0
    %663 = vmatpush1.xpose.msra.mxu0 0.0
    %664 = vmatprep.subr.mxu0 0.0
    %665 = vmatpush1.xpose.msra.mxu0 0.0
    %666 = vmatprep.subr.mxu0 0.0
    %667 = vmatpush1.xpose.msra.mxu0 0.0
    %668 = vmatprep.subr.mxu0 0.0
    %669 = vmatpush1.xpose.msra.mxu0 0.0
    %670 = vmatprep.subr.mxu0 0.0
    %671 = vmatpush1.xpose.msra.mxu0 0.0
    %672 = vmatprep.subr.mxu0 0.0
    %673 = vmatpush1.xpose.msra.mxu0 0.0
    %674 = vmatprep.subr.mxu0 0.0
    %675 = vmatpush1.xpose.msra.mxu0 0.0
    %676 = vmatprep.subr.mxu0 0.0
    %677 = vmatpush1.xpose.msra.mxu0 0.0
    %678 = vmatprep.subr.mxu0 0.0
    %679 = vmatpush1.xpose.msra.mxu0 0.0
    %680 = vmatprep.subr.mxu0 0.0
    %681 = vmatpush1.xpose.msra.mxu0 0.0
    %682 = vmatprep.subr.mxu0 0.0
    %683 = vmatpush1.xpose.msra.mxu0 0.0
    %684 = vmatprep.subr.mxu0 0.0
    %685 = vmatpush1.xpose.msra.mxu0 0.0
    %686 = vmatprep.subr.mxu0 0.0
    %687 = vmatpush1.xpose.msra.mxu0 0.0
    %688 = vmatprep.subr.mxu0 0.0
    %689 = vmatpush1.xpose.msra.mxu0 0.0
    %690 = vmatprep.subr.mxu0 0.0
    %691 = vmatpush1.xpose.msra.mxu0 0.0
    %692 = vmatprep.subr.mxu0 0.0
    %693 = vmatpush1.xpose.msra.mxu0 0.0
    %694 = vmatprep.subr.mxu0 0.0
    %695 = vmatpush1.xpose.msra.mxu0 0.0
    %696 = vmatprep.subr.mxu0 0.0
    %697 = vmatpush1.xpose.msra.mxu0 0.0
    %698 = vmatprep.subr.mxu0 0.0
    %699 = vmatpush1.xpose.msra.mxu0 0.0
    %700 = vmatprep.subr.mxu0 0.0
    %701 = vmatpush1.xpose.msra.mxu0 0.0
    %702 = vmatprep.subr.mxu0 0.0
    %703 = vmatpush1.xpose.msra.mxu0 0.0
    %704 = vmatprep.subr.mxu0 0.0
    %705 = vmatpush1.xpose.msra.mxu0 0.0
    %706 = vmatprep.subr.mxu0 0.0
    %707 = vmatpush1.xpose.msra.mxu0 0.0
    %708 = vmatprep.subr.mxu0 0.0
    %709 = vmatpush1.xpose.msra.mxu0 0.0
    %710 = vmatprep.subr.mxu0 0.0
    %711 = vmatpush1.xpose.msra.mxu0 0.0
    %712 = vmatprep.subr.mxu0 0.0
    %713 = vmatpush1.xpose.msra.mxu0 0.0
    %714 = vmatprep.subr.mxu0 0.0
    %715 = vmatpush1.xpose.msra.mxu0 0.0
    %716 = vmatprep.subr.mxu0 0.0
    %717 = vmatpush1.xpose.msra.mxu0 0.0
    %718 = vmatprep.subr.mxu0 0.0
    %719 = vmatpush1.xpose.msra.mxu0 0.0
    %720 = vmatprep.subr.mxu0 0.0
    %721 = vmatpush1.xpose.msra.mxu0 0.0
    %722 = vmatprep.subr.mxu0 0.0
    %723 = vmatpush1.xpose.msra.mxu0 0.0
    %724 = vmatprep.mubr.f32.mxu0 0.0
    %725 = vmatmul.mubr.f32.gmra.mrb[0].mxu0 %v656
    %v726 = vpop.f32.mrb[0].mxu0
    %v727 = vadd.f32 0.0, %v726
    %v728 = vpop.f32.mrb[0].mxu0
    %729 = vdwg.mxu0
    %v730 = vrot.slane %v285, 7
    %v731 = vsel %vm525, %v730, %v284
    %v732 = vrot.slane %v286, 6
    %v733 = vsel %vm528, %v732, %v731
    %v734 = vrot.slane %v287, 5
    %v735 = vsel %vm531, %v734, %v733
    %v736 = vrot.slane %v288, 4
    %v737 = vsel %vm534, %v736, %v735
    %v738 = vrot.slane %v289, 3
    %v739 = vsel %vm536, %v738, %v737
    %v740 = vrot.slane %v290, 2
    %v741 = vsel %vm538, %v740, %v739
    %v742 = vrot.slane %v291, 1
    %v743 = vsel %vm540, %v742, %v741
    %v744 = vrot.slane %v397, 7
    %v745 = vsel %vm525, %v744, %v396
    %v746 = vrot.slane %v398, 6
    %v747 = vsel %vm528, %v746, %v745
    %v748 = vrot.slane %v399, 5
    %v749 = vsel %vm531, %v748, %v747
    %v750 = vrot.slane %v400, 4
    %v751 = vsel %vm534, %v750, %v749
    %v752 = vrot.slane %v401, 3
    %v753 = vsel %vm536, %v752, %v751
    %v754 = vrot.slane %v402, 2
    %v755 = vsel %vm538, %v754, %v753
    %v756 = vrot.slane %v403, 1
    %v757 = vsel %vm540, %v756, %v755
    %v758 = vsel %vm553, %v743, 0
    %v760 = vsel %vm553, %v757, 0
    %762 = vmatprep.subr.mxu0 0.0
    %763 = vmatpush1.xpose.msra.mxu0 %v760
    %764 = vmatprep.subr.mxu0 0.0
    %765 = vmatpush1.xpose.msra.mxu0 0.0
    %766 = vmatprep.subr.mxu0 0.0
    %767 = vmatpush1.xpose.msra.mxu0 0.0
    %768 = vmatprep.subr.mxu0 0.0
    %769 = vmatpush1.xpose.msra.mxu0 0.0
    %770 = vmatprep.subr.mxu0 0.0
    %771 = vmatpush1.xpose.msra.mxu0 0.0
    %772 = vmatprep.subr.mxu0 0.0
    %773 = vmatpush1.xpose.msra.mxu0 0.0
    %774 = vmatprep.subr.mxu0 0.0
    %775 = vmatpush1.xpose.msra.mxu0 0.0
    %776 = vmatprep.subr.mxu0 0.0
    %777 = vmatpush1.xpose.msra.mxu0 0.0
    %778 = vmatprep.subr.mxu0 0.0
    %779 = vmatpush1.xpose.msra.mxu0 0.0
    %780 = vmatprep.subr.mxu0 0.0
    %781 = vmatpush1.xpose.msra.mxu0 0.0
    %782 = vmatprep.subr.mxu0 0.0
    %783 = vmatpush1.xpose.msra.mxu0 0.0
    %784 = vmatprep.subr.mxu0 0.0
    %785 = vmatpush1.xpose.msra.mxu0 0.0
    %786 = vmatprep.subr.mxu0 0.0
    %787 = vmatpush1.xpose.msra.mxu0 0.0
    %788 = vmatprep.subr.mxu0 0.0
    %789 = vmatpush1.xpose.msra.mxu0 0.0
    %790 = vmatprep.subr.mxu0 0.0
    %791 = vmatpush1.xpose.msra.mxu0 0.0
    %792 = vmatprep.subr.mxu0 0.0
    %793 = vmatpush1.xpose.msra.mxu0 0.0
    %794 = vmatprep.subr.mxu0 0.0
    %795 = vmatpush1.xpose.msra.mxu0 0.0
    %796 = vmatprep.subr.mxu0 0.0
    %797 = vmatpush1.xpose.msra.mxu0 0.0
    %798 = vmatprep.subr.mxu0 0.0
    %799 = vmatpush1.xpose.msra.mxu0 0.0
    %800 = vmatprep.subr.mxu0 0.0
    %801 = vmatpush1.xpose.msra.mxu0 0.0
    %802 = vmatprep.subr.mxu0 0.0
    %803 = vmatpush1.xpose.msra.mxu0 0.0
    %804 = vmatprep.subr.mxu0 0.0
    %805 = vmatpush1.xpose.msra.mxu0 0.0
    %806 = vmatprep.subr.mxu0 0.0
    %807 = vmatpush1.xpose.msra.mxu0 0.0
    %808 = vmatprep.subr.mxu0 0.0
    %809 = vmatpush1.xpose.msra.mxu0 0.0
    %810 = vmatprep.subr.mxu0 0.0
    %811 = vmatpush1.xpose.msra.mxu0 0.0
    %812 = vmatprep.subr.mxu0 0.0
    %813 = vmatpush1.xpose.msra.mxu0 0.0
    %814 = vmatprep.subr.mxu0 0.0
    %815 = vmatpush1.xpose.msra.mxu0 0.0
    %816 = vmatprep.subr.mxu0 0.0
    %817 = vmatpush1.xpose.msra.mxu0 0.0
    %818 = vmatprep.subr.mxu0 0.0
    %819 = vmatpush1.xpose.msra.mxu0 0.0
    %820 = vmatprep.subr.mxu0 0.0
    %821 = vmatpush1.xpose.msra.mxu0 0.0
    %822 = vmatprep.subr.mxu0 0.0
    %823 = vmatpush1.xpose.msra.mxu0 0.0
    %824 = vmatprep.subr.mxu0 0.0
    %825 = vmatpush1.xpose.msra.mxu0 0.0
    %826 = vmatprep.mubr.f32.mxu0 0.0
    %827 = vmatmul.mubr.f32.gmra.mrb[0].mxu0 %v758
    %v828 = vpop.f32.mrb[0].mxu0
    %v829 = vadd.f32 0.0, %v828
    %v830 = vpop.f32.mrb[0].mxu0
    %831 = vdwg.mxu0
    %v832 = vrot.slane %v293, 7
    %v833 = vsel %vm525, %v832, %v292
    %v834 = vrot.slane %v294, 6
    %v835 = vsel %vm528, %v834, %v833
    %v836 = vrot.slane %v295, 5
    %v837 = vsel %vm531, %v836, %v835
    %v838 = vrot.slane %v296, 4
    %v839 = vsel %vm534, %v838, %v837
    %v840 = vrot.slane %v297, 3
    %v841 = vsel %vm536, %v840, %v839
    %v842 = vrot.slane %v298, 2
    %v843 = vsel %vm538, %v842, %v841
    %v844 = vrot.slane %v299, 1
    %v845 = vsel %vm540, %v844, %v843
    %v846 = vrot.slane %v405, 7
    %v847 = vsel %vm525, %v846, %v404
    %v848 = vrot.slane %v406, 6
    %v849 = vsel %vm528, %v848, %v847
    %v850 = vrot.slane %v407, 5
    %v851 = vsel %vm531, %v850, %v849
    %v852 = vrot.slane %v408, 4
    %v853 = vsel %vm534, %v852, %v851
    %v854 = vrot.slane %v409, 3
    %v855 = vsel %vm536, %v854, %v853
    %v856 = vrot.slane %v410, 2
    %v857 = vsel %vm538, %v856, %v855
    %v858 = vrot.slane %v411, 1
    %v859 = vsel %vm540, %v858, %v857
    %v860 = vsel %vm553, %v845, 0
    %v862 = vsel %vm553, %v859, 0
    %864 = vmatprep.subr.mxu0 0.0
    %865 = vmatpush1.xpose.msra.mxu0 %v862
    %866 = vmatprep.subr.mxu0 0.0
    %867 = vmatpush1.xpose.msra.mxu0 0.0
    %868 = vmatprep.subr.mxu0 0.0
    %869 = vmatpush1.xpose.msra.mxu0 0.0
    %870 = vmatprep.subr.mxu0 0.0
    %871 = vmatpush1.xpose.msra.mxu0 0.0
    %872 = vmatprep.subr.mxu0 0.0
    %873 = vmatpush1.xpose.msra.mxu0 0.0
    %874 = vmatprep.subr.mxu0 0.0
    %875 = vmatpush1.xpose.msra.mxu0 0.0
    %876 = vmatprep.subr.mxu0 0.0
    %877 = vmatpush1.xpose.msra.mxu0 0.0
    %878 = vmatprep.subr.mxu0 0.0
    %879 = vmatpush1.xpose.msra.mxu0 0.0
    %880 = vmatprep.subr.mxu0 0.0
    %881 = vmatpush1.xpose.msra.mxu0 0.0
    %882 = vmatprep.subr.mxu0 0.0
    %883 = vmatpush1.xpose.msra.mxu0 0.0
    %884 = vmatprep.subr.mxu0 0.0
    %885 = vmatpush1.xpose.msra.mxu0 0.0
    %886 = vmatprep.subr.mxu0 0.0
    %887 = vmatpush1.xpose.msra.mxu0 0.0
    %888 = vmatprep.subr.mxu0 0.0
    %889 = vmatpush1.xpose.msra.mxu0 0.0
    %890 = vmatprep.subr.mxu0 0.0
    %891 = vmatpush1.xpose.msra.mxu0 0.0
    %892 = vmatprep.subr.mxu0 0.0
    %893 = vmatpush1.xpose.msra.mxu0 0.0
    %894 = vmatprep.subr.mxu0 0.0
    %895 = vmatpush1.xpose.msra.mxu0 0.0
    %896 = vmatprep.subr.mxu0 0.0
    %897 = vmatpush1.xpose.msra.mxu0 0.0
    %898 = vmatprep.subr.mxu0 0.0
    %899 = vmatpush1.xpose.msra.mxu0 0.0
    %900 = vmatprep.subr.mxu0 0.0
    %901 = vmatpush1.xpose.msra.mxu0 0.0
    %902 = vmatprep.subr.mxu0 0.0
    %903 = vmatpush1.xpose.msra.mxu0 0.0
    %904 = vmatprep.subr.mxu0 0.0
    %905 = vmatpush1.xpose.msra.mxu0 0.0
    %906 = vmatprep.subr.mxu0 0.0
    %907 = vmatpush1.xpose.msra.mxu0 0.0
    %908 = vmatprep.subr.mxu0 0.0
    %909 = vmatpush1.xpose.msra.mxu0 0.0
    %910 = vmatprep.subr.mxu0 0.0
    %911 = vmatpush1.xpose.msra.mxu0 0.0
    %912 = vmatprep.subr.mxu0 0.0
    %913 = vmatpush1.xpose.msra.mxu0 0.0
    %914 = vmatprep.subr.mxu0 0.0
    %915 = vmatpush1.xpose.msra.mxu0 0.0
    %916 = vmatprep.subr.mxu0 0.0
    %917 = vmatpush1.xpose.msra.mxu0 0.0
    %918 = vmatprep.subr.mxu0 0.0
    %919 = vmatpush1.xpose.msra.mxu0 0.0
    %920 = vmatprep.subr.mxu0 0.0
    %921 = vmatpush1.xpose.msra.mxu0 0.0
    %922 = vmatprep.subr.mxu0 0.0
    %923 = vmatpush1.xpose.msra.mxu0 0.0
    %924 = vmatprep.subr.mxu0 0.0
    %925 = vmatpush1.xpose.msra.mxu0 0.0
    %926 = vmatprep.subr.mxu0 0.0
    %927 = vmatpush1.xpose.msra.mxu0 0.0
    %928 = vmatprep.mubr.f32.mxu0 0.0
    %929 = vmatmul.mubr.f32.gmra.mrb[0].mxu0 %v860
    %v930 = vpop.f32.mrb[0].mxu0
    %v931 = vadd.f32 0.0, %v930
    %v932 = vpop.f32.mrb[0].mxu0
    %933 = vdwg.mxu0
    %v934 = vmul.f32 %v625, 0.35355338
    %v935 = vmul.f32 %v727, 0.35355338
    %v936 = vmul.f32 %v829, 0.35355338
    %v937 = vmul.f32 %v931, 0.35355338
    %v938 = vld [vmem:[#allocation4 + $0x10] sm:$0x1]
    %v939 = vlaneseq
    %v940 = vshrl.u32 %v939, 7
    %v941 = vsub.s32 0, %v940
    %v942 = vrot.slane %v938, %v941
    %v943 = vadd.f32 %v934, %v942
    %v944 = vadd.f32 %v935, %v942
    %v945 = vadd.f32 %v936, %v942
    %v946 = vadd.f32 %v937, %v942
    %v947 = vsel %vm553, %v943, -inf
    %948 = vmax.xlane.f32.xlu0 %v947
    %v949 = vpop.xlane.xlu0 %948
    %v950 = vsel %vm553, %v944, -inf
    %951 = vmax.xlane.f32.xlu0 %v950
    %v952 = vpop.xlane.xlu0 %951
    %v953 = vsel %vm553, %v945, -inf
    %954 = vmax.xlane.f32.xlu0 %v953
    %v955 = vpop.xlane.xlu0 %954
    %v956 = vsel %vm553, %v946, -inf
    %957 = vmax.xlane.f32.xlu0 %v956
    %v958 = vpop.xlane.xlu0 %957
    %v959 = vsub.f32 %v943, %v949
    %v960 = vsub.f32 %v944, %v952
    %v961 = vsub.f32 %v945, %v955
    %v962 = vsub.f32 %v946, %v958
    %v963 = vmul.f32 %v959, 1.442695
    %v964 = vpow.pop %v963
    %v965 = vmul.f32 %v960, 1.442695
    %v966 = vpow.pop %v965
    %v967 = vmul.f32 %v961, 1.442695
    %v968 = vpow.pop %v967
    %v969 = vmul.f32 %v962, 1.442695
    %v970 = vpow.pop %v969
    %v971 = vsel %vm553, %v964, 0.0
    %972 = vadd.xlane.f32.xlu0 %v971
    %v973 = vpop.xlane.xlu0 %972
    %v974 = vsel %vm553, %v966, 0.0
    %975 = vadd.xlane.f32.xlu0 %v974
    %v976 = vpop.xlane.xlu0 %975
    %v977 = vsel %vm553, %v968, 0.0
    %978 = vadd.xlane.f32.xlu0 %v977
    %v979 = vpop.xlane.xlu0 %978
    %v980 = vsel %vm553, %v970, 0.0
    %981 = vadd.xlane.f32.xlu0 %v980
    %v982 = vpop.xlane.xlu0 %981
    %v983 = vrcp.pop %v973
    %v984 = vrcp.pop %v976
    %v985 = vrcp.pop %v979
    %v986 = vrcp.pop %v982
    %v987 = vmul.f32 %v964, %v983
    %v988 = vmul.f32 %v966, %v984
    %v989 = vmul.f32 %v968, %v985
    %v990 = vmul.f32 %v970, %v986
    %v991 = vrot.slane %v488, 7
    %v992 = vsel %vm525, %v991, %v464
    %v993 = vrot.slane %v471, 6
    %v994 = vsel %vm528, %v993, %v992
    %v995 = vrot.slane %v489, 5
    %v996 = vsel %vm531, %v995, %v994
    %v997 = vrot.slane %v480, 4
    %v998 = vsel %vm534, %v997, %v996
    %v999 = vsel %vm536, %v521, %v998
    %v1000 = vsel %vm538, %v514, %v999
    %v1001 = vsel %vm540, %v507, %v1000
    %v1004 = vsel %vm553, %v987, 0
    %1006 = vmatprep.subr.mxu0 0.0
    %1007 = vmatpush1.msra.mxu0 %v1001
    %1008 = vmatprep.subr.mxu0 0.0
    %1009 = vmatpush1.msra.mxu0 0.0
    %1010 = vmatprep.subr.mxu0 0.0
    %1011 = vmatpush1.msra.mxu0 0.0
    %1012 = vmatprep.subr.mxu0 0.0
    %1013 = vmatpush1.msra.mxu0 0.0
    %1014 = vmatprep.subr.mxu0 0.0
    %1015 = vmatpush1.msra.mxu0 0.0
    %1016 = vmatprep.subr.mxu0 0.0
    %1017 = vmatpush1.msra.mxu0 0.0
    %1018 = vmatprep.subr.mxu0 0.0
    %1019 = vmatpush1.msra.mxu0 0.0
    %1020 = vmatprep.subr.mxu0 0.0
    %1021 = vmatpush1.msra.mxu0 0.0
    %1022 = vmatprep.subr.mxu0 0.0
    %1023 = vmatpush1.msra.mxu0 0.0
    %1024 = vmatprep.subr.mxu0 0.0
    %1025 = vmatpush1.msra.mxu0 0.0
    %1026 = vmatprep.subr.mxu0 0.0
    %1027 = vmatpush1.msra.mxu0 0.0
    %1028 = vmatprep.subr.mxu0 0.0
    %1029 = vmatpush1.msra.mxu0 0.0
    %1030 = vmatprep.subr.mxu0 0.0
    %1031 = vmatpush1.msra.mxu0 0.0
    %1032 = vmatprep.subr.mxu0 0.0
    %1033 = vmatpush1.msra.mxu0 0.0
    %1034 = vmatprep.subr.mxu0 0.0
    %1035 = vmatpush1.msra.mxu0 0.0
    %1036 = vmatprep.subr.mxu0 0.0
    %1037 = vmatpush1.msra.mxu0 0.0
    %1038 = vmatprep.subr.mxu0 0.0
    %1039 = vmatpush1.msra.mxu0 0.0
    %1040 = vmatprep.subr.mxu0 0.0
    %1041 = vmatpush1.msra.mxu0 0.0
    %1042 = vmatprep.subr.mxu0 0.0
    %1043 = vmatpush1.msra.mxu0 0.0
    %1044 = vmatprep.subr.mxu0 0.0
    %1045 = vmatpush1.msra.mxu0 0.0
    %1046 = vmatprep.subr.mxu0 0.0
    %1047 = vmatpush1.msra.mxu0 0.0
    %1048 = vmatprep.subr.mxu0 0.0
    %1049 = vmatpush1.msra.mxu0 0.0
    %1050 = vmatprep.subr.mxu0 0.0
    %1051 = vmatpush1.msra.mxu0 0.0
    %1052 = vmatprep.subr.mxu0 0.0
    %1053 = vmatpush1.msra.mxu0 0.0
    %1054 = vmatprep.subr.mxu0 0.0
    %1055 = vmatpush1.msra.mxu0 0.0
    %1056 = vmatprep.subr.mxu0 0.0
    %1057 = vmatpush1.msra.mxu0 0.0
    %1058 = vmatprep.subr.mxu0 0.0
    %1059 = vmatpush1.msra.mxu0 0.0
    %1060 = vmatprep.subr.mxu0 0.0
    %1061 = vmatpush1.msra.mxu0 0.0
    %1062 = vmatprep.subr.mxu0 0.0
    %1063 = vmatpush1.msra.mxu0 0.0
    %1064 = vmatprep.subr.mxu0 0.0
    %1065 = vmatpush1.msra.mxu0 0.0
    %1066 = vmatprep.subr.mxu0 0.0
    %1067 = vmatpush1.msra.mxu0 0.0
    %1068 = vmatprep.subr.mxu0 0.0
    %1069 = vmatpush1.msra.mxu0 0.0
    %1070 = vmatprep.mubr.f32.mxu0 0.0
    %1071 = vmatmul.mubr.f32.gmra.mrb[0].mxu0 %v1004
    %v1072 = vpop.f32.mrb[0].mxu0
    %v1073 = vadd.f32 0.0, %v1072
    %v1074 = vpop.f32.mrb[0].mxu0
    %1075 = vdwg.mxu0
    %v1076 = vrot.slane %v501, 7
    %v1077 = vsel %vm525, %v1076, %v500
    %v1078 = vrot.slane %v502, 6
    %v1079 = vsel %vm528, %v1078, %v1077
    %v1080 = vrot.slane %v503, 5
    %v1081 = vsel %vm531, %v1080, %v1079
    %v1082 = vrot.slane %v504, 4
    %v1083 = vsel %vm534, %v1082, %v1081
    %v1084 = vrot.slane %v505, 3
    %v1085 = vsel %vm536, %v1084, %v1083
    %v1086 = vrot.slane %v506, 2
    %v1087 = vsel %vm538, %v1086, %v1085
    %v1088 = vrot.slane %v507, 1
    %v1089 = vsel %vm540, %v1088, %v1087
    %v1092 = vsel %vm553, %v988, 0
    %1094 = vmatprep.subr.mxu0 0.0
    %1095 = vmatpush1.msra.mxu0 %v1089
    %1096 = vmatprep.subr.mxu0 0.0
    %1097 = vmatpush1.msra.mxu0 0.0
    %1098 = vmatprep.subr.mxu0 0.0
    %1099 = vmatpush1.msra.mxu0 0.0
    %1100 = vmatprep.subr.mxu0 0.0
    %1101 = vmatpush1.msra.mxu0 0.0
    %1102 = vmatprep.subr.mxu0 0.0
    %1103 = vmatpush1.msra.mxu0 0.0
    %1104 = vmatprep.subr.mxu0 0.0
    %1105 = vmatpush1.msra.mxu0 0.0
    %1106 = vmatprep.subr.mxu0 0.0
    %1107 = vmatpush1.msra.mxu0 0.0
    %1108 = vmatprep.subr.mxu0 0.0
    %1109 = vmatpush1.msra.mxu0 0.0
    %1110 = vmatprep.subr.mxu0 0.0
    %1111 = vmatpush1.msra.mxu0 0.0
    %1112 = vmatprep.subr.mxu0 0.0
    %1113 = vmatpush1.msra.mxu0 0.0
    %1114 = vmatprep.subr.mxu0 0.0
    %1115 = vmatpush1.msra.mxu0 0.0
    %1116 = vmatprep.subr.mxu0 0.0
    %1117 = vmatpush1.msra.mxu0 0.0
    %1118 = vmatprep.subr.mxu0 0.0
    %1119 = vmatpush1.msra.mxu0 0.0
    %1120 = vmatprep.subr.mxu0 0.0
    %1121 = vmatpush1.msra.mxu0 0.0
    %1122 = vmatprep.subr.mxu0 0.0
    %1123 = vmatpush1.msra.mxu0 0.0
    %1124 = vmatprep.subr.mxu0 0.0
    %1125 = vmatpush1.msra.mxu0 0.0
    %1126 = vmatprep.subr.mxu0 0.0
    %1127 = vmatpush1.msra.mxu0 0.0
    %1128 = vmatprep.subr.mxu0 0.0
    %1129 = vmatpush1.msra.mxu0 0.0
    %1130 = vmatprep.subr.mxu0 0.0
    %1131 = vmatpush1.msra.mxu0 0.0
    %1132 = vmatprep.subr.mxu0 0.0
    %1133 = vmatpush1.msra.mxu0 0.0
    %1134 = vmatprep.subr.mxu0 0.0
    %1135 = vmatpush1.msra.mxu0 0.0
    %1136 = vmatprep.subr.mxu0 0.0
    %1137 = vmatpush1.msra.mxu0 0.0
    %1138 = vmatprep.subr.mxu0 0.0
    %1139 = vmatpush1.msra.mxu0 0.0
    %1140 = vmatprep.subr.mxu0 0.0
    %1141 = vmatpush1.msra.mxu0 0.0
    %1142 = vmatprep.subr.mxu0 0.0
    %1143 = vmatpush1.msra.mxu0 0.0
    %1144 = vmatprep.subr.mxu0 0.0
    %1145 = vmatpush1.msra.mxu0 0.0
    %1146 = vmatprep.subr.mxu0 0.0
    %1147 = vmatpush1.msra.mxu0 0.0
    %1148 = vmatprep.subr.mxu0 0.0
    %1149 = vmatpush1.msra.mxu0 0.0
    %1150 = vmatprep.subr.mxu0 0.0
    %1151 = vmatpush1.msra.mxu0 0.0
    %1152 = vmatprep.subr.mxu0 0.0
    %1153 = vmatpush1.msra.mxu0 0.0
    %1154 = vmatprep.subr.mxu0 0.0
    %1155 = vmatpush1.msra.mxu0 0.0
    %1156 = vmatprep.subr.mxu0 0.0
    %1157 = vmatpush1.msra.mxu0 0.0
    %1158 = vmatprep.mubr.f32.mxu0 0.0
    %1159 = vmatmul.mubr.f32.gmra.mrb[0].mxu0 %v1092
    %v1160 = vpop.f32.mrb[0].mxu0
    %v1161 = vadd.f32 0.0, %v1160
    %v1162 = vpop.f32.mrb[0].mxu0
    %1163 = vdwg.mxu0
    %v1164 = vrot.slane %v509, 7
    %v1165 = vsel %vm525, %v1164, %v508
    %v1166 = vrot.slane %v510, 6
    %v1167 = vsel %vm528, %v1166, %v1165
    %v1168 = vrot.slane %v511, 5
    %v1169 = vsel %vm531, %v1168, %v1167
    %v1170 = vrot.slane %v512, 4
    %v1171 = vsel %vm534, %v1170, %v1169
    %v1172 = vrot.slane %v513, 3
    %v1173 = vsel %vm536, %v1172, %v1171
    %v1174 = vrot.slane %v514, 2
    %v1175 = vsel %vm538, %v1174, %v1173
    %v1176 = vrot.slane %v515, 1
    %v1177 = vsel %vm540, %v1176, %v1175
    %v1180 = vsel %vm553, %v989, 0
    %1182 = vmatprep.subr.mxu0 0.0
    %1183 = vmatpush1.msra.mxu0 %v1177
    %1184 = vmatprep.subr.mxu0 0.0
    %1185 = vmatpush1.msra.mxu0 0.0
    %1186 = vmatprep.subr.mxu0 0.0
    %1187 = vmatpush1.msra.mxu0 0.0
    %1188 = vmatprep.subr.mxu0 0.0
    %1189 = vmatpush1.msra.mxu0 0.0
    %1190 = vmatprep.subr.mxu0 0.0
    %1191 = vmatpush1.msra.mxu0 0.0
    %1192 = vmatprep.subr.mxu0 0.0
    %1193 = vmatpush1.msra.mxu0 0.0
    %1194 = vmatprep.subr.mxu0 0.0
    %1195 = vmatpush1.msra.mxu0 0.0
    %1196 = vmatprep.subr.mxu0 0.0
    %1197 = vmatpush1.msra.mxu0 0.0
    %1198 = vmatprep.subr.mxu0 0.0
    %1199 = vmatpush1.msra.mxu0 0.0
    %1200 = vmatprep.subr.mxu0 0.0
    %1201 = vmatpush1.msra.mxu0 0.0
    %1202 = vmatprep.subr.mxu0 0.0
    %1203 = vmatpush1.msra.mxu0 0.0
    %1204 = vmatprep.subr.mxu0 0.0
    %1205 = vmatpush1.msra.mxu0 0.0
    %1206 = vmatprep.subr.mxu0 0.0
    %1207 = vmatpush1.msra.mxu0 0.0
    %1208 = vmatprep.subr.mxu0 0.0
    %1209 = vmatpush1.msra.mxu0 0.0
    %1210 = vmatprep.subr.mxu0 0.0
    %1211 = vmatpush1.msra.mxu0 0.0
    %1212 = vmatprep.subr.mxu0 0.0
    %1213 = vmatpush1.msra.mxu0 0.0
    %1214 = vmatprep.subr.mxu0 0.0
    %1215 = vmatpush1.msra.mxu0 0.0
    %1216 = vmatprep.subr.mxu0 0.0
    %1217 = vmatpush1.msra.mxu0 0.0
    %1218 = vmatprep.subr.mxu0 0.0
    %1219 = vmatpush1.msra.mxu0 0.0
    %1220 = vmatprep.subr.mxu0 0.0
    %1221 = vmatpush1.msra.mxu0 0.0
    %1222 = vmatprep.subr.mxu0 0.0
    %1223 = vmatpush1.msra.mxu0 0.0
    %1224 = vmatprep.subr.mxu0 0.0
    %1225 = vmatpush1.msra.mxu0 0.0
    %1226 = vmatprep.subr.mxu0 0.0
    %1227 = vmatpush1.msra.mxu0 0.0
    %1228 = vmatprep.subr.mxu0 0.0
    %1229 = vmatpush1.msra.mxu0 0.0
    %1230 = vmatprep.subr.mxu0 0.0
    %1231 = vmatpush1.msra.mxu0 0.0
    %1232 = vmatprep.subr.mxu0 0.0
    %1233 = vmatpush1.msra.mxu0 0.0
    %1234 = vmatprep.subr.mxu0 0.0
    %1235 = vmatpush1.msra.mxu0 0.0
    %1236 = vmatprep.subr.mxu0 0.0
    %1237 = vmatpush1.msra.mxu0 0.0
    %1238 = vmatprep.subr.mxu0 0.0
    %1239 = vmatpush1.msra.mxu0 0.0
    %1240 = vmatprep.subr.mxu0 0.0
    %1241 = vmatpush1.msra.mxu0 0.0
    %1242 = vmatprep.subr.mxu0 0.0
    %1243 = vmatpush1.msra.mxu0 0.0
    %1244 = vmatprep.subr.mxu0 0.0
    %1245 = vmatpush1.msra.mxu0 0.0
    %1246 = vmatprep.mubr.f32.mxu0 0.0
    %1247 = vmatmul.mubr.f32.gmra.mrb[0].mxu0 %v1180
    %v1248 = vpop.f32.mrb[0].mxu0
    %v1249 = vadd.f32 0.0, %v1248
    %v1250 = vpop.f32.mrb[0].mxu0
    %1251 = vdwg.mxu0
    %v1252 = vrot.slane %v517, 7
    %v1253 = vsel %vm525, %v1252, %v516
    %v1254 = vrot.slane %v518, 6
    %v1255 = vsel %vm528, %v1254, %v1253
    %v1256 = vrot.slane %v519, 5
    %v1257 = vsel %vm531, %v1256, %v1255
    %v1258 = vrot.slane %v520, 4
    %v1259 = vsel %vm534, %v1258, %v1257
    %v1260 = vrot.slane %v521, 3
    %v1261 = vsel %vm536, %v1260, %v1259
    %v1262 = vrot.slane %v522, 2
    %v1263 = vsel %vm538, %v1262, %v1261
    %v1264 = vrot.slane %v523, 1
    %v1265 = vsel %vm540, %v1264, %v1263
    %v1268 = vsel %vm553, %v990, 0
    %1270 = vmatprep.subr.mxu0 0.0
    %1271 = vmatpush1.msra.mxu0 %v1265
    %1272 = vmatprep.subr.mxu0 0.0
    %1273 = vmatpush1.msra.mxu0 0.0
    %1274 = vmatprep.subr.mxu0 0.0
    %1275 = vmatpush1.msra.mxu0 0.0
    %1276 = vmatprep.subr.mxu0 0.0
    %1277 = vmatpush1.msra.mxu0 0.0
    %1278 = vmatprep.subr.mxu0 0.0
    %1279 = vmatpush1.msra.mxu0 0.0
    %1280 = vmatprep.subr.mxu0 0.0
    %1281 = vmatpush1.msra.mxu0 0.0
    %1282 = vmatprep.subr.mxu0 0.0
    %1283 = vmatpush1.msra.mxu0 0.0
    %1284 = vmatprep.subr.mxu0 0.0
    %1285 = vmatpush1.msra.mxu0 0.0
    %1286 = vmatprep.subr.mxu0 0.0
    %1287 = vmatpush1.msra.mxu0 0.0
    %1288 = vmatprep.subr.mxu0 0.0
    %1289 = vmatpush1.msra.mxu0 0.0
    %1290 = vmatprep.subr.mxu0 0.0
    %1291 = vmatpush1.msra.mxu0 0.0
    %1292 = vmatprep.subr.mxu0 0.0
    %1293 = vmatpush1.msra.mxu0 0.0
    %1294 = vmatprep.subr.mxu0 0.0
    %1295 = vmatpush1.msra.mxu0 0.0
    %1296 = vmatprep.subr.mxu0 0.0
    %1297 = vmatpush1.msra.mxu0 0.0
    %1298 = vmatprep.subr.mxu0 0.0
    %1299 = vmatpush1.msra.mxu0 0.0
    %1300 = vmatprep.subr.mxu0 0.0
    %1301 = vmatpush1.msra.mxu0 0.0
    %1302 = vmatprep.subr.mxu0 0.0
    %1303 = vmatpush1.msra.mxu0 0.0
    %1304 = vmatprep.subr.mxu0 0.0
    %1305 = vmatpush1.msra.mxu0 0.0
    %1306 = vmatprep.subr.mxu0 0.0
    %1307 = vmatpush1.msra.mxu0 0.0
    %1308 = vmatprep.subr.mxu0 0.0
    %1309 = vmatpush1.msra.mxu0 0.0
    %1310 = vmatprep.subr.mxu0 0.0
    %1311 = vmatpush1.msra.mxu0 0.0
    %1312 = vmatprep.subr.mxu0 0.0
    %1313 = vmatpush1.msra.mxu0 0.0
    %1314 = vmatprep.subr.mxu0 0.0
    %1315 = vmatpush1.msra.mxu0 0.0
    %1316 = vmatprep.subr.mxu0 0.0
    %1317 = vmatpush1.msra.mxu0 0.0
    %1318 = vmatprep.subr.mxu0 0.0
    %1319 = vmatpush1.msra.mxu0 0.0
    %1320 = vmatprep.subr.mxu0 0.0
    %1321 = vmatpush1.msra.mxu0 0.0
    %1322 = vmatprep.subr.mxu0 0.0
    %1323 = vmatpush1.msra.mxu0 0.0
    %1324 = vmatprep.subr.mxu0 0.0
    %1325 = vmatpush1.msra.mxu0 0.0
    %1326 = vmatprep.subr.mxu0 0.0
    %1327 = vmatpush1.msra.mxu0 0.0
    %1328 = vmatprep.subr.mxu0 0.0
    %1329 = vmatpush1.msra.mxu0 0.0
    %1330 = vmatprep.subr.mxu0 0.0
    %1331 = vmatpush1.msra.mxu0 0.0
    %1332 = vmatprep.subr.mxu0 0.0
    %1333 = vmatpush1.msra.mxu0 0.0
    %1334 = vmatprep.mubr.f32.mxu0 0.0
    %1335 = vmatmul.mubr.f32.gmra.mrb[0].mxu0 %v1268
    %v1336 = vpop.f32.mrb[0].mxu0
    %v1337 = vadd.f32 0.0, %v1336
    %v1338 = vpop.f32.mrb[0].mxu0
    %1339 = vdwg.mxu0
    %1341 = vrot.lane.b32.xlu0 %v1161, 8
    %v1342 = vpop.permute.xlu0 %1341
    %1345 = vrot.lane.b32.xlu0 %v1249, 16
    %v1346 = vpop.permute.xlu0 %1345
    %1349 = vrot.lane.b32.xlu0 %v1337, 24
    %v1350 = vpop.permute.xlu0 %1349
    %v1352 = vsel %vm553, %v1073, %v1342
    %vm1353 = vcmask 130048
    %v1354 = vsel %vm1353, %v1352, %v1346
    %vm1355 = vcmask 195584
    %v1356 = vsel %vm1355, %v1354, %v1350
    %1358 = vrot.lane.b32.xlu0 %v187, 120
    %v1359 = vpop.permute.xlu0 %1358
    %1361 = vrot.lane.b32.xlu0 %v187, 112
    %v1362 = vpop.permute.xlu0 %1361
    %1364 = vrot.lane.b32.xlu0 %v187, 104
    %v1365 = vpop.permute.xlu0 %1364
    %v1367 = vcombine.low %v187, %v1362
    %v1368 = vcombine.high %v187, %v1362
    %v1370 = vunpack.c.l.s4 1983009808
    %v1371 = vunpack.c.0.s8 %v1370
    %v1372 = vlaneseq
    %v1373 = vshrl.u32 %v1372, 7
    %v1374 = vsub.s32 %v1371, %v1373
    %v1375 = vrot.slane %v1367, %v1374
    %v1377 = vunpack.c.l.s4 1983009808
    %v1378 = vunpack.c.0.s8 %v1377
    %v1379 = vlaneseq
    %v1380 = vshrl.u32 %v1379, 7
    %v1381 = vsub.s32 %v1378, %v1380
    %v1382 = vrot.slane %v1368, %v1381
    %v1383 = vcombine.low %v1359, %v1365
    %v1384 = vcombine.high %v1359, %v1365
    %v1386 = vunpack.c.l.s4 1983009808
    %v1387 = vunpack.c.0.s8 %v1386
    %v1388 = vlaneseq
    %v1389 = vshrl.u32 %v1388, 7
    %v1390 = vsub.s32 %v1387, %v1389
    %v1391 = vrot.slane %v1383, %v1390
    %v1393 = vunpack.c.l.s4 1983009808
    %v1394 = vunpack.c.0.s8 %v1393
    %v1395 = vlaneseq
    %v1396 = vshrl.u32 %v1395, 7
    %v1397 = vsub.s32 %v1394, %v1396
    %v1398 = vrot.slane %v1384, %v1397
    %v1399 = vcombine.low %v1375, %v1391
    %v1400 = vcombine.high %v1375, %v1391
    %v1402 = vunpack.c.l.s4 1934713408
    %v1403 = vunpack.c.0.s8 %v1402
    %v1404 = vlaneseq
    %v1405 = vshrl.u32 %v1404, 7
    %v1406 = vsub.s32 %v1403, %v1405
    %v1407 = vrot.slane %v1399, %v1406
    %v1409 = vunpack.c.l.s4 1934713408
    %v1410 = vunpack.c.0.s8 %v1409
    %v1411 = vlaneseq
    %v1412 = vshrl.u32 %v1411, 7
    %v1413 = vsub.s32 %v1410, %v1412
    %v1414 = vrot.slane %v1400, %v1413
    %v1415 = vcombine.low %v1382, %v1398
    %v1416 = vcombine.high %v1382, %v1398
    %v1418 = vunpack.c.l.s4 1934713408
    %v1419 = vunpack.c.0.s8 %v1418
    %v1420 = vlaneseq
    %v1421 = vshrl.u32 %v1420, 7
    %v1422 = vsub.s32 %v1419, %v1421
    %v1423 = vrot.slane %v1415, %v1422
    %v1425 = vunpack.c.l.s4 1934713408
    %v1426 = vunpack.c.0.s8 %v1425
    %v1427 = vlaneseq
    %v1428 = vshrl.u32 %v1427, 7
    %v1429 = vsub.s32 %v1426, %v1428
    %v1430 = vrot.slane %v1416, %v1429
    %v1431 = vcombine.high %v1407, 0.0
    %v1432 = vcombine.high %v1414, 0.0
    %v1433 = vcombine.high %v1423, 0.0
    %v1434 = vcombine.high %v1430, 0.0
    %v1443 = vrot.slane %v1407, 1
    %v1444 = vrot.slane %v1431, 1
    %v1445 = vrot.slane %v1414, 1
    %v1446 = vrot.slane %v1432, 1
    %v1447 = vrot.slane %v1423, 1
    %v1448 = vrot.slane %v1433, 1
    %v1449 = vrot.slane %v1430, 1
    %v1450 = vrot.slane %v1434, 1
    %v1451 = vrot.slane %v1407, 2
    %v1452 = vrot.slane %v1431, 2
    %v1453 = vrot.slane %v1414, 2
    %v1454 = vrot.slane %v1432, 2
    %v1455 = vrot.slane %v1423, 2
    %v1456 = vrot.slane %v1433, 2
    %v1457 = vrot.slane %v1430, 2
    %v1458 = vrot.slane %v1434, 2
    %v1459 = vrot.slane %v1407, 3
    %v1460 = vrot.slane %v1431, 3
    %v1461 = vrot.slane %v1414, 3
    %v1462 = vrot.slane %v1432, 3
    %v1463 = vrot.slane %v1423, 3
    %v1464 = vrot.slane %v1433, 3
    %v1465 = vrot.slane %v1430, 3
    %v1466 = vrot.slane %v1434, 3
    %1467 = vrot.lane.b32.xlu0 %v187, 96
    %v1468 = vpop.permute.xlu0 %1467
    %1469 = vrot.lane.b32.xlu0 %v1359, 96
    %v1470 = vpop.permute.xlu0 %1469
    %1471 = vrot.lane.b32.xlu0 %v1362, 96
    %v1472 = vpop.permute.xlu0 %1471
    %1473 = vrot.lane.b32.xlu0 %v1365, 96
    %v1474 = vpop.permute.xlu0 %1473
    %v1479 = vcombine.low %v1468, %v1472
    %v1480 = vcombine.high %v1468, %v1472
    %v1482 = vunpack.c.l.s4 1983009808
    %v1483 = vunpack.c.0.s8 %v1482
    %v1484 = vlaneseq
    %v1485 = vshrl.u32 %v1484, 7
    %v1486 = vsub.s32 %v1483, %v1485
    %v1487 = vrot.slane %v1479, %v1486
    %v1489 = vunpack.c.l.s4 1983009808
    %v1490 = vunpack.c.0.s8 %v1489
    %v1491 = vlaneseq
    %v1492 = vshrl.u32 %v1491, 7
    %v1493 = vsub.s32 %v1490, %v1492
    %v1494 = vrot.slane %v1480, %v1493
    %v1495 = vcombine.low %v1470, %v1474
    %v1496 = vcombine.high %v1470, %v1474
    %v1498 = vunpack.c.l.s4 1983009808
    %v1499 = vunpack.c.0.s8 %v1498
    %v1500 = vlaneseq
    %v1501 = vshrl.u32 %v1500, 7
    %v1502 = vsub.s32 %v1499, %v1501
    %v1503 = vrot.slane %v1495, %v1502
    %v1505 = vunpack.c.l.s4 1983009808
    %v1506 = vunpack.c.0.s8 %v1505
    %v1507 = vlaneseq
    %v1508 = vshrl.u32 %v1507, 7
    %v1509 = vsub.s32 %v1506, %v1508
    %v1510 = vrot.slane %v1496, %v1509
    %v1511 = vcombine.low %v1487, %v1503
    %v1512 = vcombine.high %v1487, %v1503
    %v1514 = vunpack.c.l.s4 1934713408
    %v1515 = vunpack.c.0.s8 %v1514
    %v1516 = vlaneseq
    %v1517 = vshrl.u32 %v1516, 7
    %v1518 = vsub.s32 %v1515, %v1517
    %v1519 = vrot.slane %v1511, %v1518
    %v1521 = vunpack.c.l.s4 1934713408
    %v1522 = vunpack.c.0.s8 %v1521
    %v1523 = vlaneseq
    %v1524 = vshrl.u32 %v1523, 7
    %v1525 = vsub.s32 %v1522, %v1524
    %v1526 = vrot.slane %v1512, %v1525
    %v1527 = vcombine.low %v1494, %v1510
    %v1528 = vcombine.high %v1494, %v1510
    %v1530 = vunpack.c.l.s4 1934713408
    %v1531 = vunpack.c.0.s8 %v1530
    %v1532 = vlaneseq
    %v1533 = vshrl.u32 %v1532, 7
    %v1534 = vsub.s32 %v1531, %v1533
    %v1535 = vrot.slane %v1527, %v1534
    %v1537 = vunpack.c.l.s4 1934713408
    %v1538 = vunpack.c.0.s8 %v1537
    %v1539 = vlaneseq
    %v1540 = vshrl.u32 %v1539, 7
    %v1541 = vsub.s32 %v1538, %v1540
    %v1542 = vrot.slane %v1528, %v1541
    %v1543 = vcombine.high %v1519, 0.0
    %v1544 = vcombine.high %v1526, 0.0
    %v1545 = vcombine.high %v1535, 0.0
    %v1546 = vcombine.high %v1542, 0.0
    %v1555 = vrot.slane %v1519, 1
    %v1556 = vrot.slane %v1543, 1
    %v1557 = vrot.slane %v1526, 1
    %v1558 = vrot.slane %v1544, 1
    %v1559 = vrot.slane %v1535, 1
    %v1560 = vrot.slane %v1545, 1
    %v1561 = vrot.slane %v1542, 1
    %v1562 = vrot.slane %v1546, 1
    %v1563 = vrot.slane %v1519, 2
    %v1564 = vrot.slane %v1543, 2
    %v1565 = vrot.slane %v1526, 2
    %v1566 = vrot.slane %v1544, 2
    %v1567 = vrot.slane %v1535, 2
    %v1568 = vrot.slane %v1545, 2
    %v1569 = vrot.slane %v1542, 2
    %v1570 = vrot.slane %v1546, 2
    %v1571 = vrot.slane %v1519, 3
    %v1572 = vrot.slane %v1543, 3
    %v1573 = vrot.slane %v1526, 3
    %v1574 = vrot.slane %v1544, 3
    %v1575 = vrot.slane %v1535, 3
    %v1576 = vrot.slane %v1545, 3
    %v1577 = vrot.slane %v1542, 3
    %v1578 = vrot.slane %v1546, 3
    %1579 = vrot.lane.b32.xlu0 %v187, 64
    %v1580 = vpop.permute.xlu0 %1579
    %1581 = vrot.lane.b32.xlu0 %v1359, 64
    %v1582 = vpop.permute.xlu0 %1581
    %1583 = vrot.lane.b32.xlu0 %v1362, 64
    %v1584 = vpop.permute.xlu0 %1583
    %1585 = vrot.lane.b32.xlu0 %v1365, 64
    %v1586 = vpop.permute.xlu0 %1585
    %v1591 = vcombine.low %v1580, %v1584
    %v1592 = vcombine.high %v1580, %v1584
    %v1594 = vunpack.c.l.s4 1983009808
    %v1595 = vunpack.c.0.s8 %v1594
    %v1596 = vlaneseq
    %v1597 = vshrl.u32 %v1596, 7
    %v1598 = vsub.s32 %v1595, %v1597
    %v1599 = vrot.slane %v1591, %v1598
    %v1601 = vunpack.c.l.s4 1983009808
    %v1602 = vunpack.c.0.s8 %v1601
    %v1603 = vlaneseq
    %v1604 = vshrl.u32 %v1603, 7
    %v1605 = vsub.s32 %v1602, %v1604
    %v1606 = vrot.slane %v1592, %v1605
    %v1607 = vcombine.low %v1582, %v1586
    %v1608 = vcombine.high %v1582, %v1586
    %v1610 = vunpack.c.l.s4 1983009808
    %v1611 = vunpack.c.0.s8 %v1610
    %v1612 = vlaneseq
    %v1613 = vshrl.u32 %v1612, 7
    %v1614 = vsub.s32 %v1611, %v1613
    %v1615 = vrot.slane %v1607, %v1614
    %v1617 = vunpack.c.l.s4 1983009808
    %v1618 = vunpack.c.0.s8 %v1617
    %v1619 = vlaneseq
    %v1620 = vshrl.u32 %v1619, 7
    %v1621 = vsub.s32 %v1618, %v1620
    %v1622 = vrot.slane %v1608, %v1621
    %v1623 = vcombine.low %v1599, %v1615
    %v1624 = vcombine.high %v1599, %v1615
    %v1626 = vunpack.c.l.s4 1934713408
    %v1627 = vunpack.c.0.s8 %v1626
    %v1628 = vlaneseq
    %v1629 = vshrl.u32 %v1628, 7
    %v1630 = vsub.s32 %v1627, %v1629
    %v1631 = vrot.slane %v1623, %v1630
    %v1633 = vunpack.c.l.s4 1934713408
    %v1634 = vunpack.c.0.s8 %v1633
    %v1635 = vlaneseq
    %v1636 = vshrl.u32 %v1635, 7
    %v1637 = vsub.s32 %v1634, %v1636
    %v1638 = vrot.slane %v1624, %v1637
    %v1639 = vcombine.low %v1606, %v1622
    %v1640 = vcombine.high %v1606, %v1622
    %v1642 = vunpack.c.l.s4 1934713408
    %v1643 = vunpack.c.0.s8 %v1642
    %v1644 = vlaneseq
    %v1645 = vshrl.u32 %v1644, 7
    %v1646 = vsub.s32 %v1643, %v1645
    %v1647 = vrot.slane %v1639, %v1646
    %v1649 = vunpack.c.l.s4 1934713408
    %v1650 = vunpack.c.0.s8 %v1649
    %v1651 = vlaneseq
    %v1652 = vshrl.u32 %v1651, 7
    %v1653 = vsub.s32 %v1650, %v1652
    %v1654 = vrot.slane %v1640, %v1653
    %v1655 = vcombine.high %v1631, 0.0
    %v1656 = vcombine.high %v1638, 0.0
    %v1657 = vcombine.high %v1647, 0.0
    %v1658 = vcombine.high %v1654, 0.0
    %v1667 = vrot.slane %v1631, 1
    %v1668 = vrot.slane %v1655, 1
    %v1669 = vrot.slane %v1638, 1
    %v1670 = vrot.slane %v1656, 1
    %v1671 = vrot.slane %v1647, 1
    %v1672 = vrot.slane %v1657, 1
    %v1673 = vrot.slane %v1654, 1
    %v1674 = vrot.slane %v1658, 1
    %v1675 = vrot.slane %v1631, 2
    %v1676 = vrot.slane %v1655, 2
    %v1677 = vrot.slane %v1638, 2
    %v1678 = vrot.slane %v1656, 2
    %v1679 = vrot.slane %v1647, 2
    %v1680 = vrot.slane %v1657, 2
    %v1681 = vrot.slane %v1654, 2
    %v1682 = vrot.slane %v1658, 2
    %v1683 = vrot.slane %v1631, 3
    %v1684 = vrot.slane %v1655, 3
    %v1685 = vrot.slane %v1638, 3
    %v1686 = vrot.slane %v1656, 3
    %v1687 = vrot.slane %v1647, 3
    %v1688 = vrot.slane %v1657, 3
    %v1689 = vrot.slane %v1654, 3
    %v1690 = vrot.slane %v1658, 3
    %v1691 = vrot.slane %v1431, 7
    %v1692 = vsel %vm525, %v1691, %v1407
    %v1693 = vrot.slane %v1414, 6
    %v1694 = vsel %vm528, %v1693, %v1692
    %v1695 = vrot.slane %v1432, 5
    %v1696 = vsel %vm531, %v1695, %v1694
    %v1697 = vrot.slane %v1423, 4
    %v1698 = vsel %vm534, %v1697, %v1696
    %v1699 = vsel %vm536, %v1464, %v1698
    %v1700 = vsel %vm538, %v1457, %v1699
    %v1701 = vsel %vm540, %v1450, %v1700
    %v1702 = vrot.slane %v1543, 7
    %v1703 = vsel %vm525, %v1702, %v1519
    %v1704 = vrot.slane %v1526, 6
    %v1705 = vsel %vm528, %v1704, %v1703
    %v1706 = vrot.slane %v1544, 5
    %v1707 = vsel %vm531, %v1706, %v1705
    %v1708 = vrot.slane %v1535, 4
    %v1709 = vsel %vm534, %v1708, %v1707
    %v1710 = vsel %vm536, %v1576, %v1709
    %v1711 = vsel %vm538, %v1569, %v1710
    %v1712 = vsel %vm540, %v1562, %v1711
    %v1713 = vsel %vm553, %v1701, 0
    %v1715 = vsel %vm553, %v1712, 0
    %1717 = vmatprep.subr.mxu0 0.0
    %1718 = vmatpush1.xpose.msra.mxu0 %v1715
    %1719 = vmatprep.subr.mxu0 0.0
    %1720 = vmatpush1.xpose.msra.mxu0 0.0
    %1721 = vmatprep.subr.mxu0 0.0
    %1722 = vmatpush1.xpose.msra.mxu0 0.0
    %1723 = vmatprep.subr.mxu0 0.0
    %1724 = vmatpush1.xpose.msra.mxu0 0.0
    %1725 = vmatprep.subr.mxu0 0.0
    %1726 = vmatpush1.xpose.msra.mxu0 0.0
    %1727 = vmatprep.subr.mxu0 0.0
    %1728 = vmatpush1.xpose.msra.mxu0 0.0
    %1729 = vmatprep.subr.mxu0 0.0
    %1730 = vmatpush1.xpose.msra.mxu0 0.0
    %1731 = vmatprep.subr.mxu0 0.0
    %1732 = vmatpush1.xpose.msra.mxu0 0.0
    %1733 = vmatprep.subr.mxu0 0.0
    %1734 = vmatpush1.xpose.msra.mxu0 0.0
    %1735 = vmatprep.subr.mxu0 0.0
    %1736 = vmatpush1.xpose.msra.mxu0 0.0
    %1737 = vmatprep.subr.mxu0 0.0
    %1738 = vmatpush1.xpose.msra.mxu0 0.0
    %1739 = vmatprep.subr.mxu0 0.0
    %1740 = vmatpush1.xpose.msra.mxu0 0.0
    %1741 = vmatprep.subr.mxu0 0.0
    %1742 = vmatpush1.xpose.msra.mxu0 0.0
    %1743 = vmatprep.subr.mxu0 0.0
    %1744 = vmatpush1.xpose.msra.mxu0 0.0
    %1745 = vmatprep.subr.mxu0 0.0
    %1746 = vmatpush1.xpose.msra.mxu0 0.0
    %1747 = vmatprep.subr.mxu0 0.0
    %1748 = vmatpush1.xpose.msra.mxu0 0.0
    %1749 = vmatprep.subr.mxu0 0.0
    %1750 = vmatpush1.xpose.msra.mxu0 0.0
    %1751 = vmatprep.subr.mxu0 0.0
    %1752 = vmatpush1.xpose.msra.mxu0 0.0
    %1753 = vmatprep.subr.mxu0 0.0
    %1754 = vmatpush1.xpose.msra.mxu0 0.0
    %1755 = vmatprep.subr.mxu0 0.0
    %1756 = vmatpush1.xpose.msra.mxu0 0.0
    %1757 = vmatprep.subr.mxu0 0.0
    %1758 = vmatpush1.xpose.msra.mxu0 0.0
    %1759 = vmatprep.subr.mxu0 0.0
    %1760 = vmatpush1.xpose.msra.mxu0 0.0
    %1761 = vmatprep.subr.mxu0 0.0
    %1762 = vmatpush1.xpose.msra.mxu0 0.0
    %1763 = vmatprep.subr.mxu0 0.0
    %1764 = vmatpush1.xpose.msra.mxu0 0.0
    %1765 = vmatprep.subr.mxu0 0.0
    %1766 = vmatpush1.xpose.msra.mxu0 0.0
    %1767 = vmatprep.subr.mxu0 0.0
    %1768 = vmatpush1.xpose.msra.mxu0 0.0
    %1769 = vmatprep.subr.mxu0 0.0
    %1770 = vmatpush1.xpose.msra.mxu0 0.0
    %1771 = vmatprep.subr.mxu0 0.0
    %1772 = vmatpush1.xpose.msra.mxu0 0.0
    %1773 = vmatprep.subr.mxu0 0.0
    %1774 = vmatpush1.xpose.msra.mxu0 0.0
    %1775 = vmatprep.subr.mxu0 0.0
    %1776 = vmatpush1.xpose.msra.mxu0 0.0
    %1777 = vmatprep.subr.mxu0 0.0
    %1778 = vmatpush1.xpose.msra.mxu0 0.0
    %1779 = vmatprep.subr.mxu0 0.0
    %1780 = vmatpush1.xpose.msra.mxu0 0.0
    %1781 = vmatprep.mubr.f32.mxu0 0.0
    %1782 = vmatmul.mubr.f32.gmra.mrb[0].mxu0 %v1713
    %v1783 = vpop.f32.mrb[0].mxu0
    %v1784 = vadd.f32 0.0, %v1783
    %v1785 = vpop.f32.mrb[0].mxu0
    %1786 = vdwg.mxu0
    %v1787 = vrot.slane %v1444, 7
    %v1788 = vsel %vm525, %v1787, %v1443
    %v1789 = vrot.slane %v1445, 6
    %v1790 = vsel %vm528, %v1789, %v1788
    %v1791 = vrot.slane %v1446, 5
    %v1792 = vsel %vm531, %v1791, %v1790
    %v1793 = vrot.slane %v1447, 4
    %v1794 = vsel %vm534, %v1793, %v1792
    %v1795 = vrot.slane %v1448, 3
    %v1796 = vsel %vm536, %v1795, %v1794
    %v1797 = vrot.slane %v1449, 2
    %v1798 = vsel %vm538, %v1797, %v1796
    %v1799 = vrot.slane %v1450, 1
    %v1800 = vsel %vm540, %v1799, %v1798
    %v1801 = vrot.slane %v1556, 7
    %v1802 = vsel %vm525, %v1801, %v1555
    %v1803 = vrot.slane %v1557, 6
    %v1804 = vsel %vm528, %v1803, %v1802
    %v1805 = vrot.slane %v1558, 5
    %v1806 = vsel %vm531, %v1805, %v1804
    %v1807 = vrot.slane %v1559, 4
    %v1808 = vsel %vm534, %v1807, %v1806
    %v1809 = vrot.slane %v1560, 3
    %v1810 = vsel %vm536, %v1809, %v1808
    %v1811 = vrot.slane %v1561, 2
    %v1812 = vsel %vm538, %v1811, %v1810
    %v1813 = vrot.slane %v1562, 1
    %v1814 = vsel %vm540, %v1813, %v1812
    %v1815 = vsel %vm553, %v1800, 0
    %v1817 = vsel %vm553, %v1814, 0
    %1819 = vmatprep.subr.mxu0 0.0
    %1820 = vmatpush1.xpose.msra.mxu0 %v1817
    %1821 = vmatprep.subr.mxu0 0.0
    %1822 = vmatpush1.xpose.msra.mxu0 0.0
    %1823 = vmatprep.subr.mxu0 0.0
    %1824 = vmatpush1.xpose.msra.mxu0 0.0
    %1825 = vmatprep.subr.mxu0 0.0
    %1826 = vmatpush1.xpose.msra.mxu0 0.0
    %1827 = vmatprep.subr.mxu0 0.0
    %1828 = vmatpush1.xpose.msra.mxu0 0.0
    %1829 = vmatprep.subr.mxu0 0.0
    %1830 = vmatpush1.xpose.msra.mxu0 0.0
    %1831 = vmatprep.subr.mxu0 0.0
    %1832 = vmatpush1.xpose.msra.mxu0 0.0
    %1833 = vmatprep.subr.mxu0 0.0
    %1834 = vmatpush1.xpose.msra.mxu0 0.0
    %1835 = vmatprep.subr.mxu0 0.0
    %1836 = vmatpush1.xpose.msra.mxu0 0.0
    %1837 = vmatprep.subr.mxu0 0.0
    %1838 = vmatpush1.xpose.msra.mxu0 0.0
    %1839 = vmatprep.subr.mxu0 0.0
    %1840 = vmatpush1.xpose.msra.mxu0 0.0
    %1841 = vmatprep.subr.mxu0 0.0
    %1842 = vmatpush1.xpose.msra.mxu0 0.0
    %1843 = vmatprep.subr.mxu0 0.0
    %1844 = vmatpush1.xpose.msra.mxu0 0.0
    %1845 = vmatprep.subr.mxu0 0.0
    %1846 = vmatpush1.xpose.msra.mxu0 0.0
    %1847 = vmatprep.subr.mxu0 0.0
    %1848 = vmatpush1.xpose.msra.mxu0 0.0
    %1849 = vmatprep.subr.mxu0 0.0
    %1850 = vmatpush1.xpose.msra.mxu0 0.0
    %1851 = vmatprep.subr.mxu0 0.0
    %1852 = vmatpush1.xpose.msra.mxu0 0.0
    %1853 = vmatprep.subr.mxu0 0.0
    %1854 = vmatpush1.xpose.msra.mxu0 0.0
    %1855 = vmatprep.subr.mxu0 0.0
    %1856 = vmatpush1.xpose.msra.mxu0 0.0
    %1857 = vmatprep.subr.mxu0 0.0
    %1858 = vmatpush1.xpose.msra.mxu0 0.0
    %1859 = vmatprep.subr.mxu0 0.0
    %1860 = vmatpush1.xpose.msra.mxu0 0.0
    %1861 = vmatprep.subr.mxu0 0.0
    %1862 = vmatpush1.xpose.msra.mxu0 0.0
    %1863 = vmatprep.subr.mxu0 0.0
    %1864 = vmatpush1.xpose.msra.mxu0 0.0
    %1865 = vmatprep.subr.mxu0 0.0
    %1866 = vmatpush1.xpose.msra.mxu0 0.0
    %1867 = vmatprep.subr.mxu0 0.0
    %1868 = vmatpush1.xpose.msra.mxu0 0.0
    %1869 = vmatprep.subr.mxu0 0.0
    %1870 = vmatpush1.xpose.msra.mxu0 0.0
    %1871 = vmatprep.subr.mxu0 0.0
    %1872 = vmatpush1.xpose.msra.mxu0 0.0
    %1873 = vmatprep.subr.mxu0 0.0
    %1874 = vmatpush1.xpose.msra.mxu0 0.0
    %1875 = vmatprep.subr.mxu0 0.0
    %1876 = vmatpush1.xpose.msra.mxu0 0.0
    %1877 = vmatprep.subr.mxu0 0.0
    %1878 = vmatpush1.xpose.msra.mxu0 0.0
    %1879 = vmatprep.subr.mxu0 0.0
    %1880 = vmatpush1.xpose.msra.mxu0 0.0
    %1881 = vmatprep.subr.mxu0 0.0
    %1882 = vmatpush1.xpose.msra.mxu0 0.0
    %1883 = vmatprep.mubr.f32.mxu0 0.0
    %1884 = vmatmul.mubr.f32.gmra.mrb[0].mxu0 %v1815
    %v1885 = vpop.f32.mrb[0].mxu0
    %v1886 = vadd.f32 0.0, %v1885
    %v1887 = vpop.f32.mrb[0].mxu0
    %1888 = vdwg.mxu0
    %v1889 = vrot.slane %v1452, 7
    %v1890 = vsel %vm525, %v1889, %v1451
    %v1891 = vrot.slane %v1453, 6
    %v1892 = vsel %vm528, %v1891, %v1890
    %v1893 = vrot.slane %v1454, 5
    %v1894 = vsel %vm531, %v1893, %v1892
    %v1895 = vrot.slane %v1455, 4
    %v1896 = vsel %vm534, %v1895, %v1894
    %v1897 = vrot.slane %v1456, 3
    %v1898 = vsel %vm536, %v1897, %v1896
    %v1899 = vrot.slane %v1457, 2
    %v1900 = vsel %vm538, %v1899, %v1898
    %v1901 = vrot.slane %v1458, 1
    %v1902 = vsel %vm540, %v1901, %v1900
    %v1903 = vrot.slane %v1564, 7
    %v1904 = vsel %vm525, %v1903, %v1563
    %v1905 = vrot.slane %v1565, 6
    %v1906 = vsel %vm528, %v1905, %v1904
    %v1907 = vrot.slane %v1566, 5
    %v1908 = vsel %vm531, %v1907, %v1906
    %v1909 = vrot.slane %v1567, 4
    %v1910 = vsel %vm534, %v1909, %v1908
    %v1911 = vrot.slane %v1568, 3
    %v1912 = vsel %vm536, %v1911, %v1910
    %v1913 = vrot.slane %v1569, 2
    %v1914 = vsel %vm538, %v1913, %v1912
    %v1915 = vrot.slane %v1570, 1
    %v1916 = vsel %vm540, %v1915, %v1914
    %v1917 = vsel %vm553, %v1902, 0
    %v1919 = vsel %vm553, %v1916, 0
    %1921 = vmatprep.subr.mxu0 0.0
    %1922 = vmatpush1.xpose.msra.mxu0 %v1919
    %1923 = vmatprep.subr.mxu0 0.0
    %1924 = vmatpush1.xpose.msra.mxu0 0.0
    %1925 = vmatprep.subr.mxu0 0.0
    %1926 = vmatpush1.xpose.msra.mxu0 0.0
    %1927 = vmatprep.subr.mxu0 0.0
    %1928 = vmatpush1.xpose.msra.mxu0 0.0
    %1929 = vmatprep.subr.mxu0 0.0
    %1930 = vmatpush1.xpose.msra.mxu0 0.0
    %1931 = vmatprep.subr.mxu0 0.0
    %1932 = vmatpush1.xpose.msra.mxu0 0.0
    %1933 = vmatprep.subr.mxu0 0.0
    %1934 = vmatpush1.xpose.msra.mxu0 0.0
    %1935 = vmatprep.subr.mxu0 0.0
    %1936 = vmatpush1.xpose.msra.mxu0 0.0
    %1937 = vmatprep.subr.mxu0 0.0
    %1938 = vmatpush1.xpose.msra.mxu0 0.0
    %1939 = vmatprep.subr.mxu0 0.0
    %1940 = vmatpush1.xpose.msra.mxu0 0.0
    %1941 = vmatprep.subr.mxu0 0.0
    %1942 = vmatpush1.xpose.msra.mxu0 0.0
    %1943 = vmatprep.subr.mxu0 0.0
    %1944 = vmatpush1.xpose.msra.mxu0 0.0
    %1945 = vmatprep.subr.mxu0 0.0
    %1946 = vmatpush1.xpose.msra.mxu0 0.0
    %1947 = vmatprep.subr.mxu0 0.0
    %1948 = vmatpush1.xpose.msra.mxu0 0.0
    %1949 = vmatprep.subr.mxu0 0.0
    %1950 = vmatpush1.xpose.msra.mxu0 0.0
    %1951 = vmatprep.subr.mxu0 0.0
    %1952 = vmatpush1.xpose.msra.mxu0 0.0
    %1953 = vmatprep.subr.mxu0 0.0
    %1954 = vmatpush1.xpose.msra.mxu0 0.0
    %1955 = vmatprep.subr.mxu0 0.0
    %1956 = vmatpush1.xpose.msra.mxu0 0.0
    %1957 = vmatprep.subr.mxu0 0.0
    %1958 = vmatpush1.xpose.msra.mxu0 0.0
    %1959 = vmatprep.subr.mxu0 0.0
    %1960 = vmatpush1.xpose.msra.mxu0 0.0
    %1961 = vmatprep.subr.mxu0 0.0
    %1962 = vmatpush1.xpose.msra.mxu0 0.0
    %1963 = vmatprep.subr.mxu0 0.0
    %1964 = vmatpush1.xpose.msra.mxu0 0.0
    %1965 = vmatprep.subr.mxu0 0.0
    %1966 = vmatpush1.xpose.msra.mxu0 0.0
    %1967 = vmatprep.subr.mxu0 0.0
    %1968 = vmatpush1.xpose.msra.mxu0 0.0
    %1969 = vmatprep.subr.mxu0 0.0
    %1970 = vmatpush1.xpose.msra.mxu0 0.0
    %1971 = vmatprep.subr.mxu0 0.0
    %1972 = vmatpush1.xpose.msra.mxu0 0.0
    %1973 = vmatprep.subr.mxu0 0.0
    %1974 = vmatpush1.xpose.msra.mxu0 0.0
    %1975 = vmatprep.subr.mxu0 0.0
    %1976 = vmatpush1.xpose.msra.mxu0 0.0
    %1977 = vmatprep.subr.mxu0 0.0
    %1978 = vmatpush1.xpose.msra.mxu0 0.0
    %1979 = vmatprep.subr.mxu0 0.0
    %1980 = vmatpush1.xpose.msra.mxu0 0.0
    %1981 = vmatprep.subr.mxu0 0.0
    %1982 = vmatpush1.xpose.msra.mxu0 0.0
    %1983 = vmatprep.subr.mxu0 0.0
    %1984 = vmatpush1.xpose.msra.mxu0 0.0
    %1985 = vmatprep.mubr.f32.mxu0 0.0
    %1986 = vmatmul.mubr.f32.gmra.mrb[0].mxu0 %v1917
    %v1987 = vpop.f32.mrb[0].mxu0
    %v1988 = vadd.f32 0.0, %v1987
    %v1989 = vpop.f32.mrb[0].mxu0
    %1990 = vdwg.mxu0
    %v1991 = vrot.slane %v1460, 7
    %v1992 = vsel %vm525, %v1991, %v1459
    %v1993 = vrot.slane %v1461, 6
    %v1994 = vsel %vm528, %v1993, %v1992
    %v1995 = vrot.slane %v1462, 5
    %v1996 = vsel %vm531, %v1995, %v1994
    %v1997 = vrot.slane %v1463, 4
    %v1998 = vsel %vm534, %v1997, %v1996
    %v1999 = vrot.slane %v1464, 3
    %v2000 = vsel %vm536, %v1999, %v1998
    %v2001 = vrot.slane %v1465, 2
    %v2002 = vsel %vm538, %v2001, %v2000
    %v2003 = vrot.slane %v1466, 1
    %v2004 = vsel %vm540, %v2003, %v2002
    %v2005 = vrot.slane %v1572, 7
    %v2006 = vsel %vm525, %v2005, %v1571
    %v2007 = vrot.slane %v1573, 6
    %v2008 = vsel %vm528, %v2007, %v2006
    %v2009 = vrot.slane %v1574, 5
    %v2010 = vsel %vm531, %v2009, %v2008
    %v2011 = vrot.slane %v1575, 4
    %v2012 = vsel %vm534, %v2011, %v2010
    %v2013 = vrot.slane %v1576, 3
    %v2014 = vsel %vm536, %v2013, %v2012
    %v2015 = vrot.slane %v1577, 2
    %v2016 = vsel %vm538, %v2015, %v2014
    %v2017 = vrot.slane %v1578, 1
    %v2018 = vsel %vm540, %v2017, %v2016
    %v2019 = vsel %vm553, %v2004, 0
    %v2021 = vsel %vm553, %v2018, 0
    %2023 = vmatprep.subr.mxu0 0.0
    %2024 = vmatpush1.xpose.msra.mxu0 %v2021
    %2025 = vmatprep.subr.mxu0 0.0
    %2026 = vmatpush1.xpose.msra.mxu0 0.0
    %2027 = vmatprep.subr.mxu0 0.0
    %2028 = vmatpush1.xpose.msra.mxu0 0.0
    %2029 = vmatprep.subr.mxu0 0.0
    %2030 = vmatpush1.xpose.msra.mxu0 0.0
    %2031 = vmatprep.subr.mxu0 0.0
    %2032 = vmatpush1.xpose.msra.mxu0 0.0
    %2033 = vmatprep.subr.mxu0 0.0
    %2034 = vmatpush1.xpose.msra.mxu0 0.0
    %2035 = vmatprep.subr.mxu0 0.0
    %2036 = vmatpush1.xpose.msra.mxu0 0.0
    %2037 = vmatprep.subr.mxu0 0.0
    %2038 = vmatpush1.xpose.msra.mxu0 0.0
    %2039 = vmatprep.subr.mxu0 0.0
    %2040 = vmatpush1.xpose.msra.mxu0 0.0
    %2041 = vmatprep.subr.mxu0 0.0
    %2042 = vmatpush1.xpose.msra.mxu0 0.0
    %2043 = vmatprep.subr.mxu0 0.0
    %2044 = vmatpush1.xpose.msra.mxu0 0.0
    %2045 = vmatprep.subr.mxu0 0.0
    %2046 = vmatpush1.xpose.msra.mxu0 0.0
    %2047 = vmatprep.subr.mxu0 0.0
    %2048 = vmatpush1.xpose.msra.mxu0 0.0
    %2049 = vmatprep.subr.mxu0 0.0
    %2050 = vmatpush1.xpose.msra.mxu0 0.0
    %2051 = vmatprep.subr.mxu0 0.0
    %2052 = vmatpush1.xpose.msra.mxu0 0.0
    %2053 = vmatprep.subr.mxu0 0.0
    %2054 = vmatpush1.xpose.msra.mxu0 0.0
    %2055 = vmatprep.subr.mxu0 0.0
    %2056 = vmatpush1.xpose.msra.mxu0 0.0
    %2057 = vmatprep.subr.mxu0 0.0
    %2058 = vmatpush1.xpose.msra.mxu0 0.0
    %2059 = vmatprep.subr.mxu0 0.0
    %2060 = vmatpush1.xpose.msra.mxu0 0.0
    %2061 = vmatprep.subr.mxu0 0.0
    %2062 = vmatpush1.xpose.msra.mxu0 0.0
    %2063 = vmatprep.subr.mxu0 0.0
    %2064 = vmatpush1.xpose.msra.mxu0 0.0
    %2065 = vmatprep.subr.mxu0 0.0
    %2066 = vmatpush1.xpose.msra.mxu0 0.0
    %2067 = vmatprep.subr.mxu0 0.0
    %2068 = vmatpush1.xpose.msra.mxu0 0.0
    %2069 = vmatprep.subr.mxu0 0.0
    %2070 = vmatpush1.xpose.msra.mxu0 0.0
    %2071 = vmatprep.subr.mxu0 0.0
    %2072 = vmatpush1.xpose.msra.mxu0 0.0
    %2073 = vmatprep.subr.mxu0 0.0
    %2074 = vmatpush1.xpose.msra.mxu0 0.0
    %2075 = vmatprep.subr.mxu0 0.0
    %2076 = vmatpush1.xpose.msra.mxu0 0.0
    %2077 = vmatprep.subr.mxu0 0.0
    %2078 = vmatpush1.xpose.msra.mxu0 0.0
    %2079 = vmatprep.subr.mxu0 0.0
    %2080 = vmatpush1.xpose.msra.mxu0 0.0
    %2081 = vmatprep.subr.mxu0 0.0
    %2082 = vmatpush1.xpose.msra.mxu0 0.0
    %2083 = vmatprep.subr.mxu0 0.0
    %2084 = vmatpush1.xpose.msra.mxu0 0.0
    %2085 = vmatprep.subr.mxu0 0.0
    %2086 = vmatpush1.xpose.msra.mxu0 0.0
    %2087 = vmatprep.mubr.f32.mxu0 0.0
    %2088 = vmatmul.mubr.f32.gmra.mrb[0].mxu0 %v2019
    %v2089 = vpop.f32.mrb[0].mxu0
    %v2090 = vadd.f32 0.0, %v2089
    %v2091 = vpop.f32.mrb[0].mxu0
    %2092 = vdwg.mxu0
    %v2093 = vmul.f32 %v1784, 0.35355338
    %v2094 = vmul.f32 %v1886, 0.35355338
    %v2095 = vmul.f32 %v1988, 0.35355338
    %v2096 = vmul.f32 %v2090, 0.35355338
    %v2097 = vld [vmem:[#allocation4 + $0x11] sm:$0x1]
    %v2098 = vlaneseq
    %v2099 = vshrl.u32 %v2098, 7
    %v2100 = vsub.s32 0, %v2099
    %v2101 = vrot.slane %v2097, %v2100
    %v2102 = vadd.f32 %v2093, %v2101
    %v2103 = vadd.f32 %v2094, %v2101
    %v2104 = vadd.f32 %v2095, %v2101
    %v2105 = vadd.f32 %v2096, %v2101
    %v2106 = vsel %vm553, %v2102, -inf
    %2107 = vmax.xlane.f32.xlu0 %v2106
    %v2108 = vpop.xlane.xlu0 %2107
    %v2109 = vsel %vm553, %v2103, -inf
    %2110 = vmax.xlane.f32.xlu0 %v2109
    %v2111 = vpop.xlane.xlu0 %2110
    %v2112 = vsel %vm553, %v2104, -inf
    %2113 = vmax.xlane.f32.xlu0 %v2112
    %v2114 = vpop.xlane.xlu0 %2113
    %v2115 = vsel %vm553, %v2105, -inf
    %2116 = vmax.xlane.f32.xlu0 %v2115
    %v2117 = vpop.xlane.xlu0 %2116
    %v2118 = vsub.f32 %v2102, %v2108
    %v2119 = vsub.f32 %v2103, %v2111
    %v2120 = vsub.f32 %v2104, %v2114
    %v2121 = vsub.f32 %v2105, %v2117
    %v2122 = vmul.f32 %v2118, 1.442695
    %v2123 = vpow.pop %v2122
    %v2124 = vmul.f32 %v2119, 1.442695
    %v2125 = vpow.pop %v2124
    %v2126 = vmul.f32 %v2120, 1.442695
    %v2127 = vpow.pop %v2126
    %v2128 = vmul.f32 %v2121, 1.442695
    %v2129 = vpow.pop %v2128
    %v2130 = vsel %vm553, %v2123, 0.0
    %2131 = vadd.xlane.f32.xlu0 %v2130
    %v2132 = vpop.xlane.xlu0 %2131
    %v2133 = vsel %vm553, %v2125, 0.0
    %2134 = vadd.xlane.f32.xlu0 %v2133
    %v2135 = vpop.xlane.xlu0 %2134
    %v2136 = vsel %vm553, %v2127, 0.0
    %2137 = vadd.xlane.f32.xlu0 %v2136
    %v2138 = vpop.xlane.xlu0 %2137
    %v2139 = vsel %vm553, %v2129, 0.0
    %2140 = vadd.xlane.f32.xlu0 %v2139
    %v2141 = vpop.xlane.xlu0 %2140
    %v2142 = vrcp.pop %v2132
    %v2143 = vrcp.pop %v2135
    %v2144 = vrcp.pop %v2138
    %v2145 = vrcp.pop %v2141
    %v2146 = vmul.f32 %v2123, %v2142
    %v2147 = vmul.f32 %v2125, %v2143
    %v2148 = vmul.f32 %v2127, %v2144
    %v2149 = vmul.f32 %v2129, %v2145
    %v2150 = vrot.slane %v1655, 7
    %v2151 = vsel %vm525, %v2150, %v1631
    %v2152 = vrot.slane %v1638, 6
    %v2153 = vsel %vm528, %v2152, %v2151
    %v2154 = vrot.slane %v1656, 5
    %v2155 = vsel %vm531, %v2154, %v2153
    %v2156 = vrot.slane %v1647, 4
    %v2157 = vsel %vm534, %v2156, %v2155
    %v2158 = vsel %vm536, %v1688, %v2157
    %v2159 = vsel %vm538, %v1681, %v2158
    %v2160 = vsel %vm540, %v1674, %v2159
    %v2163 = vsel %vm553, %v2146, 0
    %2165 = vmatprep.subr.mxu0 0.0
    %2166 = vmatpush1.msra.mxu0 %v2160
    %2167 = vmatprep.subr.mxu0 0.0
    %2168 = vmatpush1.msra.mxu0 0.0
    %2169 = vmatprep.subr.mxu0 0.0
    %2170 = vmatpush1.msra.mxu0 0.0
    %2171 = vmatprep.subr.mxu0 0.0
    %2172 = vmatpush1.msra.mxu0 0.0
    %2173 = vmatprep.subr.mxu0 0.0
    %2174 = vmatpush1.msra.mxu0 0.0
    %2175 = vmatprep.subr.mxu0 0.0
    %2176 = vmatpush1.msra.mxu0 0.0
    %2177 = vmatprep.subr.mxu0 0.0
    %2178 = vmatpush1.msra.mxu0 0.0
    %2179 = vmatprep.subr.mxu0 0.0
    %2180 = vmatpush1.msra.mxu0 0.0
    %2181 = vmatprep.subr.mxu0 0.0
    %2182 = vmatpush1.msra.mxu0 0.0
    %2183 = vmatprep.subr.mxu0 0.0
    %2184 = vmatpush1.msra.mxu0 0.0
    %2185 = vmatprep.subr.mxu0 0.0
    %2186 = vmatpush1.msra.mxu0 0.0
    %2187 = vmatprep.subr.mxu0 0.0
    %2188 = vmatpush1.msra.mxu0 0.0
    %2189 = vmatprep.subr.mxu0 0.0
    %2190 = vmatpush1.msra.mxu0 0.0
    %2191 = vmatprep.subr.mxu0 0.0
    %2192 = vmatpush1.msra.mxu0 0.0
    %2193 = vmatprep.subr.mxu0 0.0
    %2194 = vmatpush1.msra.mxu0 0.0
    %2195 = vmatprep.subr.mxu0 0.0
    %2196 = vmatpush1.msra.mxu0 0.0
    %2197 = vmatprep.subr.mxu0 0.0
    %2198 = vmatpush1.msra.mxu0 0.0
    %2199 = vmatprep.subr.mxu0 0.0
    %2200 = vmatpush1.msra.mxu0 0.0
    %2201 = vmatprep.subr.mxu0 0.0
    %2202 = vmatpush1.msra.mxu0 0.0
    %2203 = vmatprep.subr.mxu0 0.0
    %2204 = vmatpush1.msra.mxu0 0.0
    %2205 = vmatprep.subr.mxu0 0.0
    %2206 = vmatpush1.msra.mxu0 0.0
    %2207 = vmatprep.subr.mxu0 0.0
    %2208 = vmatpush1.msra.mxu0 0.0
    %2209 = vmatprep.subr.mxu0 0.0
    %2210 = vmatpush1.msra.mxu0 0.0
    %2211 = vmatprep.subr.mxu0 0.0
    %2212 = vmatpush1.msra.mxu0 0.0
    %2213 = vmatprep.subr.mxu0 0.0
    %2214 = vmatpush1.msra.mxu0 0.0
    %2215 = vmatprep.subr.mxu0 0.0
    %2216 = vmatpush1.msra.mxu0 0.0
    %2217 = vmatprep.subr.mxu0 0.0
    %2218 = vmatpush1.msra.mxu0 0.0
    %2219 = vmatprep.subr.mxu0 0.0
    %2220 = vmatpush1.msra.mxu0 0.0
    %2221 = vmatprep.subr.mxu0 0.0
    %2222 = vmatpush1.msra.mxu0 0.0
    %2223 = vmatprep.subr.mxu0 0.0
    %2224 = vmatpush1.msra.mxu0 0.0
    %2225 = vmatprep.subr.mxu0 0.0
    %2226 = vmatpush1.msra.mxu0 0.0
    %2227 = vmatprep.subr.mxu0 0.0
    %2228 = vmatpush1.msra.mxu0 0.0
    %2229 = vmatprep.mubr.f32.mxu0 0.0
    %2230 = vmatmul.mubr.f32.gmra.mrb[0].mxu0 %v2163
    %v2231 = vpop.f32.mrb[0].mxu0
    %v2232 = vadd.f32 0.0, %v2231
    %v2233 = vpop.f32.mrb[0].mxu0
    %2234 = vdwg.mxu0
    %v2235 = vrot.slane %v1668, 7
    %v2236 = vsel %vm525, %v2235, %v1667
    %v2237 = vrot.slane %v1669, 6
    %v2238 = vsel %vm528, %v2237, %v2236
    %v2239 = vrot.slane %v1670, 5
    %v2240 = vsel %vm531, %v2239, %v2238
    %v2241 = vrot.slane %v1671, 4
    %v2242 = vsel %vm534, %v2241, %v2240
    %v2243 = vrot.slane %v1672, 3
    %v2244 = vsel %vm536, %v2243, %v2242
    %v2245 = vrot.slane %v1673, 2
    %v2246 = vsel %vm538, %v2245, %v2244
    %v2247 = vrot.slane %v1674, 1
    %v2248 = vsel %vm540, %v2247, %v2246
    %v2251 = vsel %vm553, %v2147, 0
    %2253 = vmatprep.subr.mxu0 0.0
    %2254 = vmatpush1.msra.mxu0 %v2248
    %2255 = vmatprep.subr.mxu0 0.0
    %2256 = vmatpush1.msra.mxu0 0.0
    %2257 = vmatprep.subr.mxu0 0.0
    %2258 = vmatpush1.msra.mxu0 0.0
    %2259 = vmatprep.subr.mxu0 0.0
    %2260 = vmatpush1.msra.mxu0 0.0
    %2261 = vmatprep.subr.mxu0 0.0
    %2262 = vmatpush1.msra.mxu0 0.0
    %2263 = vmatprep.subr.mxu0 0.0
    %2264 = vmatpush1.msra.mxu0 0.0
    %2265 = vmatprep.subr.mxu0 0.0
    %2266 = vmatpush1.msra.mxu0 0.0
    %2267 = vmatprep.subr.mxu0 0.0
    %2268 = vmatpush1.msra.mxu0 0.0
    %2269 = vmatprep.subr.mxu0 0.0
    %2270 = vmatpush1.msra.mxu0 0.0
    %2271 = vmatprep.subr.mxu0 0.0
    %2272 = vmatpush1.msra.mxu0 0.0
    %2273 = vmatprep.subr.mxu0 0.0
    %2274 = vmatpush1.msra.mxu0 0.0
    %2275 = vmatprep.subr.mxu0 0.0
    %2276 = vmatpush1.msra.mxu0 0.0
    %2277 = vmatprep.subr.mxu0 0.0
    %2278 = vmatpush1.msra.mxu0 0.0
    %2279 = vmatprep.subr.mxu0 0.0
    %2280 = vmatpush1.msra.mxu0 0.0
    %2281 = vmatprep.subr.mxu0 0.0
    %2282 = vmatpush1.msra.mxu0 0.0
    %2283 = vmatprep.subr.mxu0 0.0
    %2284 = vmatpush1.msra.mxu0 0.0
    %2285 = vmatprep.subr.mxu0 0.0
    %2286 = vmatpush1.msra.mxu0 0.0
    %2287 = vmatprep.subr.mxu0 0.0
    %2288 = vmatpush1.msra.mxu0 0.0
    %2289 = vmatprep.subr.mxu0 0.0
    %2290 = vmatpush1.msra.mxu0 0.0
    %2291 = vmatprep.subr.mxu0 0.0
    %2292 = vmatpush1.msra.mxu0 0.0
    %2293 = vmatprep.subr.mxu0 0.0
    %2294 = vmatpush1.msra.mxu0 0.0
    %2295 = vmatprep.subr.mxu0 0.0
    %2296 = vmatpush1.msra.mxu0 0.0
    %2297 = vmatprep.subr.mxu0 0.0
    %2298 = vmatpush1.msra.mxu0 0.0
    %2299 = vmatprep.subr.mxu0 0.0
    %2300 = vmatpush1.msra.mxu0 0.0
    %2301 = vmatprep.subr.mxu0 0.0
    %2302 = vmatpush1.msra.mxu0 0.0
    %2303 = vmatprep.subr.mxu0 0.0
    %2304 = vmatpush1.msra.mxu0 0.0
    %2305 = vmatprep.subr.mxu0 0.0
    %2306 = vmatpush1.msra.mxu0 0.0
    %2307 = vmatprep.subr.mxu0 0.0
    %2308 = vmatpush1.msra.mxu0 0.0
    %2309 = vmatprep.subr.mxu0 0.0
    %2310 = vmatpush1.msra.mxu0 0.0
    %2311 = vmatprep.subr.mxu0 0.0
    %2312 = vmatpush1.msra.mxu0 0.0
    %2313 = vmatprep.subr.mxu0 0.0
    %2314 = vmatpush1.msra.mxu0 0.0
    %2315 = vmatprep.subr.mxu0 0.0
    %2316 = vmatpush1.msra.mxu0 0.0
    %2317 = vmatprep.mubr.f32.mxu0 0.0
    %2318 = vmatmul.mubr.f32.gmra.mrb[0].mxu0 %v2251
    %v2319 = vpop.f32.mrb[0].mxu0
    %v2320 = vadd.f32 0.0, %v2319
    %v2321 = vpop.f32.mrb[0].mxu0
    %2322 = vdwg.mxu0
    %v2323 = vrot.slane %v1676, 7
    %v2324 = vsel %vm525, %v2323, %v1675
    %v2325 = vrot.slane %v1677, 6
    %v2326 = vsel %vm528, %v2325, %v2324
    %v2327 = vrot.slane %v1678, 5
    %v2328 = vsel %vm531, %v2327, %v2326
    %v2329 = vrot.slane %v1679, 4
    %v2330 = vsel %vm534, %v2329, %v2328
    %v2331 = vrot.slane %v1680, 3
    %v2332 = vsel %vm536, %v2331, %v2330
    %v2333 = vrot.slane %v1681, 2
    %v2334 = vsel %vm538, %v2333, %v2332
    %v2335 = vrot.slane %v1682, 1
    %v2336 = vsel %vm540, %v2335, %v2334
    %v2339 = vsel %vm553, %v2148, 0
    %2341 = vmatprep.subr.mxu0 0.0
    %2342 = vmatpush1.msra.mxu0 %v2336
    %2343 = vmatprep.subr.mxu0 0.0
    %2344 = vmatpush1.msra.mxu0 0.0
    %2345 = vmatprep.subr.mxu0 0.0
    %2346 = vmatpush1.msra.mxu0 0.0
    %2347 = vmatprep.subr.mxu0 0.0
    %2348 = vmatpush1.msra.mxu0 0.0
    %2349 = vmatprep.subr.mxu0 0.0
    %2350 = vmatpush1.msra.mxu0 0.0
    %2351 = vmatprep.subr.mxu0 0.0
    %2352 = vmatpush1.msra.mxu0 0.0
    %2353 = vmatprep.subr.mxu0 0.0
    %2354 = vmatpush1.msra.mxu0 0.0
    %2355 = vmatprep.subr.mxu0 0.0
    %2356 = vmatpush1.msra.mxu0 0.0
    %2357 = vmatprep.subr.mxu0 0.0
    %2358 = vmatpush1.msra.mxu0 0.0
    %2359 = vmatprep.subr.mxu0 0.0
    %2360 = vmatpush1.msra.mxu0 0.0
    %2361 = vmatprep.subr.mxu0 0.0
    %2362 = vmatpush1.msra.mxu0 0.0
    %2363 = vmatprep.subr.mxu0 0.0
    %2364 = vmatpush1.msra.mxu0 0.0
    %2365 = vmatprep.subr.mxu0 0.0
    %2366 = vmatpush1.msra.mxu0 0.0
    %2367 = vmatprep.subr.mxu0 0.0
    %2368 = vmatpush1.msra.mxu0 0.0
    %2369 = vmatprep.subr.mxu0 0.0
    %2370 = vmatpush1.msra.mxu0 0.0
    %2371 = vmatprep.subr.mxu0 0.0
    %2372 = vmatpush1.msra.mxu0 0.0
    %2373 = vmatprep.subr.mxu0 0.0
    %2374 = vmatpush1.msra.mxu0 0.0
    %2375 = vmatprep.subr.mxu0 0.0
    %2376 = vmatpush1.msra.mxu0 0.0
    %2377 = vmatprep.subr.mxu0 0.0
    %2378 = vmatpush1.msra.mxu0 0.0
    %2379 = vmatprep.subr.mxu0 0.0
    %2380 = vmatpush1.msra.mxu0 0.0
    %2381 = vmatprep.subr.mxu0 0.0
    %2382 = vmatpush1.msra.mxu0 0.0
    %2383 = vmatprep.subr.mxu0 0.0
    %2384 = vmatpush1.msra.mxu0 0.0
    %2385 = vmatprep.subr.mxu0 0.0
    %2386 = vmatpush1.msra.mxu0 0.0
    %2387 = vmatprep.subr.mxu0 0.0
    %2388 = vmatpush1.msra.mxu0 0.0
    %2389 = vmatprep.subr.mxu0 0.0
    %2390 = vmatpush1.msra.mxu0 0.0
    %2391 = vmatprep.subr.mxu0 0.0
    %2392 = vmatpush1.msra.mxu0 0.0
    %2393 = vmatprep.subr.mxu0 0.0
    %2394 = vmatpush1.msra.mxu0 0.0
    %2395 = vmatprep.subr.mxu0 0.0
    %2396 = vmatpush1.msra.mxu0 0.0
    %2397 = vmatprep.subr.mxu0 0.0
    %2398 = vmatpush1.msra.mxu0 0.0
    %2399 = vmatprep.subr.mxu0 0.0
    %2400 = vmatpush1.msra.mxu0 0.0
    %2401 = vmatprep.subr.mxu0 0.0
    %2402 = vmatpush1.msra.mxu0 0.0
    %2403 = vmatprep.subr.mxu0 0.0
    %2404 = vmatpush1.msra.mxu0 0.0
    %2405 = vmatprep.mubr.f32.mxu0 0.0
    %2406 = vmatmul.mubr.f32.gmra.mrb[0].mxu0 %v2339
    %v2407 = vpop.f32.mrb[0].mxu0
    %v2408 = vadd.f32 0.0, %v2407
    %v2409 = vpop.f32.mrb[0].mxu0
    %2410 = vdwg.mxu0
    %v2411 = vrot.slane %v1684, 7
    %v2412 = vsel %vm525, %v2411, %v1683
    %v2413 = vrot.slane %v1685, 6
    %v2414 = vsel %vm528, %v2413, %v2412
    %v2415 = vrot.slane %v1686, 5
    %v2416 = vsel %vm531, %v2415, %v2414
    %v2417 = vrot.slane %v1687, 4
    %v2418 = vsel %vm534, %v2417, %v2416
    %v2419 = vrot.slane %v1688, 3
    %v2420 = vsel %vm536, %v2419, %v2418
    %v2421 = vrot.slane %v1689, 2
    %v2422 = vsel %vm538, %v2421, %v2420
    %v2423 = vrot.slane %v1690, 1
    %v2424 = vsel %vm540, %v2423, %v2422
    %v2427 = vsel %vm553, %v2149, 0
    %2429 = vmatprep.subr.mxu0 0.0
    %2430 = vmatpush1.msra.mxu0 %v2424
    %2431 = vmatprep.subr.mxu0 0.0
    %2432 = vmatpush1.msra.mxu0 0.0
    %2433 = vmatprep.subr.mxu0 0.0
    %2434 = vmatpush1.msra.mxu0 0.0
    %2435 = vmatprep.subr.mxu0 0.0
    %2436 = vmatpush1.msra.mxu0 0.0
    %2437 = vmatprep.subr.mxu0 0.0
    %2438 = vmatpush1.msra.mxu0 0.0
    %2439 = vmatprep.subr.mxu0 0.0
    %2440 = vmatpush1.msra.mxu0 0.0
    %2441 = vmatprep.subr.mxu0 0.0
    %2442 = vmatpush1.msra.mxu0 0.0
    %2443 = vmatprep.subr.mxu0 0.0
    %2444 = vmatpush1.msra.mxu0 0.0
    %2445 = vmatprep.subr.mxu0 0.0
    %2446 = vmatpush1.msra.mxu0 0.0
    %2447 = vmatprep.subr.mxu0 0.0
    %2448 = vmatpush1.msra.mxu0 0.0
    %2449 = vmatprep.subr.mxu0 0.0
    %2450 = vmatpush1.msra.mxu0 0.0
    %2451 = vmatprep.subr.mxu0 0.0
    %2452 = vmatpush1.msra.mxu0 0.0
    %2453 = vmatprep.subr.mxu0 0.0
    %2454 = vmatpush1.msra.mxu0 0.0
    %2455 = vmatprep.subr.mxu0 0.0
    %2456 = vmatpush1.msra.mxu0 0.0
    %2457 = vmatprep.subr.mxu0 0.0
    %2458 = vmatpush1.msra.mxu0 0.0
    %2459 = vmatprep.subr.mxu0 0.0
    %2460 = vmatpush1.msra.mxu0 0.0
    %2461 = vmatprep.subr.mxu0 0.0
    %2462 = vmatpush1.msra.mxu0 0.0
    %2463 = vmatprep.subr.mxu0 0.0
    %2464 = vmatpush1.msra.mxu0 0.0
    %2465 = vmatprep.subr.mxu0 0.0
    %2466 = vmatpush1.msra.mxu0 0.0
    %2467 = vmatprep.subr.mxu0 0.0
    %2468 = vmatpush1.msra.mxu0 0.0
    %2469 = vmatprep.subr.mxu0 0.0
    %2470 = vmatpush1.msra.mxu0 0.0
    %2471 = vmatprep.subr.mxu0 0.0
    %2472 = vmatpush1.msra.mxu0 0.0
    %2473 = vmatprep.subr.mxu0 0.0
    %2474 = vmatpush1.msra.mxu0 0.0
    %2475 = vmatprep.subr.mxu0 0.0
    %2476 = vmatpush1.msra.mxu0 0.0
    %2477 = vmatprep.subr.mxu0 0.0
    %2478 = vmatpush1.msra.mxu0 0.0
    %2479 = vmatprep.subr.mxu0 0.0
    %2480 = vmatpush1.msra.mxu0 0.0
    %2481 = vmatprep.subr.mxu0 0.0
    %2482 = vmatpush1.msra.mxu0 0.0
    %2483 = vmatprep.subr.mxu0 0.0
    %2484 = vmatpush1.msra.mxu0 0.0
    %2485 = vmatprep.subr.mxu0 0.0
    %2486 = vmatpush1.msra.mxu0 0.0
    %2487 = vmatprep.subr.mxu0 0.0
    %2488 = vmatpush1.msra.mxu0 0.0
    %2489 = vmatprep.subr.mxu0 0.0
    %2490 = vmatpush1.msra.mxu0 0.0
    %2491 = vmatprep.subr.mxu0 0.0
    %2492 = vmatpush1.msra.mxu0 0.0
    %2493 = vmatprep.mubr.f32.mxu0 0.0
    %2494 = vmatmul.mubr.f32.gmra.mrb[0].mxu0 %v2427
    %v2495 = vpop.f32.mrb[0].mxu0
    %v2496 = vadd.f32 0.0, %v2495
    %v2497 = vpop.f32.mrb[0].mxu0
    %2498 = vdwg.mxu0
    %2500 = vrot.lane.b32.xlu0 %v2320, 8
    %v2501 = vpop.permute.xlu0 %2500
    %2504 = vrot.lane.b32.xlu0 %v2408, 16
    %v2505 = vpop.permute.xlu0 %2504
    %2508 = vrot.lane.b32.xlu0 %v2496, 24
    %v2509 = vpop.permute.xlu0 %2508
    %v2511 = vsel %vm553, %v2232, %v2501
    %v2512 = vsel %vm1353, %v2511, %v2505
    %v2513 = vsel %vm1355, %v2512, %v2509
    %v2514 = vlaneseq
    %v2515 = vshrl.u32 %v2514, 7
    %v2516 = vsub.s32 0, %v2515
    %v2517 = vrot.slane %v96, %v2516
    %v2519 = vsel %vm108, %v1356, 0
    %v2522 = vsel %vm108, %v2513, 0
    %2524 = vmatprep.subr.mxu0 0.0
    %2525 = vmatpush1.msra.mxu0 %v67
    %2526 = vmatprep.subr.mxu0 0.0
    %2527 = vmatpush1.msra.mxu0 %v68
    %2528 = vmatprep.subr.mxu0 0.0
    %2529 = vmatpush1.msra.mxu0 %v69
    %2530 = vmatprep.subr.mxu0 0.0
    %2531 = vmatpush1.msra.mxu0 %v70
    %2532 = vmatprep.subr.mxu0 0.0
    %2533 = vmatpush1.msra.mxu0 0.0
    %2534 = vmatprep.subr.mxu0 0.0
    %2535 = vmatpush1.msra.mxu0 0.0
    %2536 = vmatprep.subr.mxu0 0.0
    %2537 = vmatpush1.msra.mxu0 0.0
    %2538 = vmatprep.subr.mxu0 0.0
    %2539 = vmatpush1.msra.mxu0 0.0
    %2540 = vmatprep.subr.mxu0 0.0
    %2541 = vmatpush1.msra.mxu0 0.0
    %2542 = vmatprep.subr.mxu0 0.0
    %2543 = vmatpush1.msra.mxu0 0.0
    %2544 = vmatprep.subr.mxu0 0.0
    %2545 = vmatpush1.msra.mxu0 0.0
    %2546 = vmatprep.subr.mxu0 0.0
    %2547 = vmatpush1.msra.mxu0 0.0
    %2548 = vmatprep.subr.mxu0 0.0
    %2549 = vmatpush1.msra.mxu0 0.0
    %2550 = vmatprep.subr.mxu0 0.0
    %2551 = vmatpush1.msra.mxu0 0.0
    %2552 = vmatprep.subr.mxu0 0.0
    %2553 = vmatpush1.msra.mxu0 0.0
    %2554 = vmatprep.subr.mxu0 0.0
    %2555 = vmatpush1.msra.mxu0 0.0
    %2556 = vmatprep.subr.mxu0 0.0
    %2557 = vmatpush1.msra.mxu0 0.0
    %2558 = vmatprep.subr.mxu0 0.0
    %2559 = vmatpush1.msra.mxu0 0.0
    %2560 = vmatprep.subr.mxu0 0.0
    %2561 = vmatpush1.msra.mxu0 0.0
    %2562 = vmatprep.subr.mxu0 0.0
    %2563 = vmatpush1.msra.mxu0 0.0
    %2564 = vmatprep.subr.mxu0 0.0
    %2565 = vmatpush1.msra.mxu0 0.0
    %2566 = vmatprep.subr.mxu0 0.0
    %2567 = vmatpush1.msra.mxu0 0.0
    %2568 = vmatprep.subr.mxu0 0.0
    %2569 = vmatpush1.msra.mxu0 0.0
    %2570 = vmatprep.subr.mxu0 0.0
    %2571 = vmatpush1.msra.mxu0 0.0
    %2572 = vmatprep.subr.mxu0 0.0
    %2573 = vmatpush1.msra.mxu0 0.0
    %2574 = vmatprep.subr.mxu0 0.0
    %2575 = vmatpush1.msra.mxu0 0.0
    %2576 = vmatprep.subr.mxu0 0.0
    %2577 = vmatpush1.msra.mxu0 0.0
    %2578 = vmatprep.subr.mxu0 0.0
    %2579 = vmatpush1.msra.mxu0 0.0
    %2580 = vmatprep.subr.mxu0 0.0
    %2581 = vmatpush1.msra.mxu0 0.0
    %2582 = vmatprep.subr.mxu0 0.0
    %2583 = vmatpush1.msra.mxu0 0.0
    %2584 = vmatprep.subr.mxu0 0.0
    %2585 = vmatpush1.msra.mxu0 0.0
    %2586 = vmatprep.subr.mxu0 0.0
    %2587 = vmatpush1.msra.mxu0 0.0
    %2588 = vmatprep.mubr.f32.mxu0 0.0
    %2589 = vmatmul.mubr.f32.gmra.mrb[0].mxu0 %v2519
    %v2590 = vpop.f32.mrb[0].mxu0
    %v2591 = vadd.f32 %v2517, %v2590
    %v2592 = vpop.f32.mrb[0].mxu0
    %2593 = vmatprep.mubr.f32.mxu0 0.0
    %2594 = vmatmul.mubr.f32.gmra.mrb[0].mxu0 %v2522
    %v2595 = vpop.f32.mrb[0].mxu0
    %v2596 = vadd.f32 %v2517, %v2595
    %v2597 = vpop.f32.mrb[0].mxu0
    %2598 = vdwg.mxu0
    %v2599 = vadd.f32 %v61, %v2591
    %v2600 = vadd.f32 %v62, %v2596
    %v2601 = vsel %vm108, %v2599, 0.0
    %2602 = vadd.xlane.f32.xlu0 %v2601
    %v2603 = vpop.xlane.xlu0 %2602
    %v2604 = vsel %vm108, %v2600, 0.0
    %2605 = vadd.xlane.f32.xlu0 %v2604
    %v2606 = vpop.xlane.xlu0 %2605
    %v2607 = vrcp.pop 32.0
    %v2608 = vmul.f32 %v2603, %v2607
    %v2609 = vmul.f32 %v2606, %v2607
    %v2610 = vsub.f32 %v2599, %v2608
    %v2611 = vsub.f32 %v2600, %v2609
    %v2612 = vmul.f32 %v2610, %v2610
    %v2613 = vmul.f32 %v2611, %v2611
    %v2614 = vsel %vm108, %v2612, 0.0
    %2615 = vadd.xlane.f32.xlu0 %v2614
    %v2616 = vpop.xlane.xlu0 %2615
    %v2617 = vsel %vm108, %v2613, 0.0
    %2618 = vadd.xlane.f32.xlu0 %v2617
    %v2619 = vpop.xlane.xlu0 %2618
    %v2620 = vmul.f32 %v2616, %v2607
    %v2621 = vmul.f32 %v2619, %v2607
    %v2622 = vadd.f32 %v2620, 1e-05
    %v2623 = vadd.f32 %v2621, 1e-05
    %v2624 = vrsqrt.pop %v2622
    %v2625 = vrsqrt.pop %v2623
    %v2626 = vmul.f32 %v2610, %v2624
    %v2627 = vmul.f32 %v2611, %v2625
    %v2628 = vlaneseq
    %v2629 = vshrl.u32 %v2628, 7
    %v2630 = vsub.s32 0, %v2629
    %v2631 = vrot.slane %v97, %v2630
    %v2632 = vmul.f32 %v2626, %v2631
    %v2633 = vmul.f32 %v2627, %v2631
    %v2634 = vlaneseq
    %v2635 = vshrl.u32 %v2634, 7
    %v2636 = vsub.s32 0, %v2635
    %v2637 = vrot.slane %v98, %v2636
    %v2638 = vadd.f32 %v2632, %v2637
    %v2639 = vadd.f32 %v2633, %v2637
    %v2640 = vlaneseq
    %v2641 = vshrl.u32 %v2640, 7
    %v2642 = vsub.s32 0, %v2641
    %v2643 = vrot.slane %v99, %v2642
    %v2645 = vsel %vm108, %v2638, 0
    %v2648 = vsel %vm108, %v2639, 0
    %2650 = vmatprep.subr.mxu0 0.0
    %2651 = vmatpush1.msra.mxu0 %v71
    %2652 = vmatprep.subr.mxu0 0.0
    %2653 = vmatpush1.msra.mxu0 %v72
    %2654 = vmatprep.subr.mxu0 0.0
    %2655 = vmatpush1.msra.mxu0 %v73
    %2656 = vmatprep.subr.mxu0 0.0
    %2657 = vmatpush1.msra.mxu0 %v74
    %2658 = vmatprep.subr.mxu0 0.0
    %2659 = vmatpush1.msra.mxu0 0.0
    %2660 = vmatprep.subr.mxu0 0.0
    %2661 = vmatpush1.msra.mxu0 0.0
    %2662 = vmatprep.subr.mxu0 0.0
    %2663 = vmatpush1.msra.mxu0 0.0
    %2664 = vmatprep.subr.mxu0 0.0
    %2665 = vmatpush1.msra.mxu0 0.0
    %2666 = vmatprep.subr.mxu0 0.0
    %2667 = vmatpush1.msra.mxu0 0.0
    %2668 = vmatprep.subr.mxu0 0.0
    %2669 = vmatpush1.msra.mxu0 0.0
    %2670 = vmatprep.subr.mxu0 0.0
    %2671 = vmatpush1.msra.mxu0 0.0
    %2672 = vmatprep.subr.mxu0 0.0
    %2673 = vmatpush1.msra.mxu0 0.0
    %2674 = vmatprep.subr.mxu0 0.0
    %2675 = vmatpush1.msra.mxu0 0.0
    %2676 = vmatprep.subr.mxu0 0.0
    %2677 = vmatpush1.msra.mxu0 0.0
    %2678 = vmatprep.subr.mxu0 0.0
    %2679 = vmatpush1.msra.mxu0 0.0
    %2680 = vmatprep.subr.mxu0 0.0
    %2681 = vmatpush1.msra.mxu0 0.0
    %2682 = vmatprep.subr.mxu0 0.0
    %2683 = vmatpush1.msra.mxu0 0.0
    %2684 = vmatprep.subr.mxu0 0.0
    %2685 = vmatpush1.msra.mxu0 0.0
    %2686 = vmatprep.subr.mxu0 0.0
    %2687 = vmatpush1.msra.mxu0 0.0
    %2688 = vmatprep.subr.mxu0 0.0
    %2689 = vmatpush1.msra.mxu0 0.0
    %2690 = vmatprep.subr.mxu0 0.0
    %2691 = vmatpush1.msra.mxu0 0.0
    %2692 = vmatprep.subr.mxu0 0.0
    %2693 = vmatpush1.msra.mxu0 0.0
    %2694 = vmatprep.subr.mxu0 0.0
    %2695 = vmatpush1.msra.mxu0 0.0
    %2696 = vmatprep.subr.mxu0 0.0
    %2697 = vmatpush1.msra.mxu0 0.0
    %2698 = vmatprep.subr.mxu0 0.0
    %2699 = vmatpush1.msra.mxu0 0.0
    %2700 = vmatprep.subr.mxu0 0.0
    %2701 = vmatpush1.msra.mxu0 0.0
    %2702 = vmatprep.subr.mxu0 0.0
    %2703 = vmatpush1.msra.mxu0 0.0
    %2704 = vmatprep.subr.mxu0 0.0
    %2705 = vmatpush1.msra.mxu0 0.0
    %2706 = vmatprep.subr.mxu0 0.0
    %2707 = vmatpush1.msra.mxu0 0.0
    %2708 = vmatprep.subr.mxu0 0.0
    %2709 = vmatpush1.msra.mxu0 0.0
    %2710 = vmatprep.subr.mxu0 0.0
    %2711 = vmatpush1.msra.mxu0 0.0
    %2712 = vmatprep.subr.mxu0 0.0
    %2713 = vmatpush1.msra.mxu0 0.0
    %2714 = vmatprep.mubr.f32.mxu0 0.0
    %2715 = vmatmul.mubr.f32.gmra.mrb[0].mxu0 %v2645
    %v2716 = vpop.f32.mrb[0].mxu0
    %v2717 = vadd.f32 %v2643, %v2716
    %v2718 = vpop.f32.mrb[0].mxu0
    %2719 = vmatprep.mubr.f32.mxu0 0.0
    %2720 = vmatmul.mubr.f32.gmra.mrb[0].mxu0 %v2648
    %v2721 = vpop.f32.mrb[0].mxu0
    %v2722 = vadd.f32 %v2643, %v2721
    %v2723 = vpop.f32.mrb[0].mxu0
    %2724 = vdwg.mxu0
    %v2725 = vmul.f32 %v2717, %v2717
    %v2726 = vmul.f32 %v2722, %v2722
    %v2727 = vmul.f32 %v2717, %v2725
    %v2728 = vmul.f32 %v2722, %v2726
    %v2729 = vmul.f32 %v2727, 0.044715
    %v2730 = vmul.f32 %v2728, 0.044715
    %v2731 = vadd.f32 %v2717, %v2729
    %v2732 = vadd.f32 %v2722, %v2730
    %v2733 = vmul.f32 %v2731, 0.7978846
    %v2734 = vmul.f32 %v2732, 0.7978846
    %v2735 = vtanh.pop %v2733
    %v2736 = vtanh.pop %v2734
    %v2737 = vadd.f32 %v2735, 1.0
    %v2738 = vadd.f32 %v2736, 1.0
    %v2739 = vmul.f32 %v2737, 0.5
    %v2740 = vmul.f32 %v2738, 0.5
    %v2741 = vmul.f32 %v2717, %v2739
    %v2742 = vmul.f32 %v2722, %v2740
    %v2743 = vlaneseq
    %v2744 = vshrl.u32 %v2743, 7
    %v2745 = vsub.s32 0, %v2744
    %v2746 = vrot.slane %v100, %v2745
    %2747 = vmatprep.subr.mxu0 0.0
    %2748 = vmatpush1.msra.mxu0 %v75
    %2749 = vmatprep.subr.mxu0 0.0
    %2750 = vmatpush1.msra.mxu0 %v76
    %2751 = vmatprep.subr.mxu0 0.0
    %2752 = vmatpush1.msra.mxu0 %v77
    %2753 = vmatprep.subr.mxu0 0.0
    %2754 = vmatpush1.msra.mxu0 %v78
    %2755 = vmatprep.subr.mxu0 0.0
    %2756 = vmatpush1.msra.mxu0 %v79
    %2757 = vmatprep.subr.mxu0 0.0
    %2758 = vmatpush1.msra.mxu0 %v80
    %2759 = vmatprep.subr.mxu0 0.0
    %2760 = vmatpush1.msra.mxu0 %v81
    %2761 = vmatprep.subr.mxu0 0.0
    %2762 = vmatpush1.msra.mxu0 %v82
    %2763 = vmatprep.subr.mxu0 0.0
    %2764 = vmatpush1.msra.mxu0 %v83
    %2765 = vmatprep.subr.mxu0 0.0
    %2766 = vmatpush1.msra.mxu0 %v84
    %2767 = vmatprep.subr.mxu0 0.0
    %2768 = vmatpush1.msra.mxu0 %v85
    %2769 = vmatprep.subr.mxu0 0.0
    %2770 = vmatpush1.msra.mxu0 %v86
    %2771 = vmatprep.subr.mxu0 0.0
    %2772 = vmatpush1.msra.mxu0 %v87
    %2773 = vmatprep.subr.mxu0 0.0
    %2774 = vmatpush1.msra.mxu0 %v88
    %2775 = vmatprep.subr.mxu0 0.0
    %2776 = vmatpush1.msra.mxu0 %v89
    %2777 = vmatprep.subr.mxu0 0.0
    %2778 = vmatpush1.msra.mxu0 %v90
    %2779 = vmatprep.subr.mxu0 0.0
    %2780 = vmatpush1.msra.mxu0 0.0
    %2781 = vmatprep.subr.mxu0 0.0
    %2782 = vmatpush1.msra.mxu0 0.0
    %2783 = vmatprep.subr.mxu0 0.0
    %2784 = vmatpush1.msra.mxu0 0.0
    %2785 = vmatprep.subr.mxu0 0.0
    %2786 = vmatpush1.msra.mxu0 0.0
    %2787 = vmatprep.subr.mxu0 0.0
    %2788 = vmatpush1.msra.mxu0 0.0
    %2789 = vmatprep.subr.mxu0 0.0
    %2790 = vmatpush1.msra.mxu0 0.0
    %2791 = vmatprep.subr.mxu0 0.0
    %2792 = vmatpush1.msra.mxu0 0.0
    %2793 = vmatprep.subr.mxu0 0.0
    %2794 = vmatpush1.msra.mxu0 0.0
    %2795 = vmatprep.subr.mxu0 0.0
    %2796 = vmatpush1.msra.mxu0 0.0
    %2797 = vmatprep.subr.mxu0 0.0
    %2798 = vmatpush1.msra.mxu0 0.0
    %2799 = vmatprep.subr.mxu0 0.0
    %2800 = vmatpush1.msra.mxu0 0.0
    %2801 = vmatprep.subr.mxu0 0.0
    %2802 = vmatpush1.msra.mxu0 0.0
    %2803 = vmatprep.subr.mxu0 0.0
    %2804 = vmatpush1.msra.mxu0 0.0
    %2805 = vmatprep.subr.mxu0 0.0
    %2806 = vmatpush1.msra.mxu0 0.0
    %2807 = vmatprep.subr.mxu0 0.0
    %2808 = vmatpush1.msra.mxu0 0.0
    %2809 = vmatprep.subr.mxu0 0.0
    %2810 = vmatpush1.msra.mxu0 0.0
    %2811 = vmatprep.mubr.f32.mxu0 0.0
    %2812 = vmatmul.mubr.f32.gmra.mrb[0].mxu0 %v2741
    %v2813 = vpop.f32.mrb[0].mxu0
    %v2814 = vadd.f32 %v2746, %v2813
    %v2815 = vpop.f32.mrb[0].mxu0
    %2816 = vmatprep.mubr.f32.mxu0 0.0
    %2817 = vmatmul.mubr.f32.gmra.mrb[0].mxu0 %v2742
    %v2818 = vpop.f32.mrb[0].mxu0
    %v2819 = vadd.f32 %v2746, %v2818
    %v2820 = vpop.f32.mrb[0].mxu0
    %2821 = vdwg.mxu0
    %v2822 = vadd.f32 %v2638, %v2814
    %v2823 = vadd.f32 %v2639, %v2819
    %v2824 = vsel %vm108, %v2822, 0.0
    %2825 = vadd.xlane.f32.xlu0 %v2824
    %v2826 = vpop.xlane.xlu0 %2825
    %v2827 = vsel %vm108, %v2823, 0.0
    %2828 = vadd.xlane.f32.xlu0 %v2827
    %v2829 = vpop.xlane.xlu0 %2828
    %v2830 = vmul.f32 %v2826, %v2607
    %v2831 = vmul.f32 %v2829, %v2607
    %v2832 = vsub.f32 %v2822, %v2830
    %v2833 = vsub.f32 %v2823, %v2831
    %v2834 = vmul.f32 %v2832, %v2832
    %v2835 = vmul.f32 %v2833, %v2833
    %v2836 = vsel %vm108, %v2834, 0.0
    %2837 = vadd.xlane.f32.xlu0 %v2836
    %v2838 = vpop.xlane.xlu0 %2837
    %v2839 = vsel %vm108, %v2835, 0.0
    %2840 = vadd.xlane.f32.xlu0 %v2839
    %v2841 = vpop.xlane.xlu0 %2840
    %v2842 = vmul.f32 %v2838, %v2607
    %v2843 = vmul.f32 %v2841, %v2607
    %v2844 = vadd.f32 %v2842, 1e-05
    %v2845 = vadd.f32 %v2843, 1e-05
    %v2846 = vrsqrt.pop %v2844
    %v2847 = vrsqrt.pop %v2845
    %v2848 = vmul.f32 %v2832, %v2846
    %v2849 = vmul.f32 %v2833, %v2847
    %v2850 = vlaneseq
    %v2851 = vshrl.u32 %v2850, 7
    %v2852 = vsub.s32 0, %v2851
    %v2853 = vrot.slane %v101, %v2852
    %v2854 = vmul.f32 %v2848, %v2853
    %v2855 = vmul.f32 %v2849, %v2853
    %v2856 = vlaneseq
    %v2857 = vshrl.u32 %v2856, 7
    %v2858 = vsub.s32 0, %v2857
    %v2859 = vrot.slane %v102, %v2858
    %v2860 = vadd.f32 %v2854, %v2859
    %v2861 = vadd.f32 %v2855, %v2859
    %v2863 = vrot.slane %v2861, 7
    %vm2865 = vcmask 1040384
    %v2866 = vsel %vm2865, %v2860, %v2863
    %v2867 = vlaneseq
    %v2868 = vshrl.u32 %v2867, 7
    %v2869 = vsub.s32 0, %v2868
    %v2870 = vrot.slane %v103, %v2869
    %v2872 = vsel %vm108, %v2866, 0
    %2874 = vmatprep.subr.mxu0 0.0
    %2875 = vmatpush1.msra.mxu0 %v91
    %2876 = vmatprep.subr.mxu0 0.0
    %2877 = vmatpush1.msra.mxu0 %v92
    %2878 = vmatprep.subr.mxu0 0.0
    %2879 = vmatpush1.msra.mxu0 %v93
    %2880 = vmatprep.subr.mxu0 0.0
    %2881 = vmatpush1.msra.mxu0 %v94
    %2882 = vmatprep.subr.mxu0 0.0
    %2883 = vmatpush1.msra.mxu0 0.0
    %2884 = vmatprep.subr.mxu0 0.0
    %2885 = vmatpush1.msra.mxu0 0.0
    %2886 = vmatprep.subr.mxu0 0.0
    %2887 = vmatpush1.msra.mxu0 0.0
    %2888 = vmatprep.subr.mxu0 0.0
    %2889 = vmatpush1.msra.mxu0 0.0
    %2890 = vmatprep.subr.mxu0 0.0
    %2891 = vmatpush1.msra.mxu0 0.0
    %2892 = vmatprep.subr.mxu0 0.0
    %2893 = vmatpush1.msra.mxu0 0.0
    %2894 = vmatprep.subr.mxu0 0.0
    %2895 = vmatpush1.msra.mxu0 0.0
    %2896 = vmatprep.subr.mxu0 0.0
    %2897 = vmatpush1.msra.mxu0 0.0
    %2898 = vmatprep.subr.mxu0 0.0
    %2899 = vmatpush1.msra.mxu0 0.0
    %2900 = vmatprep.subr.mxu0 0.0
    %2901 = vmatpush1.msra.mxu0 0.0
    %2902 = vmatprep.subr.mxu0 0.0
    %2903 = vmatpush1.msra.mxu0 0.0
    %2904 = vmatprep.subr.mxu0 0.0
    %2905 = vmatpush1.msra.mxu0 0.0
    %2906 = vmatprep.subr.mxu0 0.0
    %2907 = vmatpush1.msra.mxu0 0.0
    %2908 = vmatprep.subr.mxu0 0.0
    %2909 = vmatpush1.msra.mxu0 0.0
    %2910 = vmatprep.subr.mxu0 0.0
    %2911 = vmatpush1.msra.mxu0 0.0
    %2912 = vmatprep.subr.mxu0 0.0
    %2913 = vmatpush1.msra.mxu0 0.0
    %2914 = vmatprep.subr.mxu0 0.0
    %2915 = vmatpush1.msra.mxu0 0.0
    %2916 = vmatprep.subr.mxu0 0.0
    %2917 = vmatpush1.msra.mxu0 0.0
    %2918 = vmatprep.subr.mxu0 0.0
    %2919 = vmatpush1.msra.mxu0 0.0
    %2920 = vmatprep.subr.mxu0 0.0
    %2921 = vmatpush1.msra.mxu0 0.0
    %2922 = vmatprep.subr.mxu0 0.0
    %2923 = vmatpush1.msra.mxu0 0.0
    %2924 = vmatprep.subr.mxu0 0.0
    %2925 = vmatpush1.msra.mxu0 0.0
    %2926 = vmatprep.subr.mxu0 0.0
    %2927 = vmatpush1.msra.mxu0 0.0
    %2928 = vmatprep.subr.mxu0 0.0
    %2929 = vmatpush1.msra.mxu0 0.0
    %2930 = vmatprep.subr.mxu0 0.0
    %2931 = vmatpush1.msra.mxu0 0.0
    %2932 = vmatprep.subr.mxu0 0.0
    %2933 = vmatpush1.msra.mxu0 0.0
    %2934 = vmatprep.subr.mxu0 0.0
    %2935 = vmatpush1.msra.mxu0 0.0
    %2936 = vmatprep.subr.mxu0 0.0
    %2937 = vmatpush1.msra.mxu0 0.0
    %2938 = vmatprep.mubr.f32.mxu0 0.0
    %2939 = vmatmul.mubr.f32.gmra.mrb[0].mxu0 %v2872
    %v2940 = vpop.f32.mrb[0].mxu0
    %v2941 = vadd.f32 %v2870, %v2940
    %v2942 = vpop.f32.mrb[0].mxu0
    %2943 = vdwg.mxu0
    %vm2944 = vcmask 25600
    %v2945 = vsel %vm2944, %v2941, -inf
    %2946 = vmax.xlane.f32.xlu0 %v2945
    %v2947 = vpop.xlane.xlu0 %2946
    %v2948 = vsub.f32 %v2941, %v2947
    %v2949 = vmul.f32 %v2948, 1.442695
    %v2950 = vpow.pop %v2949
    %v2951 = vsel %vm2944, %v2950, 0.0
    %2952 = vadd.xlane.f32.xlu0 %v2951
    %v2953 = vpop.xlane.xlu0 %2952
    %v2954 = vlog2.pop %v2953
    %v2955 = vmul.f32 %v2954, 0.6931472
    %v2956 = vadd.f32 %v2955, %v2947
    %v2957 = vlaneseq
    %v2958 = vand.u32 %v2957, 127
    %v2959 = vlaneseq
    %v2960 = vshrl.u32 %v2959, 7
    %vm2961 = vcmp.eq.s32.totalorder %v2960, 0
    %s2962 = sld [smem:[#allocation3]]
    %v2963 = vstv %s2962
    %vm2964 = vcmp.eq.s32.totalorder %v2958, %v2963
    %vm2965 = vmand %vm2961, %vm2964
    %v2966 = vsel %vm2965, 1.0, 0.0
    %v2967 = vadd.f32 %v2966, 0.0
    %vm2968 = vcmp.eq.s32.totalorder %v2960, 1
    %s2969 = sld [smem:[#allocation3 + $0x1]]
    %v2970 = vstv %s2969
    %vm2971 = vcmp.eq.s32.totalorder %v2958, %v2970
    %vm2972 = vmand %vm2968, %vm2971
    %v2973 = vsel %vm2972, 1.0, 0.0
    %v2974 = vadd.f32 %v2967, %v2973
    %v2975 = vmul.f32 %v2974, %v2941
    %v2976 = vsel %vm2944, %v2975, 0.0
    %2977 = vadd.xlane.f32.xlu0 %v2976
    %v2978 = vpop.xlane.xlu0 %2977
    %v2979 = vsub.f32 %v2956, %v2978
    %vm2980 = vcmask 1041408
    %v2981 = vsel %vm2980, %v2979, 0.0
    %v2982 = vrot.slane %v2981, 4
    %v2983 = vadd.f32 %v2981, %v2982
    %v2984 = vrot.slane %v2983, 2
    %v2985 = vadd.f32 %v2983, %v2984
    %v2986 = vrot.slane %v2985, 1
    %v2987 = vadd.f32 %v2985, %v2986
    %v2988 = vmul.f32 %v2987, 0.5
    %2989 = vst [vmem:[#allocation10] sm:$0xff] 0.0
    %2990 = vst [vmem:[#allocation10 + $0x8] sm:$0xff] 0.0
    %2991 = vst [vmem:[#allocation10 + $0x10] sm:$0xff] 0.0
    %2992 = vst.msk [vmem:[#allocation10] sm:$0xff] %vm108, %v2860
    %2993 = vst.msk [vmem:[#allocation10 + $0x8] sm:$0xff] %vm108, %v2861
    %2994 = vst.msk [vmem:[#allocation10 + $0x10] sm:$0x3] %vm2944, %v2941
    %vm2995 = vcmask 0
    %2996 = vst.msk [vmem:[#allocation10 + $0x12] sm:$0x1] %vm2995, %v2988
    // Predicated region
    $region26: #{tpu_custom_call.1} parent=1 // pred_check
      _
    $region27: #{tpu_custom_call.1} parent=1 // pred_check_branch
      %2998 = sbr.rel (0) target = $region29
    $region28: #{tpu_custom_call.1} parent=1 // pred_region
      %s3000 = ssub.s32 384, 384
      %3001 = vsyncadd [#allocation6], %s3000
      %s3002 = sshll.u32 [#allocation10], 4
      %s3003 = int_to_ptr.vmem [resolvable:$true] %s3002
      %3008 = dma.vmem_to_hbm [thread:$0]  %s3003, 384, %s4, [#allocation6], 128, 128, 8
    $region29: #{tpu_custom_call.1} parent=1 // pred_fallthru
      _
    // Predicated region
    $region30: #{tpu_custom_call.1} parent=1 // pred_check
      _
    $region31: #{tpu_custom_call.1} parent=1 // pred_check_branch
      %3010 = sbr.rel (0) target = $region33
    $region32: #{tpu_custom_call.1} parent=1 // pred_region
      %3011 = dma.done [#allocation6], 384
    $region33: #{tpu_custom_call.1} parent=1 // pred_fallthru
      _
    %3012 = vsyncpa [#allocation5], 1
    %3013 = vsyncpa [#allocation8], 1
    %3014 = vsyncpa [#allocation6], 1

</llo_original>
